<compile_context>
chip_gen: v7x
topology: tpu7x:2x2x1
jax: 0.10.0
libtpu: 0.0.40
codegen_flags: <defaults>
</compile_context>

<pallas_src>
import functools

import jax
import jax.numpy as jnp
from jax import lax
from jax.experimental import pallas as pl
from jax.experimental.pallas import tpu as pltpu

_EPS = 1e-5                    # nn.BatchNorm2d default
_LANE = 128                    # TPU lane width: channels padded to a multiple of this
_VMEM_LIMIT = 32 * 1024 * 1024


def _round_up(x, m):
    return (x + m - 1) // m * m


# ------------------------------- Pallas kernels -------------------------------

def _conv3x3_stats_kernel(xph_ref, w_ref, y_ref, stat_ref, *, stride, ho, wo):
    """One image: 3x3 conv (pad=1, given stride) as 9 accumulating MXU matmuls over the
    phase-decomposed padded input, with fused BatchNorm sum / sum-of-squares epilogue."""
    cin = w_ref.shape[1]
    cout = w_ref.shape[2]
    acc = jnp.zeros((ho * wo, cout), jnp.float32)
    for i in range(3):
        for j in range(3):
            # phase holding rows (i + s*ho), cols (j + s*wo) of the padded image
            p = (i % stride) * stride + (j % stride)
            di, dj = i // stride, j // stride
            xs = xph_ref[p, di:di + ho, dj:dj + wo, :].reshape(ho * wo, cin)
            acc += jnp.dot(xs, w_ref[3 * i + j], preferred_element_type=jnp.float32)
    y_ref[...] = acc.reshape(1, ho, wo, cout).astype(y_ref.dtype)
    ssum = jnp.sum(acc, axis=0, keepdims=True)
    ssq = jnp.sum(acc * acc, axis=0, keepdims=True)
    stat_ref[...] = jnp.concatenate([ssum, ssq], axis=0).reshape(1, 2, cout)


def _bnrelu_conv3x3_stats_kernel(y1_ref, w_ref, scale_ref, bias_ref,
                                 y2_ref, stat_ref, pad_ref, *, ho, wo):
    """One image, fused: BN1 affine + ReLU -> zero-pad in VMEM -> 3x3 stride-1 conv
    (9 accumulating matmuls) -> fused BN2 sum / sum-of-squares epilogue."""
    cout = w_ref.shape[2]
    x1 = jnp.maximum(
        y1_ref[...].astype(jnp.float32) * scale_ref[...] + bias_ref[...], 0.0)
    # Zero the halo every step (cheap, and safe under megacore grid sharding).
    pad_ref[...] = jnp.zeros_like(pad_ref)
    pad_ref[0:1, 1:ho + 1, 1:wo + 1, :] = x1.astype(pad_ref.dtype)
    acc = jnp.zeros((ho * wo, cout), jnp.float32)
    for i in range(3):
        for j in range(3):
            xs = pad_ref[0, i:i + ho, j:j + wo, :].reshape(ho * wo, cout)
            acc += jnp.dot(xs, w_ref[3 * i + j], preferred_element_type=jnp.float32)
    y2_ref[...] = acc.reshape(1, ho, wo, cout).astype(y2_ref.dtype)
    ssum = jnp.sum(acc, axis=0, keepdims=True)
    ssq = jnp.sum(acc * acc, axis=0, keepdims=True)
    stat_ref[...] = jnp.concatenate([ssum, ssq], axis=0).reshape(1, 2, cout)


def _bn_add_relu_proj_kernel(y2_ref, xs_ref, w3_ref, scale_ref, bias_ref, o_ref):
    """One image, fused: BN2 affine + 1x1-conv projection shortcut + add + ReLU."""
    _, ho, wo, cout = y2_ref.shape
    cin = xs_ref.shape[3]
    short = jnp.dot(xs_ref[...].reshape(ho * wo, cin), w3_ref[...],
                    preferred_element_type=jnp.float32)
    y2n = y2_ref[...].astype(jnp.float32) * scale_ref[...] + bias_ref[...]
    o_ref[...] = jnp.maximum(short.reshape(1, ho, wo, cout) + y2n,
                             0.0).astype(o_ref.dtype)


def _bn_add_relu_id_kernel(y2_ref, x_ref, scale_ref, bias_ref, o_ref):
    """One image, fused: BN2 affine + identity shortcut add + ReLU."""
    y2n = y2_ref[...].astype(jnp.float32) * scale_ref[...] + bias_ref[...]
    o_ref[...] = jnp.maximum(x_ref[...].astype(jnp.float32) + y2n,
                             0.0).astype(o_ref.dtype)


# ------------------------------ pallas_call wrappers ------------------------------

def _compiler_params():
    return pltpu.CompilerParams(
        dimension_semantics=("parallel",),   # image axis: pipelined + v7x megacore
        vmem_limit_bytes=_VMEM_LIMIT,
    )


def _conv1_call(xph, w, n, ho, wo, stride, out_dtype):
    _, hs, ws, cin = xph.shape               # xph: (N * stride^2, Hs, Ws, Cin_p)
    cout = w.shape[2]
    kern = functools.partial(_conv3x3_stats_kernel, stride=stride, ho=ho, wo=wo)
    osize = jnp.dtype(out_dtype).itemsize
    cost = pl.CostEstimate(
        flops=2 * n * 9 * ho * wo * cin * cout,
        transcendentals=0,
        bytes_accessed=(xph.size * xph.dtype.itemsize + w.size * w.dtype.itemsize
                        + n * ho * wo * cout * osize + n * 2 * cout * 4),
    )
    return pl.pallas_call(
        kern,
        grid=(n,),
        in_specs=[
            pl.BlockSpec((stride * stride, hs, ws, cin), lambda i: (i, 0, 0, 0)),
            pl.BlockSpec((9, cin, cout), lambda i: (0, 0, 0)),
        ],
        out_specs=[
            pl.BlockSpec((1, ho, wo, cout), lambda i: (i, 0, 0, 0)),
            pl.BlockSpec((1, 2, cout), lambda i: (i, 0, 0)),
        ],
        out_shape=[
            jax.ShapeDtypeStruct((n, ho, wo, cout), out_dtype),
            jax.ShapeDtypeStruct((n, 2, cout), jnp.float32),
        ],
        compiler_params=_compiler_params(),
        cost_estimate=cost,
    )(xph, w)


def _conv2_call(y1, w, scale1, bias1, out_dtype, compute_dtype):
    n, ho, wo, cout = y1.shape
    kern = functools.partial(_bnrelu_conv3x3_stats_kernel, ho=ho, wo=wo)
    cost = pl.CostEstimate(
        flops=2 * n * 9 * ho * wo * cout * cout,
        transcendentals=0,
        bytes_accessed=2 * y1.size * y1.dtype.itemsize + w.size * w.dtype.itemsize,
    )
    return pl.pallas_call(
        kern,
        grid=(n,),
        in_specs=[
            pl.BlockSpec((1, ho, wo, cout), lambda i: (i, 0, 0, 0)),
            pl.BlockSpec((9, cout, cout), lambda i: (0, 0, 0)),
            pl.BlockSpec((1, cout), lambda i: (0, 0)),
            pl.BlockSpec((1, cout), lambda i: (0, 0)),
        ],
        out_specs=[
            pl.BlockSpec((1, ho, wo, cout), lambda i: (i, 0, 0, 0)),
            pl.BlockSpec((1, 2, cout), lambda i: (i, 0, 0)),
        ],
        out_shape=[
            jax.ShapeDtypeStruct((n, ho, wo, cout), out_dtype),
            jax.ShapeDtypeStruct((n, 2, cout), jnp.float32),
        ],
        scratch_shapes=[pltpu.VMEM((1, ho + 2, wo + 2, cout), compute_dtype)],
        compiler_params=_compiler_params(),
        cost_estimate=cost,
    )(y1, w, scale1, bias1)


def _shortcut_proj_call(y2, xs, w3, scale2, bias2):
    n, ho, wo, cout = y2.shape
    cin = xs.shape[3]
    cost = pl.CostEstimate(
        flops=2 * n * ho * wo * cin * cout,
        transcendentals=0,
        bytes_accessed=(y2.size * y2.dtype.itemsize + xs.size * xs.dtype.itemsize
                        + w3.size * w3.dtype.itemsize + n * ho * wo * cout * 4),
    )
    return pl.pallas_call(
        _bn_add_relu_proj_kernel,
        grid=(n,),
        in_specs=[
            pl.BlockSpec((1, ho, wo, cout), lambda i: (i, 0, 0, 0)),
            pl.BlockSpec((1, ho, wo, cin), lambda i: (i, 0, 0, 0)),
            pl.BlockSpec((cin, cout), lambda i: (0, 0)),
            pl.BlockSpec((1, cout), lambda i: (0, 0)),
            pl.BlockSpec((1, cout), lambda i: (0, 0)),
        ],
        out_specs=pl.BlockSpec((1, ho, wo, cout), lambda i: (i, 0, 0, 0)),
        out_shape=jax.ShapeDtypeStruct((n, ho, wo, cout), jnp.float32),
        compiler_params=_compiler_params(),
        cost_estimate=cost,
    )(y2, xs, w3, scale2, bias2)


def _shortcut_id_call(y2, x_id, scale2, bias2):
    n, ho, wo, cout = y2.shape
    return pl.pallas_call(
        _bn_add_relu_id_kernel,
        grid=(n,),
        in_specs=[
            pl.BlockSpec((1, ho, wo, cout), lambda i: (i, 0, 0, 0)),
            pl.BlockSpec((1, ho, wo, cout), lambda i: (i, 0, 0, 0)),
            pl.BlockSpec((1, cout), lambda i: (0, 0)),
            pl.BlockSpec((1, cout), lambda i: (0, 0)),
        ],
        out_specs=pl.BlockSpec((1, ho, wo, cout), lambda i: (i, 0, 0, 0)),
        out_shape=jax.ShapeDtypeStruct((n, ho, wo, cout), jnp.float32),
        compiler_params=_compiler_params(),
    )(y2, x_id, scale2, bias2)


# ------------------------------ wrapper-side glue ------------------------------

def prepare_params(params, compute_dtype=jnp.float32):
    """One-time per-parameter layout prep: OIHW -> (tap, Cin_pad, Cout_pad), channel
    zero-padding to the 128-lane width, optional low-precision cast for the MXU."""
    cout, cin = params["w1"].shape[0], params["w1"].shape[1]
    cin_p, cout_p = _round_up(cin, _LANE), _round_up(cout, _LANE)

    def prep3x3(w):
        co, ci, kh, kw = w.shape
        w2 = jnp.transpose(w, (2, 3, 1, 0)).reshape(kh * kw, ci, co)
        return jnp.pad(w2, ((0, 0),
                            (0, _round_up(ci, _LANE) - ci),
                            (0, _round_up(co, _LANE) - co))).astype(compute_dtype)

    def pad_vec(v):
        return jnp.pad(v.astype(jnp.float32), (0, cout_p - v.shape[0]))

    prepped = {
        "w1": prep3x3(params["w1"]),
        "w2": prep3x3(params["w2"]),
        "g1": pad_vec(params["g1"]), "b1": pad_vec(params["b1"]),
        "g2": pad_vec(params["g2"]), "b2": pad_vec(params["b2"]),
    }
    if "w3" in params:
        w3 = jnp.transpose(params["w3"], (2, 3, 1, 0)).reshape(cin, cout)
        prepped["w3"] = jnp.pad(
            w3, ((0, cin_p - cin), (0, cout_p - cout))).astype(compute_dtype)
    return prepped


def _bn_scale_bias(stats, gamma, beta, count):
    """Combine per-image partial sums into BatchNorm scale/bias (tiny (C,) math in XLA)."""
    s = jnp.sum(stats, axis=0)                       # (2, C): [sum, sum of squares]
    mean = s[0] / count
    var = jnp.maximum(s[1] / count - mean * mean, 0.0)
    scale = gamma * lax.rsqrt(var + _EPS)
    bias = beta - mean * scale
    return scale.reshape(1, -1), bias.reshape(1, -1)


def _pad_and_phase_split(x, stride):
    """Zero-pad spatially by 1; for stride 2 split into the 2x2 phases so the conv kernel
    only needs contiguous window reads. Returns (N * stride^2, Hs, Ws, C)."""
    n, h, w, c = x.shape
    xp = jnp.pad(x, ((0, 0), (1, 1), (1, 1), (0, 0)))
    if stride == 1:
        return xp
    assert stride == 2, "only stride 1 or 2 (as used by the module) is supported"
    assert h % 2 == 0 and w % 2 == 0, "stride-2 path assumes even spatial dims"
    phases = [xp[:, pi::2, pj::2, :] for pi in range(2) for pj in range(2)]
    return jnp.stack(phases, axis=1).reshape(n * 4, h // 2 + 1, w // 2 + 1, c)


def basic_block_forward(x_nchw, prepped, *, stride, out_channels,
                        compute_dtype=jnp.float32):
    # TODO(synk): when embedded in a full NHWC network, drop the two boundary transposes
    # below (they exist only for parity with the PyTorch NCHW interface).
    x = jnp.transpose(x_nchw, (0, 2, 3, 1)).astype(jnp.float32)      # NCHW -> NHWC
    n, h, w, cin = x.shape
    cin_p = _round_up(cin, _LANE)
    ho = (h - 1) // stride + 1
    wo = (w - 1) // stride + 1

    xch = jnp.pad(x, ((0, 0), (0, 0), (0, 0), (0, cin_p - cin)))     # lane-dense channels
    xph = _pad_and_phase_split(xch, stride).astype(compute_dtype)

    # conv1 (+ fused BN1 statistics)
    y1, st1 = _conv1_call(xph, prepped["w1"], n, ho, wo, stride, compute_dtype)
    scale1, bias1 = _bn_scale_bias(st1, prepped["g1"], prepped["b1"], n * ho * wo)

    # BN1 affine + ReLU + conv2 (+ fused BN2 statistics)
    y2, st2 = _conv2_call(y1, prepped["w2"], scale1, bias1, compute_dtype, compute_dtype)
    scale2, bias2 = _bn_scale_bias(st2, prepped["g2"], prepped["b2"], n * ho * wo)

    # BN2 affine + shortcut + residual add + ReLU
    if ho != h:
        # spatial size changed -> conv3: 1x1, stride 2 (hard-coded in the module), no pad
        xs = xch[:, ::2, ::2, :].astype(compute_dtype)
        out = _shortcut_proj_call(y2, xs, prepped["w3"], scale2, bias2)
    else:
        assert cin == out_channels, "identity shortcut needs in_channels == out_channels"
        out = _shortcut_id_call(y2, xch, scale2, bias2)

    out = out[..., :out_channels]                                    # drop channel padding
    return jnp.transpose(out, (0, 3, 1, 2))                          # NHWC -> NCHW


# ------------------------------ pure-JAX reference ------------------------------

def reference_forward(x_nchw, params, stride):
    dn = ("NCHW", "OIHW", "NCHW")

    def conv(x, w, s, p):
        return lax.conv_general_dilated(x, w, (s, s), [(p, p), (p, p)],
                                        dimension_numbers=dn)

    def bn(x, g, b):
        mean = jnp.mean(x, axis=(0, 2, 3), keepdims=True)
        var = jnp.mean((x - mean) ** 2, axis=(0, 2, 3), keepdims=True)
        return ((x - mean) * lax.rsqrt(var + _EPS) * g.reshape(1, -1, 1, 1)
                + b.reshape(1, -1, 1, 1))

    x1 = conv(x_nchw, params["w1"], stride, 1)
    x1 = jnp.maximum(bn(x1, params["g1"], params["b1"]), 0.0)
    x1 = conv(x1, params["w2"], 1, 1)
    x1 = bn(x1, params["g2"], params["b2"])
    x = x_nchw
    if x1.shape[2] != x.shape[2]:
        x = conv(x, params["w3"], 2, 0)
    return jnp.maximum(x + x1, 0.0)


# ----------------------------------- main -----------------------------------

if __name__ == "__main__":
    # Small shapes consistent with the module: batch=2, in_ch=4, out_ch=8, 16x16, stride=2
    N, Cin, Cout, H, W, stride = 2, 4, 8, 16, 16, 2

    key = jax.random.PRNGKey(0)
    kx, k1, k2, k3 = jax.random.split(key, 4)

    x = jax.random.normal(kx, (N, Cin, H, W), dtype=jnp.float32)
    params = {
        "w1": 0.1 * jax.random.normal(k1, (Cout, Cin, 3, 3), dtype=jnp.float32),
        "g1": jnp.ones((Cout,), jnp.float32),     # BatchNorm2d default init
        "b1": jnp.zeros((Cout,), jnp.float32),
        "w2": 0.1 * jax.random.normal(k2, (Cout, Cout, 3, 3), dtype=jnp.float32),
        "g2": jnp.ones((Cout,), jnp.float32),
        "b2": jnp.zeros((Cout,), jnp.float32),
        "w3": 0.1 * jax.random.normal(k3, (Cout, Cin, 1, 1), dtype=jnp.float32),
    }

    # One-time parameter layout prep (hoisted out of the per-forward path).
    # Use compute_dtype=jnp.bfloat16 on v6e/v7x for 2x MXU throughput and half the DMA
    # bytes (relax the tolerance accordingly); f32 here to match the f32 reference.
    prepped = prepare_params(params, compute_dtype=jnp.float32)

    fwd = jax.jit(functools.partial(basic_block_forward,
                                    stride=stride, out_channels=Cout))
    out = jax.block_until_ready(fwd(x, prepped))
    ref = jax.block_until_ready(reference_forward(x, params, stride))

    assert out.shape == (N, Cout, H // 2, W // 2), out.shape
    assert jnp.allclose(out, ref, atol=1e-4, rtol=1e-4), float(jnp.max(jnp.abs(out - ref)))

    print("KERNEL_OK")
</pallas_src>

<mosaic_0001>
module attributes {stable_mosaic.version = 11 : i64} {
  func.func @_conv3x3_stats_kernel(%arg0: i32, %arg1: memref<4x9x9x128xf32, #tpu.memory_space<vmem>>, %arg2: memref<9x128x128xf32, #tpu.memory_space<vmem>>, %arg3: memref<1x8x8x128xf32, #tpu.memory_space<vmem>>, %arg4: memref<1x2x128xf32, #tpu.memory_space<vmem>>) attributes {dimension_semantics = [#tpu.dimension_semantics<parallel>], iteration_bounds = array<i64: 2>, scalar_prefetch = 0 : i64, scratch_operands = 0 : i64, tpu.core_type = #tpu.core_type<tc>, window_params = [{transform_indices = @transform_0, window_bounds = array<i64: 4, 9, 9, 128>}, {pipeline_mode = #tpu.pipeline_mode<synchronous>, transform_indices = @transform_1, window_bounds = array<i64: 9, 128, 128>}, {transform_indices = @transform_2, window_bounds = array<i64: 1, 8, 8, 128>}, {transform_indices = @transform_3, window_bounds = array<i64: 1, 2, 128>}]} {
    %cst = arith.constant 0.000000e+00 : f32
    %0 = vector.broadcast %cst : f32 to vector<64x128xf32>
    %c0 = arith.constant 0 : index
    %c0_0 = arith.constant 0 : index
    %c0_1 = arith.constant 0 : index
    %c0_2 = arith.constant 0 : index
    %1 = vector.load %arg1[%c0, %c0_0, %c0_1, %c0_2] : memref<4x9x9x128xf32, #tpu.memory_space<vmem>>, vector<1x8x8x128xf32>
    %2 = vector.shape_cast %1 : vector<1x8x8x128xf32> to vector<8x8x128xf32>
    %3 = vector.shape_cast %2 : vector<8x8x128xf32> to vector<64x128xf32>
    %c0_3 = arith.constant 0 : index
    %c0_4 = arith.constant 0 : index
    %c0_5 = arith.constant 0 : index
    %4 = vector.load %arg2[%c0_3, %c0_4, %c0_5] : memref<9x128x128xf32, #tpu.memory_space<vmem>>, vector<1x128x128xf32>
    %5 = vector.shape_cast %4 : vector<1x128x128xf32> to vector<128x128xf32>
    %cst_6 = arith.constant dense<0.000000e+00> : vector<64x128xf32>
    %6 = tpu.matmul %3, %5, %cst_6 {dimension_numbers = #tpu.dot_dimension_numbers<[1], [0], [0], [1], [0, 0, 1, 1], [], []>} : vector<64x128xf32>, vector<128x128xf32>, vector<64x128xf32> -> vector<64x128xf32>
    %7 = arith.addf %0, %6 : vector<64x128xf32>
    %c1 = arith.constant 1 : index
    %c0_7 = arith.constant 0 : index
    %c0_8 = arith.constant 0 : index
    %c0_9 = arith.constant 0 : index
    %8 = vector.load %arg1[%c1, %c0_7, %c0_8, %c0_9] : memref<4x9x9x128xf32, #tpu.memory_space<vmem>>, vector<1x8x8x128xf32>
    %9 = vector.shape_cast %8 : vector<1x8x8x128xf32> to vector<8x8x128xf32>
    %10 = vector.shape_cast %9 : vector<8x8x128xf32> to vector<64x128xf32>
    %c1_10 = arith.constant 1 : index
    %c0_11 = arith.constant 0 : index
    %c0_12 = arith.constant 0 : index
    %11 = vector.load %arg2[%c1_10, %c0_11, %c0_12] : memref<9x128x128xf32, #tpu.memory_space<vmem>>, vector<1x128x128xf32>
    %12 = vector.shape_cast %11 : vector<1x128x128xf32> to vector<128x128xf32>
    %cst_13 = arith.constant dense<0.000000e+00> : vector<64x128xf32>
    %13 = tpu.matmul %10, %12, %cst_13 {dimension_numbers = #tpu.dot_dimension_numbers<[1], [0], [0], [1], [0, 0, 1, 1], [], []>} : vector<64x128xf32>, vector<128x128xf32>, vector<64x128xf32> -> vector<64x128xf32>
    %14 = arith.addf %7, %13 : vector<64x128xf32>
    %c0_14 = arith.constant 0 : index
    %c0_15 = arith.constant 0 : index
    %c1_16 = arith.constant 1 : index
    %c0_17 = arith.constant 0 : index
    %15 = vector.load %arg1[%c0_14, %c0_15, %c1_16, %c0_17] : memref<4x9x9x128xf32, #tpu.memory_space<vmem>>, vector<1x8x8x128xf32>
    %16 = vector.shape_cast %15 : vector<1x8x8x128xf32> to vector<8x8x128xf32>
    %17 = vector.shape_cast %16 : vector<8x8x128xf32> to vector<64x128xf32>
    %c2 = arith.constant 2 : index
    %c0_18 = arith.constant 0 : index
    %c0_19 = arith.constant 0 : index
    %18 = vector.load %arg2[%c2, %c0_18, %c0_19] : memref<9x128x128xf32, #tpu.memory_space<vmem>>, vector<1x128x128xf32>
    %19 = vector.shape_cast %18 : vector<1x128x128xf32> to vector<128x128xf32>
    %cst_20 = arith.constant dense<0.000000e+00> : vector<64x128xf32>
    %20 = tpu.matmul %17, %19, %cst_20 {dimension_numbers = #tpu.dot_dimension_numbers<[1], [0], [0], [1], [0, 0, 1, 1], [], []>} : vector<64x128xf32>, vector<128x128xf32>, vector<64x128xf32> -> vector<64x128xf32>
    %21 = arith.addf %14, %20 : vector<64x128xf32>
    %c2_21 = arith.constant 2 : index
    %c0_22 = arith.constant 0 : index
    %c0_23 = arith.constant 0 : index
    %c0_24 = arith.constant 0 : index
    %22 = vector.load %arg1[%c2_21, %c0_22, %c0_23, %c0_24] : memref<4x9x9x128xf32, #tpu.memory_space<vmem>>, vector<1x8x8x128xf32>
    %23 = vector.shape_cast %22 : vector<1x8x8x128xf32> to vector<8x8x128xf32>
    %24 = vector.shape_cast %23 : vector<8x8x128xf32> to vector<64x128xf32>
    %c3 = arith.constant 3 : index
    %c0_25 = arith.constant 0 : index
    %c0_26 = arith.constant 0 : index
    %25 = vector.load %arg2[%c3, %c0_25, %c0_26] : memref<9x128x128xf32, #tpu.memory_space<vmem>>, vector<1x128x128xf32>
    %26 = vector.shape_cast %25 : vector<1x128x128xf32> to vector<128x128xf32>
    %cst_27 = arith.constant dense<0.000000e+00> : vector<64x128xf32>
    %27 = tpu.matmul %24, %26, %cst_27 {dimension_numbers = #tpu.dot_dimension_numbers<[1], [0], [0], [1], [0, 0, 1, 1], [], []>} : vector<64x128xf32>, vector<128x128xf32>, vector<64x128xf32> -> vector<64x128xf32>
    %28 = arith.addf %21, %27 : vector<64x128xf32>
    %c3_28 = arith.constant 3 : index
    %c0_29 = arith.constant 0 : index
    %c0_30 = arith.constant 0 : index
    %c0_31 = arith.constant 0 : index
    %29 = vector.load %arg1[%c3_28, %c0_29, %c0_30, %c0_31] : memref<4x9x9x128xf32, #tpu.memory_space<vmem>>, vector<1x8x8x128xf32>
    %30 = vector.shape_cast %29 : vector<1x8x8x128xf32> to vector<8x8x128xf32>
    %31 = vector.shape_cast %30 : vector<8x8x128xf32> to vector<64x128xf32>
    %c4 = arith.constant 4 : index
    %c0_32 = arith.constant 0 : index
    %c0_33 = arith.constant 0 : index
    %32 = vector.load %arg2[%c4, %c0_32, %c0_33] : memref<9x128x128xf32, #tpu.memory_space<vmem>>, vector<1x128x128xf32>
    %33 = vector.shape_cast %32 : vector<1x128x128xf32> to vector<128x128xf32>
    %cst_34 = arith.constant dense<0.000000e+00> : vector<64x128xf32>
    %34 = tpu.matmul %31, %33, %cst_34 {dimension_numbers = #tpu.dot_dimension_numbers<[1], [0], [0], [1], [0, 0, 1, 1], [], []>} : vector<64x128xf32>, vector<128x128xf32>, vector<64x128xf32> -> vector<64x128xf32>
    %35 = arith.addf %28, %34 : vector<64x128xf32>
    %c2_35 = arith.constant 2 : index
    %c0_36 = arith.constant 0 : index
    %c1_37 = arith.constant 1 : index
    %c0_38 = arith.constant 0 : index
    %36 = vector.load %arg1[%c2_35, %c0_36, %c1_37, %c0_38] : memref<4x9x9x128xf32, #tpu.memory_space<vmem>>, vector<1x8x8x128xf32>
    %37 = vector.shape_cast %36 : vector<1x8x8x128xf32> to vector<8x8x128xf32>
    %38 = vector.shape_cast %37 : vector<8x8x128xf32> to vector<64x128xf32>
    %c5 = arith.constant 5 : index
    %c0_39 = arith.constant 0 : index
    %c0_40 = arith.constant 0 : index
    %39 = vector.load %arg2[%c5, %c0_39, %c0_40] : memref<9x128x128xf32, #tpu.memory_space<vmem>>, vector<1x128x128xf32>
    %40 = vector.shape_cast %39 : vector<1x128x128xf32> to vector<128x128xf32>
    %cst_41 = arith.constant dense<0.000000e+00> : vector<64x128xf32>
    %41 = tpu.matmul %38, %40, %cst_41 {dimension_numbers = #tpu.dot_dimension_numbers<[1], [0], [0], [1], [0, 0, 1, 1], [], []>} : vector<64x128xf32>, vector<128x128xf32>, vector<64x128xf32> -> vector<64x128xf32>
    %42 = arith.addf %35, %41 : vector<64x128xf32>
    %c0_42 = arith.constant 0 : index
    %c1_43 = arith.constant 1 : index
    %c0_44 = arith.constant 0 : index
    %c0_45 = arith.constant 0 : index
    %43 = vector.load %arg1[%c0_42, %c1_43, %c0_44, %c0_45] : memref<4x9x9x128xf32, #tpu.memory_space<vmem>>, vector<1x8x8x128xf32>
    %44 = vector.shape_cast %43 : vector<1x8x8x128xf32> to vector<8x8x128xf32>
    %45 = vector.shape_cast %44 : vector<8x8x128xf32> to vector<64x128xf32>
    %c6 = arith.constant 6 : index
    %c0_46 = arith.constant 0 : index
    %c0_47 = arith.constant 0 : index
    %46 = vector.load %arg2[%c6, %c0_46, %c0_47] : memref<9x128x128xf32, #tpu.memory_space<vmem>>, vector<1x128x128xf32>
    %47 = vector.shape_cast %46 : vector<1x128x128xf32> to vector<128x128xf32>
    %cst_48 = arith.constant dense<0.000000e+00> : vector<64x128xf32>
    %48 = tpu.matmul %45, %47, %cst_48 {dimension_numbers = #tpu.dot_dimension_numbers<[1], [0], [0], [1], [0, 0, 1, 1], [], []>} : vector<64x128xf32>, vector<128x128xf32>, vector<64x128xf32> -> vector<64x128xf32>
    %49 = arith.addf %42, %48 : vector<64x128xf32>
    %c1_49 = arith.constant 1 : index
    %c1_50 = arith.constant 1 : index
    %c0_51 = arith.constant 0 : index
    %c0_52 = arith.constant 0 : index
    %50 = vector.load %arg1[%c1_49, %c1_50, %c0_51, %c0_52] : memref<4x9x9x128xf32, #tpu.memory_space<vmem>>, vector<1x8x8x128xf32>
    %51 = vector.shape_cast %50 : vector<1x8x8x128xf32> to vector<8x8x128xf32>
    %52 = vector.shape_cast %51 : vector<8x8x128xf32> to vector<64x128xf32>
    %c7 = arith.constant 7 : index
    %c0_53 = arith.constant 0 : index
    %c0_54 = arith.constant 0 : index
    %53 = vector.load %arg2[%c7, %c0_53, %c0_54] : memref<9x128x128xf32, #tpu.memory_space<vmem>>, vector<1x128x128xf32>
    %54 = vector.shape_cast %53 : vector<1x128x128xf32> to vector<128x128xf32>
    %cst_55 = arith.constant dense<0.000000e+00> : vector<64x128xf32>
    %55 = tpu.matmul %52, %54, %cst_55 {dimension_numbers = #tpu.dot_dimension_numbers<[1], [0], [0], [1], [0, 0, 1, 1], [], []>} : vector<64x128xf32>, vector<128x128xf32>, vector<64x128xf32> -> vector<64x128xf32>
    %56 = arith.addf %49, %55 : vector<64x128xf32>
    %c0_56 = arith.constant 0 : index
    %c1_57 = arith.constant 1 : index
    %c1_58 = arith.constant 1 : index
    %c0_59 = arith.constant 0 : index
    %57 = vector.load %arg1[%c0_56, %c1_57, %c1_58, %c0_59] : memref<4x9x9x128xf32, #tpu.memory_space<vmem>>, vector<1x8x8x128xf32>
    %58 = vector.shape_cast %57 : vector<1x8x8x128xf32> to vector<8x8x128xf32>
    %59 = vector.shape_cast %58 : vector<8x8x128xf32> to vector<64x128xf32>
    %c8 = arith.constant 8 : index
    %c0_60 = arith.constant 0 : index
    %c0_61 = arith.constant 0 : index
    %60 = vector.load %arg2[%c8, %c0_60, %c0_61] : memref<9x128x128xf32, #tpu.memory_space<vmem>>, vector<1x128x128xf32>
    %61 = vector.shape_cast %60 : vector<1x128x128xf32> to vector<128x128xf32>
    %cst_62 = arith.constant dense<0.000000e+00> : vector<64x128xf32>
    %62 = tpu.matmul %59, %61, %cst_62 {dimension_numbers = #tpu.dot_dimension_numbers<[1], [0], [0], [1], [0, 0, 1, 1], [], []>} : vector<64x128xf32>, vector<128x128xf32>, vector<64x128xf32> -> vector<64x128xf32>
    %63 = arith.addf %56, %62 : vector<64x128xf32>
    %64 = vector.shape_cast %63 : vector<64x128xf32> to vector<1x8x8x128xf32>
    %c0_63 = arith.constant 0 : index
    %c0_64 = arith.constant 0 : index
    %c0_65 = arith.constant 0 : index
    %c0_66 = arith.constant 0 : index
    %65 = vector.load %arg3[%c0_63, %c0_64, %c0_65, %c0_66] : memref<1x8x8x128xf32, #tpu.memory_space<vmem>>, vector<1x8x8x128xf32>
    tpu.vector_store %arg3[%c0_63, %c0_64, %c0_65, %c0_66], %64 {strides = array<i32>} : memref<1x8x8x128xf32, #tpu.memory_space<vmem>>, vector<1x8x8x128xf32>,
    %cst_67 = arith.constant dense<0.000000e+00> : vector<128xf32>
    %66 = vector.multi_reduction <add>, %63, %cst_67 [0] : vector<64x128xf32> to vector<128xf32>
    %67 = vector.shape_cast %66 : vector<128xf32> to vector<1x128xf32>
    %68 = arith.mulf %63, %63 : vector<64x128xf32>
    %cst_68 = arith.constant dense<0.000000e+00> : vector<128xf32>
    %69 = vector.multi_reduction <add>, %68, %cst_68 [0] : vector<64x128xf32> to vector<128xf32>
    %70 = vector.shape_cast %69 : vector<128xf32> to vector<1x128xf32>
    %71 = tpu.concatenate %67, %70 in 0 : vector<1x128xf32>, vector<1x128xf32> -> vector<2x128xf32>
    %72 = vector.shape_cast %71 : vector<2x128xf32> to vector<1x2x128xf32>
    %c0_69 = arith.constant 0 : index
    %c0_70 = arith.constant 0 : index
    %c0_71 = arith.constant 0 : index
    %73 = vector.load %arg4[%c0_69, %c0_70, %c0_71] : memref<1x2x128xf32, #tpu.memory_space<vmem>>, vector<1x2x128xf32>
    tpu.vector_store %arg4[%c0_69, %c0_70, %c0_71], %72 {strides = array<i32>} : memref<1x2x128xf32, #tpu.memory_space<vmem>>, vector<1x2x128xf32>,
    return
  }
  func.func @transform_0(%arg0: i32) -> (i32, i32, i32, i32) {
    %c0_i32 = arith.constant 0 : i32
    %c0_i32_0 = arith.constant 0 : i32
    %c0_i32_1 = arith.constant 0 : i32
    %c0_i32_2 = arith.constant 0 : i32
    return %arg0, %c0_i32, %c0_i32_0, %c0_i32_1 : i32, i32, i32, i32
  }
  func.func @transform_1(%arg0: i32) -> (i32, i32, i32) {
    %c0_i32 = arith.constant 0 : i32
    %c0_i32_0 = arith.constant 0 : i32
    %c0_i32_1 = arith.constant 0 : i32
    %c0_i32_2 = arith.constant 0 : i32
    return %c0_i32, %c0_i32_0, %c0_i32_1 : i32, i32, i32
  }
  func.func @transform_2(%arg0: i32) -> (i32, i32, i32, i32) {
    %c0_i32 = arith.constant 0 : i32
    %c0_i32_0 = arith.constant 0 : i32
    %c0_i32_1 = arith.constant 0 : i32
    %c0_i32_2 = arith.constant 0 : i32
    return %arg0, %c0_i32, %c0_i32_0, %c0_i32_1 : i32, i32, i32, i32
  }
  func.func @transform_3(%arg0: i32) -> (i32, i32, i32) {
    %c0_i32 = arith.constant 0 : i32
    %c0_i32_0 = arith.constant 0 : i32
    %c0_i32_1 = arith.constant 0 : i32
    return %arg0, %c0_i32, %c0_i32_0 : i32, i32, i32
  }
}

module attributes {stable_mosaic.version = 11 : i64} {
  func.func @_bn_add_relu_proj_kernel(%arg0: i32, %arg1: memref<1x8x8x128xf32, #tpu.memory_space<vmem>>, %arg2: memref<1x8x8x128xf32, #tpu.memory_space<vmem>>, %arg3: memref<128x128xf32, #tpu.memory_space<vmem>>, %arg4: memref<1x128xf32, #tpu.memory_space<vmem>>, %arg5: memref<1x128xf32, #tpu.memory_space<vmem>>, %arg6: memref<1x8x8x128xf32, #tpu.memory_space<vmem>>) attributes {dimension_semantics = [#tpu.dimension_semantics<parallel>], iteration_bounds = array<i64: 2>, scalar_prefetch = 0 : i64, scratch_operands = 0 : i64, tpu.core_type = #tpu.core_type<tc>, window_params = [{transform_indices = @transform_0, window_bounds = array<i64: 1, 8, 8, 128>}, {transform_indices = @transform_1, window_bounds = array<i64: 1, 8, 8, 128>}, {pipeline_mode = #tpu.pipeline_mode<synchronous>, transform_indices = @transform_2, window_bounds = array<i64: 128, 128>}, {pipeline_mode = #tpu.pipeline_mode<synchronous>, transform_indices = @transform_3, window_bounds = array<i64: 1, 128>}, {pipeline_mode = #tpu.pipeline_mode<synchronous>, transform_indices = @transform_4, window_bounds = array<i64: 1, 128>}, {transform_indices = @transform_5, window_bounds = array<i64: 1, 8, 8, 128>}]} {
    %c0 = arith.constant 0 : index
    %c0_0 = arith.constant 0 : index
    %c0_1 = arith.constant 0 : index
    %c0_2 = arith.constant 0 : index
    %0 = vector.load %arg2[%c0, %c0_0, %c0_1, %c0_2] : memref<1x8x8x128xf32, #tpu.memory_space<vmem>>, vector<1x8x8x128xf32>
    %1 = vector.shape_cast %0 : vector<1x8x8x128xf32> to vector<64x128xf32>
    %c0_3 = arith.constant 0 : index
    %c0_4 = arith.constant 0 : index
    %2 = vector.load %arg3[%c0_3, %c0_4] : memref<128x128xf32, #tpu.memory_space<vmem>>, vector<128x128xf32>
    %cst = arith.constant dense<0.000000e+00> : vector<64x128xf32>
    %3 = tpu.matmul %1, %2, %cst {dimension_numbers = #tpu.dot_dimension_numbers<[1], [0], [0], [1], [0, 0, 1, 1], [], []>} : vector<64x128xf32>, vector<128x128xf32>, vector<64x128xf32> -> vector<64x128xf32>
    %c0_5 = arith.constant 0 : index
    %c0_6 = arith.constant 0 : index
    %c0_7 = arith.constant 0 : index
    %c0_8 = arith.constant 0 : index
    %4 = vector.load %arg1[%c0_5, %c0_6, %c0_7, %c0_8] : memref<1x8x8x128xf32, #tpu.memory_space<vmem>>, vector<1x8x8x128xf32>
    %c0_9 = arith.constant 0 : index
    %c0_10 = arith.constant 0 : index
    %5 = vector.load %arg4[%c0_9, %c0_10] : memref<1x128xf32, #tpu.memory_space<vmem>>, vector<1x128xf32>
    %6 = vector.shape_cast %5 : vector<1x128xf32> to vector<1x1x1x128xf32>
    %7 = vector.broadcast %6 : vector<1x1x1x128xf32> to vector<1x8x8x128xf32>
    %8 = arith.mulf %4, %7 : vector<1x8x8x128xf32>
    %c0_11 = arith.constant 0 : index
    %c0_12 = arith.constant 0 : index
    %9 = vector.load %arg5[%c0_11, %c0_12] : memref<1x128xf32, #tpu.memory_space<vmem>>, vector<1x128xf32>
    %10 = vector.shape_cast %9 : vector<1x128xf32> to vector<1x1x1x128xf32>
    %11 = vector.broadcast %10 : vector<1x1x1x128xf32> to vector<1x8x8x128xf32>
    %12 = arith.addf %8, %11 : vector<1x8x8x128xf32>
    %13 = vector.shape_cast %3 : vector<64x128xf32> to vector<1x8x8x128xf32>
    %14 = arith.addf %13, %12 : vector<1x8x8x128xf32>
    %cst_13 = arith.constant 0.000000e+00 : f32
    %15 = vector.broadcast %cst_13 : f32 to vector<1x8x8x128xf32>
    %16 = arith.maximumf %14, %15 : vector<1x8x8x128xf32>
    %c0_14 = arith.constant 0 : index
    %c0_15 = arith.constant 0 : index
    %c0_16 = arith.constant 0 : index
    %c0_17 = arith.constant 0 : index
    %17 = vector.load %arg6[%c0_14, %c0_15, %c0_16, %c0_17] : memref<1x8x8x128xf32, #tpu.memory_space<vmem>>, vector<1x8x8x128xf32>
    tpu.vector_store %arg6[%c0_14, %c0_15, %c0_16, %c0_17], %16 {strides = array<i32>} : memref<1x8x8x128xf32, #tpu.memory_space<vmem>>, vector<1x8x8x128xf32>,
    return
  }
  func.func @transform_0(%arg0: i32) -> (i32, i32, i32, i32) {
    %c0_i32 = arith.constant 0 : i32
    %c0_i32_0 = arith.constant 0 : i32
    %c0_i32_1 = arith.constant 0 : i32
    %c0_i32_2 = arith.constant 0 : i32
    return %arg0, %c0_i32, %c0_i32_0, %c0_i32_1 : i32, i32, i32, i32
  }
  func.func @transform_1(%arg0: i32) -> (i32, i32, i32, i32) {
    %c0_i32 = arith.constant 0 : i32
    %c0_i32_0 = arith.constant 0 : i32
    %c0_i32_1 = arith.constant 0 : i32
    %c0_i32_2 = arith.constant 0 : i32
    return %arg0, %c0_i32, %c0_i32_0, %c0_i32_1 : i32, i32, i32, i32
  }
  func.func @transform_2(%arg0: i32) -> (i32, i32) {
    %c0_i32 = arith.constant 0 : i32
    %c0_i32_0 = arith.constant 0 : i32
    %c0_i32_1 = arith.constant 0 : i32
    return %c0_i32, %c0_i32_0 : i32, i32
  }
  func.func @transform_3(%arg0: i32) -> (i32, i32) {
    %c0_i32 = arith.constant 0 : i32
    %c0_i32_0 = arith.constant 0 : i32
    %c0_i32_1 = arith.constant 0 : i32
    return %c0_i32, %c0_i32_0 : i32, i32
  }
  func.func @transform_4(%arg0: i32) -> (i32, i32) {
    %c0_i32 = arith.constant 0 : i32
    %c0_i32_0 = arith.constant 0 : i32
    %c0_i32_1 = arith.constant 0 : i32
    return %c0_i32, %c0_i32_0 : i32, i32
  }
  func.func @transform_5(%arg0: i32) -> (i32, i32, i32, i32) {
    %c0_i32 = arith.constant 0 : i32
    %c0_i32_0 = arith.constant 0 : i32
    %c0_i32_1 = arith.constant 0 : i32
    %c0_i32_2 = arith.constant 0 : i32
    return %arg0, %c0_i32, %c0_i32_0, %c0_i32_1 : i32, i32, i32, i32
  }
}

module attributes {stable_mosaic.version = 11 : i64} {
  func.func @_bnrelu_conv3x3_stats_kernel(%arg0: i32, %arg1: memref<1x8x8x128xf32, #tpu.memory_space<vmem>>, %arg2: memref<9x128x128xf32, #tpu.memory_space<vmem>>, %arg3: memref<1x128xf32, #tpu.memory_space<vmem>>, %arg4: memref<1x128xf32, #tpu.memory_space<vmem>>, %arg5: memref<1x8x8x128xf32, #tpu.memory_space<vmem>>, %arg6: memref<1x2x128xf32, #tpu.memory_space<vmem>>, %arg7: memref<1x10x10x128xf32, #tpu.memory_space<vmem>>) attributes {dimension_semantics = [#tpu.dimension_semantics<parallel>], iteration_bounds = array<i64: 2>, scalar_prefetch = 0 : i64, scratch_operands = 1 : i64, tpu.core_type = #tpu.core_type<tc>, window_params = [{transform_indices = @transform_0, window_bounds = array<i64: 1, 8, 8, 128>}, {pipeline_mode = #tpu.pipeline_mode<synchronous>, transform_indices = @transform_1, window_bounds = array<i64: 9, 128, 128>}, {pipeline_mode = #tpu.pipeline_mode<synchronous>, transform_indices = @transform_2, window_bounds = array<i64: 1, 128>}, {pipeline_mode = #tpu.pipeline_mode<synchronous>, transform_indices = @transform_3, window_bounds = array<i64: 1, 128>}, {transform_indices = @transform_4, window_bounds = array<i64: 1, 8, 8, 128>}, {transform_indices = @transform_5, window_bounds = array<i64: 1, 2, 128>}]} {
    %c0 = arith.constant 0 : index
    %c0_0 = arith.constant 0 : index
    %c0_1 = arith.constant 0 : index
    %c0_2 = arith.constant 0 : index
    %0 = vector.load %arg1[%c0, %c0_0, %c0_1, %c0_2] : memref<1x8x8x128xf32, #tpu.memory_space<vmem>>, vector<1x8x8x128xf32>
    %c0_3 = arith.constant 0 : index
    %c0_4 = arith.constant 0 : index
    %1 = vector.load %arg3[%c0_3, %c0_4] : memref<1x128xf32, #tpu.memory_space<vmem>>, vector<1x128xf32>
    %2 = vector.shape_cast %1 : vector<1x128xf32> to vector<1x1x1x128xf32>
    %3 = vector.broadcast %2 : vector<1x1x1x128xf32> to vector<1x8x8x128xf32>
    %4 = arith.mulf %0, %3 : vector<1x8x8x128xf32>
    %c0_5 = arith.constant 0 : index
    %c0_6 = arith.constant 0 : index
    %5 = vector.load %arg4[%c0_5, %c0_6] : memref<1x128xf32, #tpu.memory_space<vmem>>, vector<1x128xf32>
    %6 = vector.shape_cast %5 : vector<1x128xf32> to vector<1x1x1x128xf32>
    %7 = vector.broadcast %6 : vector<1x1x1x128xf32> to vector<1x8x8x128xf32>
    %8 = arith.addf %4, %7 : vector<1x8x8x128xf32>
    %cst = arith.constant 0.000000e+00 : f32
    %9 = vector.broadcast %cst : f32 to vector<1x8x8x128xf32>
    %10 = arith.maximumf %8, %9 : vector<1x8x8x128xf32>
    %cst_7 = arith.constant 0.000000e+00 : f32
    %11 = vector.broadcast %cst_7 : f32 to vector<1x10x10x128xf32>
    %c0_8 = arith.constant 0 : index
    %c0_9 = arith.constant 0 : index
    %c0_10 = arith.constant 0 : index
    %c0_11 = arith.constant 0 : index
    %12 = vector.load %arg7[%c0_8, %c0_9, %c0_10, %c0_11] : memref<1x10x10x128xf32, #tpu.memory_space<vmem>>, vector<1x10x10x128xf32>
    tpu.vector_store %arg7[%c0_8, %c0_9, %c0_10, %c0_11], %11 {strides = array<i32>} : memref<1x10x10x128xf32, #tpu.memory_space<vmem>>, vector<1x10x10x128xf32>,
    %c0_12 = arith.constant 0 : index
    %c1 = arith.constant 1 : index
    %c1_13 = arith.constant 1 : index
    %c0_14 = arith.constant 0 : index
    %13 = vector.load %arg7[%c0_12, %c1, %c1_13, %c0_14] : memref<1x10x10x128xf32, #tpu.memory_space<vmem>>, vector<1x8x8x128xf32>
    tpu.vector_store %arg7[%c0_12, %c1, %c1_13, %c0_14], %10 {strides = array<i32>} : memref<1x10x10x128xf32, #tpu.memory_space<vmem>>, vector<1x8x8x128xf32>,
    %cst_15 = arith.constant 0.000000e+00 : f32
    %14 = vector.broadcast %cst_15 : f32 to vector<64x128xf32>
    %c0_16 = arith.constant 0 : index
    %c0_17 = arith.constant 0 : index
    %c0_18 = arith.constant 0 : index
    %c0_19 = arith.constant 0 : index
    %15 = vector.load %arg7[%c0_16, %c0_17, %c0_18, %c0_19] : memref<1x10x10x128xf32, #tpu.memory_space<vmem>>, vector<1x8x8x128xf32>
    %16 = vector.shape_cast %15 : vector<1x8x8x128xf32> to vector<8x8x128xf32>
    %17 = vector.shape_cast %16 : vector<8x8x128xf32> to vector<64x128xf32>
    %c0_20 = arith.constant 0 : index
    %c0_21 = arith.constant 0 : index
    %c0_22 = arith.constant 0 : index
    %18 = vector.load %arg2[%c0_20, %c0_21, %c0_22] : memref<9x128x128xf32, #tpu.memory_space<vmem>>, vector<1x128x128xf32>
    %19 = vector.shape_cast %18 : vector<1x128x128xf32> to vector<128x128xf32>
    %cst_23 = arith.constant dense<0.000000e+00> : vector<64x128xf32>
    %20 = tpu.matmul %17, %19, %cst_23 {dimension_numbers = #tpu.dot_dimension_numbers<[1], [0], [0], [1], [0, 0, 1, 1], [], []>} : vector<64x128xf32>, vector<128x128xf32>, vector<64x128xf32> -> vector<64x128xf32>
    %21 = arith.addf %14, %20 : vector<64x128xf32>
    %c0_24 = arith.constant 0 : index
    %c0_25 = arith.constant 0 : index
    %c1_26 = arith.constant 1 : index
    %c0_27 = arith.constant 0 : index
    %22 = vector.load %arg7[%c0_24, %c0_25, %c1_26, %c0_27] : memref<1x10x10x128xf32, #tpu.memory_space<vmem>>, vector<1x8x8x128xf32>
    %23 = vector.shape_cast %22 : vector<1x8x8x128xf32> to vector<8x8x128xf32>
    %24 = vector.shape_cast %23 : vector<8x8x128xf32> to vector<64x128xf32>
    %c1_28 = arith.constant 1 : index
    %c0_29 = arith.constant 0 : index
    %c0_30 = arith.constant 0 : index
    %25 = vector.load %arg2[%c1_28, %c0_29, %c0_30] : memref<9x128x128xf32, #tpu.memory_space<vmem>>, vector<1x128x128xf32>
    %26 = vector.shape_cast %25 : vector<1x128x128xf32> to vector<128x128xf32>
    %cst_31 = arith.constant dense<0.000000e+00> : vector<64x128xf32>
    %27 = tpu.matmul %24, %26, %cst_31 {dimension_numbers = #tpu.dot_dimension_numbers<[1], [0], [0], [1], [0, 0, 1, 1], [], []>} : vector<64x128xf32>, vector<128x128xf32>, vector<64x128xf32> -> vector<64x128xf32>
    %28 = arith.addf %21, %27 : vector<64x128xf32>
    %c0_32 = arith.constant 0 : index
    %c0_33 = arith.constant 0 : index
    %c2 = arith.constant 2 : index
    %c0_34 = arith.constant 0 : index
    %29 = vector.load %arg7[%c0_32, %c0_33, %c2, %c0_34] : memref<1x10x10x128xf32, #tpu.memory_space<vmem>>, vector<1x8x8x128xf32>
    %30 = vector.shape_cast %29 : vector<1x8x8x128xf32> to vector<8x8x128xf32>
    %31 = vector.shape_cast %30 : vector<8x8x128xf32> to vector<64x128xf32>
    %c2_35 = arith.constant 2 : index
    %c0_36 = arith.constant 0 : index
    %c0_37 = arith.constant 0 : index
    %32 = vector.load %arg2[%c2_35, %c0_36, %c0_37] : memref<9x128x128xf32, #tpu.memory_space<vmem>>, vector<1x128x128xf32>
    %33 = vector.shape_cast %32 : vector<1x128x128xf32> to vector<128x128xf32>
    %cst_38 = arith.constant dense<0.000000e+00> : vector<64x128xf32>
    %34 = tpu.matmul %31, %33, %cst_38 {dimension_numbers = #tpu.dot_dimension_numbers<[1], [0], [0], [1], [0, 0, 1, 1], [], []>} : vector<64x128xf32>, vector<128x128xf32>, vector<64x128xf32> -> vector<64x128xf32>
    %35 = arith.addf %28, %34 : vector<64x128xf32>
    %c0_39 = arith.constant 0 : index
    %c1_40 = arith.constant 1 : index
    %c0_41 = arith.constant 0 : index
    %c0_42 = arith.constant 0 : index
    %36 = vector.load %arg7[%c0_39, %c1_40, %c0_41, %c0_42] : memref<1x10x10x128xf32, #tpu.memory_space<vmem>>, vector<1x8x8x128xf32>
    %37 = vector.shape_cast %36 : vector<1x8x8x128xf32> to vector<8x8x128xf32>
    %38 = vector.shape_cast %37 : vector<8x8x128xf32> to vector<64x128xf32>
    %c3 = arith.constant 3 : index
    %c0_43 = arith.constant 0 : index
    %c0_44 = arith.constant 0 : index
    %39 = vector.load %arg2[%c3, %c0_43, %c0_44] : memref<9x128x128xf32, #tpu.memory_space<vmem>>, vector<1x128x128xf32>
    %40 = vector.shape_cast %39 : vector<1x128x128xf32> to vector<128x128xf32>
    %cst_45 = arith.constant dense<0.000000e+00> : vector<64x128xf32>
    %41 = tpu.matmul %38, %40, %cst_45 {dimension_numbers = #tpu.dot_dimension_numbers<[1], [0], [0], [1], [0, 0, 1, 1], [], []>} : vector<64x128xf32>, vector<128x128xf32>, vector<64x128xf32> -> vector<64x128xf32>
    %42 = arith.addf %35, %41 : vector<64x128xf32>
    %c0_46 = arith.constant 0 : index
    %c1_47 = arith.constant 1 : index
    %c1_48 = arith.constant 1 : index
    %c0_49 = arith.constant 0 : index
    %43 = vector.load %arg7[%c0_46, %c1_47, %c1_48, %c0_49] : memref<1x10x10x128xf32, #tpu.memory_space<vmem>>, vector<1x8x8x128xf32>
    %44 = vector.shape_cast %43 : vector<1x8x8x128xf32> to vector<8x8x128xf32>
    %45 = vector.shape_cast %44 : vector<8x8x128xf32> to vector<64x128xf32>
    %c4 = arith.constant 4 : index
    %c0_50 = arith.constant 0 : index
    %c0_51 = arith.constant 0 : index
    %46 = vector.load %arg2[%c4, %c0_50, %c0_51] : memref<9x128x128xf32, #tpu.memory_space<vmem>>, vector<1x128x128xf32>
    %47 = vector.shape_cast %46 : vector<1x128x128xf32> to vector<128x128xf32>
    %cst_52 = arith.constant dense<0.000000e+00> : vector<64x128xf32>
    %48 = tpu.matmul %45, %47, %cst_52 {dimension_numbers = #tpu.dot_dimension_numbers<[1], [0], [0], [1], [0, 0, 1, 1], [], []>} : vector<64x128xf32>, vector<128x128xf32>, vector<64x128xf32> -> vector<64x128xf32>
    %49 = arith.addf %42, %48 : vector<64x128xf32>
    %c0_53 = arith.constant 0 : index
    %c1_54 = arith.constant 1 : index
    %c2_55 = arith.constant 2 : index
    %c0_56 = arith.constant 0 : index
    %50 = vector.load %arg7[%c0_53, %c1_54, %c2_55, %c0_56] : memref<1x10x10x128xf32, #tpu.memory_space<vmem>>, vector<1x8x8x128xf32>
    %51 = vector.shape_cast %50 : vector<1x8x8x128xf32> to vector<8x8x128xf32>
    %52 = vector.shape_cast %51 : vector<8x8x128xf32> to vector<64x128xf32>
    %c5 = arith.constant 5 : index
    %c0_57 = arith.constant 0 : index
    %c0_58 = arith.constant 0 : index
    %53 = vector.load %arg2[%c5, %c0_57, %c0_58] : memref<9x128x128xf32, #tpu.memory_space<vmem>>, vector<1x128x128xf32>
    %54 = vector.shape_cast %53 : vector<1x128x128xf32> to vector<128x128xf32>
    %cst_59 = arith.constant dense<0.000000e+00> : vector<64x128xf32>
    %55 = tpu.matmul %52, %54, %cst_59 {dimension_numbers = #tpu.dot_dimension_numbers<[1], [0], [0], [1], [0, 0, 1, 1], [], []>} : vector<64x128xf32>, vector<128x128xf32>, vector<64x128xf32> -> vector<64x128xf32>
    %56 = arith.addf %49, %55 : vector<64x128xf32>
    %c0_60 = arith.constant 0 : index
    %c2_61 = arith.constant 2 : index
    %c0_62 = arith.constant 0 : index
    %c0_63 = arith.constant 0 : index
    %57 = vector.load %arg7[%c0_60, %c2_61, %c0_62, %c0_63] : memref<1x10x10x128xf32, #tpu.memory_space<vmem>>, vector<1x8x8x128xf32>
    %58 = vector.shape_cast %57 : vector<1x8x8x128xf32> to vector<8x8x128xf32>
    %59 = vector.shape_cast %58 : vector<8x8x128xf32> to vector<64x128xf32>
    %c6 = arith.constant 6 : index
    %c0_64 = arith.constant 0 : index
    %c0_65 = arith.constant 0 : index
    %60 = vector.load %arg2[%c6, %c0_64, %c0_65] : memref<9x128x128xf32, #tpu.memory_space<vmem>>, vector<1x128x128xf32>
    %61 = vector.shape_cast %60 : vector<1x128x128xf32> to vector<128x128xf32>
    %cst_66 = arith.constant dense<0.000000e+00> : vector<64x128xf32>
    %62 = tpu.matmul %59, %61, %cst_66 {dimension_numbers = #tpu.dot_dimension_numbers<[1], [0], [0], [1], [0, 0, 1, 1], [], []>} : vector<64x128xf32>, vector<128x128xf32>, vector<64x128xf32> -> vector<64x128xf32>
    %63 = arith.addf %56, %62 : vector<64x128xf32>
    %c0_67 = arith.constant 0 : index
    %c2_68 = arith.constant 2 : index
    %c1_69 = arith.constant 1 : index
    %c0_70 = arith.constant 0 : index
    %64 = vector.load %arg7[%c0_67, %c2_68, %c1_69, %c0_70] : memref<1x10x10x128xf32, #tpu.memory_space<vmem>>, vector<1x8x8x128xf32>
    %65 = vector.shape_cast %64 : vector<1x8x8x128xf32> to vector<8x8x128xf32>
    %66 = vector.shape_cast %65 : vector<8x8x128xf32> to vector<64x128xf32>
    %c7 = arith.constant 7 : index
    %c0_71 = arith.constant 0 : index
    %c0_72 = arith.constant 0 : index
    %67 = vector.load %arg2[%c7, %c0_71, %c0_72] : memref<9x128x128xf32, #tpu.memory_space<vmem>>, vector<1x128x128xf32>
    %68 = vector.shape_cast %67 : vector<1x128x128xf32> to vector<128x128xf32>
    %cst_73 = arith.constant dense<0.000000e+00> : vector<64x128xf32>
    %69 = tpu.matmul %66, %68, %cst_73 {dimension_numbers = #tpu.dot_dimension_numbers<[1], [0], [0], [1], [0, 0, 1, 1], [], []>} : vector<64x128xf32>, vector<128x128xf32>, vector<64x128xf32> -> vector<64x128xf32>
    %70 = arith.addf %63, %69 : vector<64x128xf32>
    %c0_74 = arith.constant 0 : index
    %c2_75 = arith.constant 2 : index
    %c2_76 = arith.constant 2 : index
    %c0_77 = arith.constant 0 : index
    %71 = vector.load %arg7[%c0_74, %c2_75, %c2_76, %c0_77] : memref<1x10x10x128xf32, #tpu.memory_space<vmem>>, vector<1x8x8x128xf32>
    %72 = vector.shape_cast %71 : vector<1x8x8x128xf32> to vector<8x8x128xf32>
    %73 = vector.shape_cast %72 : vector<8x8x128xf32> to vector<64x128xf32>
    %c8 = arith.constant 8 : index
    %c0_78 = arith.constant 0 : index
    %c0_79 = arith.constant 0 : index
    %74 = vector.load %arg2[%c8, %c0_78, %c0_79] : memref<9x128x128xf32, #tpu.memory_space<vmem>>, vector<1x128x128xf32>
    %75 = vector.shape_cast %74 : vector<1x128x128xf32> to vector<128x128xf32>
    %cst_80 = arith.constant dense<0.000000e+00> : vector<64x128xf32>
    %76 = tpu.matmul %73, %75, %cst_80 {dimension_numbers = #tpu.dot_dimension_numbers<[1], [0], [0], [1], [0, 0, 1, 1], [], []>} : vector<64x128xf32>, vector<128x128xf32>, vector<64x128xf32> -> vector<64x128xf32>
    %77 = arith.addf %70, %76 : vector<64x128xf32>
    %78 = vector.shape_cast %77 : vector<64x128xf32> to vector<1x8x8x128xf32>
    %c0_81 = arith.constant 0 : index
    %c0_82 = arith.constant 0 : index
    %c0_83 = arith.constant 0 : index
    %c0_84 = arith.constant 0 : index
    %79 = vector.load %arg5[%c0_81, %c0_82, %c0_83, %c0_84] : memref<1x8x8x128xf32, #tpu.memory_space<vmem>>, vector<1x8x8x128xf32>
    tpu.vector_store %arg5[%c0_81, %c0_82, %c0_83, %c0_84], %78 {strides = array<i32>} : memref<1x8x8x128xf32, #tpu.memory_space<vmem>>, vector<1x8x8x128xf32>,
    %cst_85 = arith.constant dense<0.000000e+00> : vector<128xf32>
    %80 = vector.multi_reduction <add>, %77, %cst_85 [0] : vector<64x128xf32> to vector<128xf32>
    %81 = vector.shape_cast %80 : vector<128xf32> to vector<1x128xf32>
    %82 = arith.mulf %77, %77 : vector<64x128xf32>
    %cst_86 = arith.constant dense<0.000000e+00> : vector<128xf32>
    %83 = vector.multi_reduction <add>, %82, %cst_86 [0] : vector<64x128xf32> to vector<128xf32>
    %84 = vector.shape_cast %83 : vector<128xf32> to vector<1x128xf32>
    %85 = tpu.concatenate %81, %84 in 0 : vector<1x128xf32>, vector<1x128xf32> -> vector<2x128xf32>
    %86 = vector.shape_cast %85 : vector<2x128xf32> to vector<1x2x128xf32>
    %c0_87 = arith.constant 0 : index
    %c0_88 = arith.constant 0 : index
    %c0_89 = arith.constant 0 : index
    %87 = vector.load %arg6[%c0_87, %c0_88, %c0_89] : memref<1x2x128xf32, #tpu.memory_space<vmem>>, vector<1x2x128xf32>
    tpu.vector_store %arg6[%c0_87, %c0_88, %c0_89], %86 {strides = array<i32>} : memref<1x2x128xf32, #tpu.memory_space<vmem>>, vector<1x2x128xf32>,
    return
  }
  func.func @transform_0(%arg0: i32) -> (i32, i32, i32, i32) {
    %c0_i32 = arith.constant 0 : i32
    %c0_i32_0 = arith.constant 0 : i32
    %c0_i32_1 = arith.constant 0 : i32
    %c0_i32_2 = arith.constant 0 : i32
    return %arg0, %c0_i32, %c0_i32_0, %c0_i32_1 : i32, i32, i32, i32
  }
  func.func @transform_1(%arg0: i32) -> (i32, i32, i32) {
    %c0_i32 = arith.constant 0 : i32
    %c0_i32_0 = arith.constant 0 : i32
    %c0_i32_1 = arith.constant 0 : i32
    %c0_i32_2 = arith.constant 0 : i32
    return %c0_i32, %c0_i32_0, %c0_i32_1 : i32, i32, i32
  }
  func.func @transform_2(%arg0: i32) -> (i32, i32) {
    %c0_i32 = arith.constant 0 : i32
    %c0_i32_0 = arith.constant 0 : i32
    %c0_i32_1 = arith.constant 0 : i32
    return %c0_i32, %c0_i32_0 : i32, i32
  }
  func.func @transform_3(%arg0: i32) -> (i32, i32) {
    %c0_i32 = arith.constant 0 : i32
    %c0_i32_0 = arith.constant 0 : i32
    %c0_i32_1 = arith.constant 0 : i32
    return %c0_i32, %c0_i32_0 : i32, i32
  }
  func.func @transform_4(%arg0: i32) -> (i32, i32, i32, i32) {
    %c0_i32 = arith.constant 0 : i32
    %c0_i32_0 = arith.constant 0 : i32
    %c0_i32_1 = arith.constant 0 : i32
    %c0_i32_2 = arith.constant 0 : i32
    return %arg0, %c0_i32, %c0_i32_0, %c0_i32_1 : i32, i32, i32, i32
  }
  func.func @transform_5(%arg0: i32) -> (i32, i32, i32) {
    %c0_i32 = arith.constant 0 : i32
    %c0_i32_0 = arith.constant 0 : i32
    %c0_i32_1 = arith.constant 0 : i32
    return %arg0, %c0_i32, %c0_i32_0 : i32, i32, i32
  }
}

</mosaic_0001>

<llo_original>
// kernel: basic_block_forward.5
$region0: #{basic_block_forward.5}
  #allocation0 [shape = 'u32[]', space=smem, size = 0x4, offset = 0x4, fixed_abs, tag = 'smem constant byte address 0x4 - core index']
  #allocation1 [shape = 'u32[144,128]{1,0:T(1,128)}', space=vmem, size = 0x12000, scoped, tag = 'internal scratch']
  %s0 = inlined_call_operand.vmem [shape: f32[2,8,8,128], index: 0, kind: input, shape index: {}]
  %s1 = inlined_call_operand.vmem [shape: f32[2,8,8,128], index: 1, kind: input, shape index: {}]
  %s2 = inlined_call_operand.vmem [shape: f32[128,128], index: 2, kind: input, shape index: {}]
  %s3 = inlined_call_operand.vmem [shape: f32[1,128], index: 3, kind: input, shape index: {}]
  %s4 = inlined_call_operand.vmem [shape: f32[1,128], index: 4, kind: input, shape index: {}]
  %s5 = inlined_call_operand.vmem [shape: f32[2,8,8,128], index: 5, kind: output, shape index: {}]
  %s6 = sld [smem:[#allocation0]]
  $region53: #{basic_block_forward.5} parent=0
    _
  %s8 = ssub.s32 1, %s6
  %s9 = scalar_select 0, %s8, %s6
  loop: start=0, step=1, limit=4
  $region2: #{basic_block_forward.5} parent=0 // loop_pre_header
    _
  $region3: #{basic_block_forward.5} parent=0 // loop_header
    %s11 = sphi 0, %s15
    %p12 = scmp.ge.s32.totalorder %s11, 4
    %s21 = sphi 0, %s23
    %s24 = sphi 0, %s21
    %s25 = sphi 0, %s24
    %s41 = sphi 0, %s25
    %s47 = sphi 0, %s49
    %s50 = sphi 0, %s47
    %s51 = sphi 0, %s50
    %s67 = sphi 0, %s51
    %s71 = sphi 0, %s71
    %s73 = sphi 0, %s71
    %s74 = sphi 0, %s73
    %s88 = sphi 0, %s74
    %s92 = sphi 0, %s92
    %s94 = sphi 0, %s92
    %s95 = sphi 0, %s94
    %s109 = sphi 0, %s95
    %s113 = sphi 0, %s113
    %s115 = sphi 0, %s113
    %s116 = sphi 0, %s115
    %s130 = sphi 0, %s116
    %s136 = sphi 0, %s138
    %s139 = sphi 0, %s136
    %s140 = sphi 0, %s139
    %s156 = sphi 0, %s140
  $region4: #{basic_block_forward.5} parent=0 // loop_header_branch
    %14 = sbr.rel (%p12) target = $region8
  $region5: #{basic_block_forward.5} parent=0 // loop_body
    %s16 = ssub.s32 %s11, 1
    %s17 = ssub.s32 %s11, 2
    %s18 = sadd.s32 %s11, 1
    %s19 = ssub.s32 %s11, %s18
    %p20 = scmp.eq.s32.totalorder %s19, 0
    %s22 = sadd.s32 %s21, 1
    %s23 = scalar_select %p20, %s21, %s22
    %p26 = pneg %p20
    %p27 = scmp.eq.s32.totalorder %s11, 1
    %p28 = por %p26, %p27
    %p29 = scmp.ne.s32.totalorder %s21, %s24
    %p30 = scmp.eq.s32.totalorder %s11, 0
    %p31 = por %p29, %p30
    %p32 = scmp.ne.s32.totalorder %s21, %s24
    %p33 = scmp.eq.s32.totalorder %s16, 1
    %p34 = por %p32, %p33
    %p35 = scmp.ne.s32.totalorder %s24, %s25
    %p36 = scmp.eq.s32.totalorder %s16, 0
    %p37 = por %p35, %p36
    %p38 = scmp.ne.s32.totalorder %s24, %s25
    %p39 = scmp.eq.s32.totalorder %s17, 1
    %p40 = por %p38, %p39
    %p42 = scmp.ne.s32.totalorder %s25, %s41
    %p43 = scmp.eq.s32.totalorder %s17, 0
    %p44 = por %p42, %p43
    %s45 = ssub.s32 %s11, %s18
    %p46 = scmp.eq.s32.totalorder %s45, 0
    %s48 = sadd.s32 %s47, 1
    %s49 = scalar_select %p46, %s47, %s48
    %p52 = pneg %p46
    %p53 = scmp.eq.s32.totalorder %s11, 1
    %p54 = por %p52, %p53
    %p55 = scmp.ne.s32.totalorder %s47, %s50
    %p56 = scmp.eq.s32.totalorder %s11, 0
    %p57 = por %p55, %p56
    %p58 = scmp.ne.s32.totalorder %s47, %s50
    %p59 = scmp.eq.s32.totalorder %s16, 1
    %p60 = por %p58, %p59
    %p61 = scmp.ne.s32.totalorder %s50, %s51
    %p62 = scmp.eq.s32.totalorder %s16, 0
    %p63 = por %p61, %p62
    %p64 = scmp.ne.s32.totalorder %s50, %s51
    %p65 = scmp.eq.s32.totalorder %s17, 1
    %p66 = por %p64, %p65
    %p68 = scmp.ne.s32.totalorder %s51, %s67
    %p69 = scmp.eq.s32.totalorder %s17, 0
    %p70 = por %p68, %p69
    %s72 = sadd.s32 %s71, 1
    %p75 = scmp.eq.s32.totalorder %s11, 1
    %p76 = scmp.ne.s32.totalorder %s71, %s73
    %p77 = scmp.eq.s32.totalorder %s11, 0
    %p78 = por %p76, %p77
    %p79 = scmp.ne.s32.totalorder %s71, %s73
    %p80 = scmp.eq.s32.totalorder %s16, 1
    %p81 = por %p79, %p80
    %p82 = scmp.ne.s32.totalorder %s73, %s74
    %p83 = scmp.eq.s32.totalorder %s16, 0
    %p84 = por %p82, %p83
    %p85 = scmp.ne.s32.totalorder %s73, %s74
    %p86 = scmp.eq.s32.totalorder %s17, 1
    %p87 = por %p85, %p86
    %p89 = scmp.ne.s32.totalorder %s74, %s88
    %p90 = scmp.eq.s32.totalorder %s17, 0
    %p91 = por %p89, %p90
    %s93 = sadd.s32 %s92, 1
    %p96 = scmp.eq.s32.totalorder %s11, 1
    %p97 = scmp.ne.s32.totalorder %s92, %s94
    %p98 = scmp.eq.s32.totalorder %s11, 0
    %p99 = por %p97, %p98
    %p100 = scmp.ne.s32.totalorder %s92, %s94
    %p101 = scmp.eq.s32.totalorder %s16, 1
    %p102 = por %p100, %p101
    %p103 = scmp.ne.s32.totalorder %s94, %s95
    %p104 = scmp.eq.s32.totalorder %s16, 0
    %p105 = por %p103, %p104
    %p106 = scmp.ne.s32.totalorder %s94, %s95
    %p107 = scmp.eq.s32.totalorder %s17, 1
    %p108 = por %p106, %p107
    %p110 = scmp.ne.s32.totalorder %s95, %s109
    %p111 = scmp.eq.s32.totalorder %s17, 0
    %p112 = por %p110, %p111
    %s114 = sadd.s32 %s113, 1
    %p117 = scmp.eq.s32.totalorder %s11, 1
    %p118 = scmp.ne.s32.totalorder %s113, %s115
    %p119 = scmp.eq.s32.totalorder %s11, 0
    %p120 = por %p118, %p119
    %p121 = scmp.ne.s32.totalorder %s113, %s115
    %p122 = scmp.eq.s32.totalorder %s16, 1
    %p123 = por %p121, %p122
    %p124 = scmp.ne.s32.totalorder %s115, %s116
    %p125 = scmp.eq.s32.totalorder %s16, 0
    %p126 = por %p124, %p125
    %p127 = scmp.ne.s32.totalorder %s115, %s116
    %p128 = scmp.eq.s32.totalorder %s17, 1
    %p129 = por %p127, %p128
    %p131 = scmp.ne.s32.totalorder %s116, %s130
    %p132 = scmp.eq.s32.totalorder %s17, 0
    %p133 = por %p131, %p132
    %s134 = ssub.s32 %s11, %s18
    %p135 = scmp.eq.s32.totalorder %s134, 0
    %s137 = sadd.s32 %s136, 1
    %s138 = scalar_select %p135, %s136, %s137
    %p141 = pneg %p135
    %p142 = scmp.eq.s32.totalorder %s11, 1
    %p143 = por %p141, %p142
    %p144 = scmp.ne.s32.totalorder %s136, %s139
    %p145 = scmp.eq.s32.totalorder %s11, 0
    %p146 = por %p144, %p145
    %p147 = scmp.ne.s32.totalorder %s136, %s139
    %p148 = scmp.eq.s32.totalorder %s16, 1
    %p149 = por %p147, %p148
    %p150 = scmp.ne.s32.totalorder %s139, %s140
    %p151 = scmp.eq.s32.totalorder %s16, 0
    %p152 = por %p150, %p151
    %p153 = scmp.ne.s32.totalorder %s139, %s140
    %p154 = scmp.eq.s32.totalorder %s17, 1
    %p155 = por %p153, %p154
    %p157 = scmp.ne.s32.totalorder %s140, %s156
    %p158 = scmp.eq.s32.totalorder %s17, 0
    %p159 = por %p157, %p158
    %p160 = scmp.le.s32.totalorder 1, %s11
    %p161 = scmp.lt.s32.totalorder %s11, 3
    %p162 = pnand %p160, %p161
    %p163 = pneg %p162
    // Predicated region
    $region9: #{basic_block_forward.5} parent=5 // pred_check
      _
    $region10: #{basic_block_forward.5} parent=5 // pred_check_branch
      %165 = sbr.rel (%p162) target = $region12
    $region11: #{basic_block_forward.5} parent=5 // pred_region
      %s166 = ssub.s32 %s11, 1
      // Predicated region
      $region13: #{basic_block_forward.5} parent=11 // pred_check
        %p167 = pneg %p84
      $region14: #{basic_block_forward.5} parent=11 // pred_check_branch
        %169 = sbr.rel (%p167) target = $region16
      $region15: #{basic_block_forward.5} parent=11 // pred_region
        _
      $region16: #{basic_block_forward.5} parent=11 // pred_fallthru
        _
      // Predicated region
      $region17: #{basic_block_forward.5} parent=11 // pred_check
        %p170 = pneg %p105
      $region18: #{basic_block_forward.5} parent=11 // pred_check_branch
        %172 = sbr.rel (%p170) target = $region20
      $region19: #{basic_block_forward.5} parent=11 // pred_region
        _
      $region20: #{basic_block_forward.5} parent=11 // pred_fallthru
        _
      // Predicated region
      $region21: #{basic_block_forward.5} parent=11 // pred_check
        %p173 = pneg %p126
      $region22: #{basic_block_forward.5} parent=11 // pred_check_branch
        %175 = sbr.rel (%p173) target = $region24
      $region23: #{basic_block_forward.5} parent=11 // pred_region
        _
      $region24: #{basic_block_forward.5} parent=11 // pred_fallthru
        _
    $region12: #{basic_block_forward.5} parent=5 // pred_fallthru
      _
    %p176 = scmp.lt.s32.totalorder %s11, 2
    // Predicated region
    $region25: #{basic_block_forward.5} parent=5 // pred_check
      %p177 = pneg %p176
    $region26: #{basic_block_forward.5} parent=5 // pred_check_branch
      %179 = sbr.rel (%p177) target = $region28
    $region27: #{basic_block_forward.5} parent=5 // pred_region
      // Predicated region
      $region29: #{basic_block_forward.5} parent=27 // pred_check
        %p180 = pneg %p31
      $region30: #{basic_block_forward.5} parent=27 // pred_check_branch
        %182 = sbr.rel (%p180) target = $region32
      $region31: #{basic_block_forward.5} parent=27 // pred_region
        %p183 = scmp.lt.s32.totalorder %s11, 1
        %s184 = scalar_select %p183, %s11, 1
        %s185 = smul.addr %s184, 8
        %s186 = smul.addr %s185, 8
        %s187 = scalar_lea.vmem %s0, %s186
      $region32: #{basic_block_forward.5} parent=27 // pred_fallthru
        _
      // Predicated region
      $region33: #{basic_block_forward.5} parent=27 // pred_check
        %p188 = pneg %p57
      $region34: #{basic_block_forward.5} parent=27 // pred_check_branch
        %190 = sbr.rel (%p188) target = $region36
      $region35: #{basic_block_forward.5} parent=27 // pred_region
        %p191 = scmp.lt.s32.totalorder %s11, 1
        %s192 = scalar_select %p191, %s11, 1
        %s193 = smul.addr %s192, 8
        %s194 = smul.addr %s193, 8
        %s195 = scalar_lea.vmem %s1, %s194
      $region36: #{basic_block_forward.5} parent=27 // pred_fallthru
        _
    $region28: #{basic_block_forward.5} parent=5 // pred_fallthru
      _
    %p196 = scmp.le.s32.totalorder 1, %s11
    %p197 = scmp.lt.s32.totalorder %s11, 3
    %p198 = pnand %p196, %p197
    %p199 = pneg %p198
    // Predicated region
    $region37: #{basic_block_forward.5} parent=5 // pred_check
      _
    $region38: #{basic_block_forward.5} parent=5 // pred_check_branch
      %201 = sbr.rel (%p198) target = $region40
    $region39: #{basic_block_forward.5} parent=5 // pred_region
      %s202 = ssub.s32 %s11, 1
      %p203 = scmp.lt.s32.totalorder %s16, 1
      %s204 = scalar_select %p203, %s16, 1
      %s205 = smul.addr %s204, 8
      %s206 = smul.addr %s205, 8
      %s207 = scalar_lea.vmem %s0, %s206
      %p208 = pneg %p37
      %p209 = pneg %p34
      %p210 = scmp.lt.s32.totalorder %s16, 1
      %s211 = scalar_select %p210, %s16, 1
      %s212 = smul.addr %s211, 8
      %s213 = smul.addr %s212, 8
      %s214 = scalar_lea.vmem %s1, %s213
      %p215 = pneg %p63
      %p216 = pneg %p60
      %p217 = pneg %p84
      %p218 = pneg %p81
      %p219 = pneg %p105
      %p220 = pneg %p102
      %p221 = pneg %p126
      %p222 = pneg %p123
      %p223 = pneg %p152
      %p224 = pneg %p149
      %p225 = scmp.lt.s32.totalorder %s16, 1
      %s226 = scalar_select %p225, %s16, 1
      %s227 = smul.addr %s226, 8
      %s228 = smul.addr %s227, 8
      %s229 = scalar_lea.vmem %s5, %s228
      %p230 = scmp.lt.s32.totalorder %s16, 1
      %s231 = scalar_select %p230, %s16, 1
      %s232 = smul.addr %s231, 8
      %s233 = smul.addr %s232, 8
      %s234 = scalar_lea.vmem %s0, %s233
      %p235 = scmp.lt.s32.totalorder %s16, 1
      %s236 = scalar_select %p235, %s16, 1
      %s237 = smul.addr %s236, 8
      %s238 = smul.addr %s237, 8
      %s239 = scalar_lea.vmem %s1, %s238
      %p240 = scmp.lt.s32.totalorder %s16, 1
      %s241 = scalar_select %p240, %s16, 1
      %s242 = smul.addr %s241, 8
      %s243 = smul.addr %s242, 8
      %s244 = scalar_lea.vmem %s5, %s243
      %v245 = vld [vmem:[%s239] sm:$0xff]
      %v246 = vld [vmem:[%s239 + $0x8] sm:$0xff]
      %v247 = vld [vmem:[%s239 + $0x10] sm:$0xff]
      %v248 = vld [vmem:[%s239 + $0x18] sm:$0xff]
      %v249 = vld [vmem:[%s239 + $0x20] sm:$0xff]
      %v250 = vld [vmem:[%s239 + $0x28] sm:$0xff]
      %v251 = vld [vmem:[%s239 + $0x30] sm:$0xff]
      %v252 = vld [vmem:[%s239 + $0x38] sm:$0xff]
      %v253 = vld [vmem:[%s2] sm:$0xff]
      %v254 = vld [vmem:[%s2 + $0x8] sm:$0xff]
      %v255 = vld [vmem:[%s2 + $0x10] sm:$0xff]
      %v256 = vld [vmem:[%s2 + $0x18] sm:$0xff]
      %v257 = vld [vmem:[%s2 + $0x20] sm:$0xff]
      %v258 = vld [vmem:[%s2 + $0x28] sm:$0xff]
      %v259 = vld [vmem:[%s2 + $0x30] sm:$0xff]
      %v260 = vld [vmem:[%s2 + $0x38] sm:$0xff]
      %v261 = vld [vmem:[%s2 + $0x40] sm:$0xff]
      %v262 = vld [vmem:[%s2 + $0x48] sm:$0xff]
      %v263 = vld [vmem:[%s2 + $0x50] sm:$0xff]
      %v264 = vld [vmem:[%s2 + $0x58] sm:$0xff]
      %v265 = vld [vmem:[%s2 + $0x60] sm:$0xff]
      %v266 = vld [vmem:[%s2 + $0x68] sm:$0xff]
      %v267 = vld [vmem:[%s2 + $0x70] sm:$0xff]
      %v268 = vld [vmem:[%s2 + $0x78] sm:$0xff]
      %269 = vmatprep.subr.mxu0 0.0
      %270 = vmatpush1.msra.mxu0 %v253
      %271 = vmatprep.subr.mxu0 0.0
      %272 = vmatpush1.msra.mxu0 %v254
      %273 = vmatprep.subr.mxu0 0.0
      %274 = vmatpush1.msra.mxu0 %v255
      %275 = vmatprep.subr.mxu0 0.0
      %276 = vmatpush1.msra.mxu0 %v256
      %277 = vmatprep.subr.mxu0 0.0
      %278 = vmatpush1.msra.mxu0 %v257
      %279 = vmatprep.subr.mxu0 0.0
      %280 = vmatpush1.msra.mxu0 %v258
      %281 = vmatprep.subr.mxu0 0.0
      %282 = vmatpush1.msra.mxu0 %v259
      %283 = vmatprep.subr.mxu0 0.0
      %284 = vmatpush1.msra.mxu0 %v260
      %285 = vmatprep.subr.mxu0 0.0
      %286 = vmatpush1.msra.mxu0 %v261
      %287 = vmatprep.subr.mxu0 0.0
      %288 = vmatpush1.msra.mxu0 %v262
      %289 = vmatprep.subr.mxu0 0.0
      %290 = vmatpush1.msra.mxu0 %v263
      %291 = vmatprep.subr.mxu0 0.0
      %292 = vmatpush1.msra.mxu0 %v264
      %293 = vmatprep.subr.mxu0 0.0
      %294 = vmatpush1.msra.mxu0 %v265
      %295 = vmatprep.subr.mxu0 0.0
      %296 = vmatpush1.msra.mxu0 %v266
      %297 = vmatprep.subr.mxu0 0.0
      %298 = vmatpush1.msra.mxu0 %v267
      %299 = vmatprep.subr.mxu0 0.0
      %300 = vmatpush1.msra.mxu0 %v268
      %301 = vmatprep.subr.mxu0 0.0
      %302 = vmatpush1.msra.mxu0 0.0
      %303 = vmatprep.subr.mxu0 0.0
      %304 = vmatpush1.msra.mxu0 0.0
      %305 = vmatprep.subr.mxu0 0.0
      %306 = vmatpush1.msra.mxu0 0.0
      %307 = vmatprep.subr.mxu0 0.0
      %308 = vmatpush1.msra.mxu0 0.0
      %309 = vmatprep.subr.mxu0 0.0
      %310 = vmatpush1.msra.mxu0 0.0
      %311 = vmatprep.subr.mxu0 0.0
      %312 = vmatpush1.msra.mxu0 0.0
      %313 = vmatprep.subr.mxu0 0.0
      %314 = vmatpush1.msra.mxu0 0.0
      %315 = vmatprep.subr.mxu0 0.0
      %316 = vmatpush1.msra.mxu0 0.0
      %317 = vmatprep.subr.mxu0 0.0
      %318 = vmatpush1.msra.mxu0 0.0
      %319 = vmatprep.subr.mxu0 0.0
      %320 = vmatpush1.msra.mxu0 0.0
      %321 = vmatprep.subr.mxu0 0.0
      %322 = vmatpush1.msra.mxu0 0.0
      %323 = vmatprep.subr.mxu0 0.0
      %324 = vmatpush1.msra.mxu0 0.0
      %325 = vmatprep.subr.mxu0 0.0
      %326 = vmatpush1.msra.mxu0 0.0
      %327 = vmatprep.subr.mxu0 0.0
      %328 = vmatpush1.msra.mxu0 0.0
      %329 = vmatprep.subr.mxu0 0.0
      %330 = vmatpush1.msra.mxu0 0.0
      %331 = vmatprep.subr.mxu0 0.0
      %332 = vmatpush1.msra.mxu0 0.0
      %333 = vmatprep.mubr.f32.mxu0 0.0
      %334 = vmatmul.mubr.f32.gmra.mrb[0].mxu0 %v245
      %v335 = vpop.f32.mrb[0].mxu0
      %v336 = vadd.f32 0.0, %v335
      %v337 = vpop.f32.mrb[0].mxu0
      %338 = vmatprep.mubr.f32.mxu0 0.0
      %339 = vmatmul.mubr.f32.gmra.mrb[0].mxu0 %v246
      %v340 = vpop.f32.mrb[0].mxu0
      %v341 = vadd.f32 0.0, %v340
      %v342 = vpop.f32.mrb[0].mxu0
      %343 = vmatprep.mubr.f32.mxu0 0.0
      %344 = vmatmul.mubr.f32.gmra.mrb[0].mxu0 %v247
      %v345 = vpop.f32.mrb[0].mxu0
      %v346 = vadd.f32 0.0, %v345
      %v347 = vpop.f32.mrb[0].mxu0
      %348 = vmatprep.mubr.f32.mxu0 0.0
      %349 = vmatmul.mubr.f32.gmra.mrb[0].mxu0 %v248
      %v350 = vpop.f32.mrb[0].mxu0
      %v351 = vadd.f32 0.0, %v350
      %v352 = vpop.f32.mrb[0].mxu0
      %353 = vmatprep.mubr.f32.mxu0 0.0
      %354 = vmatmul.mubr.f32.gmra.mrb[0].mxu0 %v249
      %v355 = vpop.f32.mrb[0].mxu0
      %v356 = vadd.f32 0.0, %v355
      %v357 = vpop.f32.mrb[0].mxu0
      %358 = vmatprep.mubr.f32.mxu0 0.0
      %359 = vmatmul.mubr.f32.gmra.mrb[0].mxu0 %v250
      %v360 = vpop.f32.mrb[0].mxu0
      %v361 = vadd.f32 0.0, %v360
      %v362 = vpop.f32.mrb[0].mxu0
      %363 = vmatprep.mubr.f32.mxu0 0.0
      %364 = vmatmul.mubr.f32.gmra.mrb[0].mxu0 %v251
      %v365 = vpop.f32.mrb[0].mxu0
      %v366 = vadd.f32 0.0, %v365
      %v367 = vpop.f32.mrb[0].mxu0
      %368 = vmatprep.mubr.f32.mxu0 0.0
      %369 = vmatmul.mubr.f32.gmra.mrb[0].mxu0 %v252
      %v370 = vpop.f32.mrb[0].mxu0
      %v371 = vadd.f32 0.0, %v370
      %v372 = vpop.f32.mrb[0].mxu0
      %373 = vdwg.mxu0
      %v374 = vld [vmem:[%s234] sm:$0xff]
      %v375 = vld [vmem:[%s234 + $0x8] sm:$0xff]
      %v376 = vld [vmem:[%s234 + $0x10] sm:$0xff]
      %v377 = vld [vmem:[%s234 + $0x18] sm:$0xff]
      %v378 = vld [vmem:[%s234 + $0x20] sm:$0xff]
      %v379 = vld [vmem:[%s234 + $0x28] sm:$0xff]
      %v380 = vld [vmem:[%s234 + $0x30] sm:$0xff]
      %v381 = vld [vmem:[%s234 + $0x38] sm:$0xff]
      %v382 = vld [vmem:[%s3] sm:$0x1]
      %v384 = vlaneseq
      %v385 = vshrl.u32 %v384, 7
      %v386 = vsub.s32 0, %v385
      %v387 = vrot.slane %v382, %v386
      %v389 = vmul.f32 %v374, %v387
      %v390 = vmul.f32 %v375, %v387
      %v391 = vmul.f32 %v376, %v387
      %v392 = vmul.f32 %v377, %v387
      %v393 = vmul.f32 %v378, %v387
      %v394 = vmul.f32 %v379, %v387
      %v395 = vmul.f32 %v380, %v387
      %v396 = vmul.f32 %v381, %v387
      %v397 = vld [vmem:[%s4] sm:$0x1]
      %v399 = vlaneseq
      %v400 = vshrl.u32 %v399, 7
      %v401 = vsub.s32 0, %v400
      %v402 = vrot.slane %v397, %v401
      %v404 = vadd.f32 %v389, %v402
      %v405 = vadd.f32 %v390, %v402
      %v406 = vadd.f32 %v391, %v402
      %v407 = vadd.f32 %v392, %v402
      %v408 = vadd.f32 %v393, %v402
      %v409 = vadd.f32 %v394, %v402
      %v410 = vadd.f32 %v395, %v402
      %v411 = vadd.f32 %v396, %v402
      %v412 = vadd.f32 %v336, %v404
      %v413 = vadd.f32 %v341, %v405
      %v414 = vadd.f32 %v346, %v406
      %v415 = vadd.f32 %v351, %v407
      %v416 = vadd.f32 %v356, %v408
      %v417 = vadd.f32 %v361, %v409
      %v418 = vadd.f32 %v366, %v410
      %v419 = vadd.f32 %v371, %v411
      %v420 = vmax.f32 %v412, 0.0
      %v421 = vmax.f32 %v413, 0.0
      %v422 = vmax.f32 %v414, 0.0
      %v423 = vmax.f32 %v415, 0.0
      %v424 = vmax.f32 %v416, 0.0
      %v425 = vmax.f32 %v417, 0.0
      %v426 = vmax.f32 %v418, 0.0
      %v427 = vmax.f32 %v419, 0.0
      %428 = vst [vmem:[%s244] sm:$0xff] %v420
      %429 = vst [vmem:[%s244 + $0x8] sm:$0xff] %v421
      %430 = vst [vmem:[%s244 + $0x10] sm:$0xff] %v422
      %431 = vst [vmem:[%s244 + $0x18] sm:$0xff] %v423
      %432 = vst [vmem:[%s244 + $0x20] sm:$0xff] %v424
      %433 = vst [vmem:[%s244 + $0x28] sm:$0xff] %v425
      %434 = vst [vmem:[%s244 + $0x30] sm:$0xff] %v426
      %435 = vst [vmem:[%s244 + $0x38] sm:$0xff] %v427
      %p436 = scmp.lt.s32.totalorder %s16, 1
      %s437 = scalar_select %p436, %s16, 1
      %s438 = smul.addr %s437, 8
      %s439 = smul.addr %s438, 8
      %s440 = scalar_lea.vmem %s5, %s439
      // Predicated region
      $region41: #{basic_block_forward.5} parent=39 // pred_check
        %p441 = pneg %p149
      $region42: #{basic_block_forward.5} parent=39 // pred_check_branch
        %443 = sbr.rel (%p441) target = $region44
      $region43: #{basic_block_forward.5} parent=39 // pred_region
        _
      $region44: #{basic_block_forward.5} parent=39 // pred_fallthru
        _
    $region40: #{basic_block_forward.5} parent=5 // pred_fallthru
      _
    %p444 = scmp.le.s32.totalorder 2, %s11
    // Predicated region
    $region45: #{basic_block_forward.5} parent=5 // pred_check
      %p445 = pneg %p444
    $region46: #{basic_block_forward.5} parent=5 // pred_check_branch
      %447 = sbr.rel (%p445) target = $region48
    $region47: #{basic_block_forward.5} parent=5 // pred_region
      %s448 = ssub.s32 %s11, 2
      // Predicated region
      $region49: #{basic_block_forward.5} parent=47 // pred_check
        %p449 = pneg %p155
      $region50: #{basic_block_forward.5} parent=47 // pred_check_branch
        %451 = sbr.rel (%p449) target = $region52
      $region51: #{basic_block_forward.5} parent=47 // pred_region
        %p452 = scmp.lt.s32.totalorder %s17, 1
        %s453 = scalar_select %p452, %s17, 1
        %s454 = smul.addr %s453, 8
        %s455 = smul.addr %s454, 8
        %s456 = scalar_lea.vmem %s5, %s455
      $region52: #{basic_block_forward.5} parent=47 // pred_fallthru
        _
    $region48: #{basic_block_forward.5} parent=5 // pred_fallthru
      _
  $region6: #{basic_block_forward.5} parent=0 // loop_footer
    %s15 = sadd.s32 1, %s11
  $region7: #{basic_block_forward.5} parent=0 // loop_footer_branch
    %10 = sbr.rel target = $region3
  $region8: #{basic_block_forward.5} parent=0 // loop_exit
    _

// kernel: basic_block_forward.3
$region0: #{basic_block_forward.3}
  #allocation0 [shape = 'u32[]', space=smem, size = 0x4, offset = 0x4, fixed_abs, tag = 'smem constant byte address 0x4 - core index']
  #allocation1 [shape = 'u32[144,128]{1,0:T(1,128)}', space=vmem, size = 0x12000, scoped, tag = 'internal scratch']
  %s0 = inlined_call_operand.vmem [shape: f32[8,9,9,128], index: 0, kind: input, shape index: {}]
  %s1 = inlined_call_operand.vmem [shape: f32[9,128,128], index: 1, kind: input, shape index: {}]
  %s2 = inlined_call_operand.vmem [shape: f32[2,8,8,128], index: 2, kind: output, shape index: {0}]
  %s3 = inlined_call_operand.vmem [shape: f32[2,2,128], index: 3, kind: output, shape index: {1}]
  %4 = xla_tuple %s2, %s3
  %s5 = sld [smem:[#allocation0]]
  $region49: #{basic_block_forward.3} parent=0
    _
  %s7 = ssub.s32 1, %s5
  %s8 = scalar_select 0, %s7, %s5
  loop: start=0, step=1, limit=4
  $region2: #{basic_block_forward.3} parent=0 // loop_pre_header
    _
  $region3: #{basic_block_forward.3} parent=0 // loop_header
    %s10 = sphi 0, %s14
    %p11 = scmp.ge.s32.totalorder %s10, 4
    %s20 = sphi 0, %s22
    %s23 = sphi 0, %s20
    %s24 = sphi 0, %s23
    %s40 = sphi 0, %s24
    %s44 = sphi 0, %s44
    %s46 = sphi 0, %s44
    %s47 = sphi 0, %s46
    %s61 = sphi 0, %s47
    %s67 = sphi 0, %s69
    %s70 = sphi 0, %s67
    %s71 = sphi 0, %s70
    %s87 = sphi 0, %s71
    %s93 = sphi 0, %s95
    %s96 = sphi 0, %s93
    %s97 = sphi 0, %s96
    %s113 = sphi 0, %s97
  $region4: #{basic_block_forward.3} parent=0 // loop_header_branch
    %13 = sbr.rel (%p11) target = $region8
  $region5: #{basic_block_forward.3} parent=0 // loop_body
    %s15 = ssub.s32 %s10, 1
    %s16 = ssub.s32 %s10, 2
    %s17 = sadd.s32 %s10, 1
    %s18 = ssub.s32 %s10, %s17
    %p19 = scmp.eq.s32.totalorder %s18, 0
    %s21 = sadd.s32 %s20, 1
    %s22 = scalar_select %p19, %s20, %s21
    %p25 = pneg %p19
    %p26 = scmp.eq.s32.totalorder %s10, 1
    %p27 = por %p25, %p26
    %p28 = scmp.ne.s32.totalorder %s20, %s23
    %p29 = scmp.eq.s32.totalorder %s10, 0
    %p30 = por %p28, %p29
    %p31 = scmp.ne.s32.totalorder %s20, %s23
    %p32 = scmp.eq.s32.totalorder %s15, 1
    %p33 = por %p31, %p32
    %p34 = scmp.ne.s32.totalorder %s23, %s24
    %p35 = scmp.eq.s32.totalorder %s15, 0
    %p36 = por %p34, %p35
    %p37 = scmp.ne.s32.totalorder %s23, %s24
    %p38 = scmp.eq.s32.totalorder %s16, 1
    %p39 = por %p37, %p38
    %p41 = scmp.ne.s32.totalorder %s24, %s40
    %p42 = scmp.eq.s32.totalorder %s16, 0
    %p43 = por %p41, %p42
    %s45 = sadd.s32 %s44, 1
    %p48 = scmp.eq.s32.totalorder %s10, 1
    %p49 = scmp.ne.s32.totalorder %s44, %s46
    %p50 = scmp.eq.s32.totalorder %s10, 0
    %p51 = por %p49, %p50
    %p52 = scmp.ne.s32.totalorder %s44, %s46
    %p53 = scmp.eq.s32.totalorder %s15, 1
    %p54 = por %p52, %p53
    %p55 = scmp.ne.s32.totalorder %s46, %s47
    %p56 = scmp.eq.s32.totalorder %s15, 0
    %p57 = por %p55, %p56
    %p58 = scmp.ne.s32.totalorder %s46, %s47
    %p59 = scmp.eq.s32.totalorder %s16, 1
    %p60 = por %p58, %p59
    %p62 = scmp.ne.s32.totalorder %s47, %s61
    %p63 = scmp.eq.s32.totalorder %s16, 0
    %p64 = por %p62, %p63
    %s65 = ssub.s32 %s10, %s17
    %p66 = scmp.eq.s32.totalorder %s65, 0
    %s68 = sadd.s32 %s67, 1
    %s69 = scalar_select %p66, %s67, %s68
    %p72 = pneg %p66
    %p73 = scmp.eq.s32.totalorder %s10, 1
    %p74 = por %p72, %p73
    %p75 = scmp.ne.s32.totalorder %s67, %s70
    %p76 = scmp.eq.s32.totalorder %s10, 0
    %p77 = por %p75, %p76
    %p78 = scmp.ne.s32.totalorder %s67, %s70
    %p79 = scmp.eq.s32.totalorder %s15, 1
    %p80 = por %p78, %p79
    %p81 = scmp.ne.s32.totalorder %s70, %s71
    %p82 = scmp.eq.s32.totalorder %s15, 0
    %p83 = por %p81, %p82
    %p84 = scmp.ne.s32.totalorder %s70, %s71
    %p85 = scmp.eq.s32.totalorder %s16, 1
    %p86 = por %p84, %p85
    %p88 = scmp.ne.s32.totalorder %s71, %s87
    %p89 = scmp.eq.s32.totalorder %s16, 0
    %p90 = por %p88, %p89
    %s91 = ssub.s32 %s10, %s17
    %p92 = scmp.eq.s32.totalorder %s91, 0
    %s94 = sadd.s32 %s93, 1
    %s95 = scalar_select %p92, %s93, %s94
    %p98 = pneg %p92
    %p99 = scmp.eq.s32.totalorder %s10, 1
    %p100 = por %p98, %p99
    %p101 = scmp.ne.s32.totalorder %s93, %s96
    %p102 = scmp.eq.s32.totalorder %s10, 0
    %p103 = por %p101, %p102
    %p104 = scmp.ne.s32.totalorder %s93, %s96
    %p105 = scmp.eq.s32.totalorder %s15, 1
    %p106 = por %p104, %p105
    %p107 = scmp.ne.s32.totalorder %s96, %s97
    %p108 = scmp.eq.s32.totalorder %s15, 0
    %p109 = por %p107, %p108
    %p110 = scmp.ne.s32.totalorder %s96, %s97
    %p111 = scmp.eq.s32.totalorder %s16, 1
    %p112 = por %p110, %p111
    %p114 = scmp.ne.s32.totalorder %s97, %s113
    %p115 = scmp.eq.s32.totalorder %s16, 0
    %p116 = por %p114, %p115
    %p117 = scmp.le.s32.totalorder 1, %s10
    %p118 = scmp.lt.s32.totalorder %s10, 3
    %p119 = pnand %p117, %p118
    %p120 = pneg %p119
    // Predicated region
    $region9: #{basic_block_forward.3} parent=5 // pred_check
      _
    $region10: #{basic_block_forward.3} parent=5 // pred_check_branch
      %122 = sbr.rel (%p119) target = $region12
    $region11: #{basic_block_forward.3} parent=5 // pred_region
      %s123 = ssub.s32 %s10, 1
      // Predicated region
      $region13: #{basic_block_forward.3} parent=11 // pred_check
        %p124 = pneg %p57
      $region14: #{basic_block_forward.3} parent=11 // pred_check_branch
        %126 = sbr.rel (%p124) target = $region16
      $region15: #{basic_block_forward.3} parent=11 // pred_region
        _
      $region16: #{basic_block_forward.3} parent=11 // pred_fallthru
        _
    $region12: #{basic_block_forward.3} parent=5 // pred_fallthru
      _
    %p127 = scmp.lt.s32.totalorder %s10, 2
    // Predicated region
    $region17: #{basic_block_forward.3} parent=5 // pred_check
      %p128 = pneg %p127
    $region18: #{basic_block_forward.3} parent=5 // pred_check_branch
      %130 = sbr.rel (%p128) target = $region20
    $region19: #{basic_block_forward.3} parent=5 // pred_region
      // Predicated region
      $region21: #{basic_block_forward.3} parent=19 // pred_check
        %p131 = pneg %p30
      $region22: #{basic_block_forward.3} parent=19 // pred_check_branch
        %133 = sbr.rel (%p131) target = $region24
      $region23: #{basic_block_forward.3} parent=19 // pred_region
        %s134 = smul.u32 4, %s10
        %p135 = scmp.lt.s32.totalorder %s134, 7
        %s136 = scalar_select %p135, %s134, 7
        %s137 = smul.addr %s136, 18
        %s138 = smul.addr %s137, 8
        %s139 = scalar_lea.vmem %s0, %s138
        %s140 = smul.u32 4, %s10
      $region24: #{basic_block_forward.3} parent=19 // pred_fallthru
        _
    $region20: #{basic_block_forward.3} parent=5 // pred_fallthru
      _
    %p141 = scmp.le.s32.totalorder 1, %s10
    %p142 = scmp.lt.s32.totalorder %s10, 3
    %p143 = pnand %p141, %p142
    %p144 = pneg %p143
    // Predicated region
    $region25: #{basic_block_forward.3} parent=5 // pred_check
      _
    $region26: #{basic_block_forward.3} parent=5 // pred_check_branch
      %146 = sbr.rel (%p143) target = $region28
    $region27: #{basic_block_forward.3} parent=5 // pred_region
      %s147 = ssub.s32 %s10, 1
      %s148 = smul.u32 4, %s15
      %p149 = scmp.lt.s32.totalorder %s148, 7
      %s150 = scalar_select %p149, %s148, 7
      %s151 = smul.addr %s150, 18
      %s152 = smul.addr %s151, 8
      %s153 = scalar_lea.vmem %s0, %s152
      %p154 = pneg %p36
      %p155 = pneg %p33
      %p156 = pneg %p57
      %p157 = pneg %p54
      %p158 = pneg %p83
      %p159 = pneg %p80
      %p160 = scmp.lt.s32.totalorder %s15, 1
      %s161 = scalar_select %p160, %s15, 1
      %s162 = smul.addr %s161, 8
      %s163 = smul.addr %s162, 8
      %s164 = scalar_lea.vmem %s2, %s163
      %p165 = pneg %p109
      %p166 = pneg %p106
      %p167 = scmp.lt.s32.totalorder %s15, 1
      %s168 = scalar_select %p167, %s15, 1
      %s169 = smul.addr %s168, 2
      %s170 = scalar_lea.vmem %s3, %s169
      %s171 = smul.u32 4, %s15
      %p172 = scmp.lt.s32.totalorder %s171, 7
      %s173 = scalar_select %p172, %s171, 7
      %s174 = smul.addr %s173, 18
      %s175 = smul.addr %s174, 8
      %s176 = scalar_lea.vmem %s0, %s175
      %s177 = smul.u32 4, %s15
      %p178 = scmp.lt.s32.totalorder %s15, 1
      %s179 = scalar_select %p178, %s15, 1
      %s180 = smul.addr %s179, 8
      %s181 = smul.addr %s180, 8
      %s182 = scalar_lea.vmem %s2, %s181
      %p183 = scmp.lt.s32.totalorder %s15, 1
      %s184 = scalar_select %p183, %s15, 1
      %s185 = smul.addr %s184, 2
      %s186 = scalar_lea.vmem %s3, %s185
      %v187 = vld [vmem:[%s176] sm:$0xff]
      %v188 = vld [vmem:[%s176 + $0x10] sm:$0xff]
      %v189 = vld [vmem:[%s176 + $0x20] sm:$0xff]
      %v190 = vld [vmem:[%s176 + $0x30] sm:$0xff]
      %v191 = vld [vmem:[%s176 + $0x40] sm:$0xff]
      %v192 = vld [vmem:[%s176 + $0x50] sm:$0xff]
      %v193 = vld [vmem:[%s176 + $0x60] sm:$0xff]
      %v194 = vld [vmem:[%s176 + $0x70] sm:$0xff]
      %v195 = vld [vmem:[%s1] sm:$0xff]
      %v196 = vld [vmem:[%s1 + $0x8] sm:$0xff]
      %v197 = vld [vmem:[%s1 + $0x10] sm:$0xff]
      %v198 = vld [vmem:[%s1 + $0x18] sm:$0xff]
      %v199 = vld [vmem:[%s1 + $0x20] sm:$0xff]
      %v200 = vld [vmem:[%s1 + $0x28] sm:$0xff]
      %v201 = vld [vmem:[%s1 + $0x30] sm:$0xff]
      %v202 = vld [vmem:[%s1 + $0x38] sm:$0xff]
      %v203 = vld [vmem:[%s1 + $0x40] sm:$0xff]
      %v204 = vld [vmem:[%s1 + $0x48] sm:$0xff]
      %v205 = vld [vmem:[%s1 + $0x50] sm:$0xff]
      %v206 = vld [vmem:[%s1 + $0x58] sm:$0xff]
      %v207 = vld [vmem:[%s1 + $0x60] sm:$0xff]
      %v208 = vld [vmem:[%s1 + $0x68] sm:$0xff]
      %v209 = vld [vmem:[%s1 + $0x70] sm:$0xff]
      %v210 = vld [vmem:[%s1 + $0x78] sm:$0xff]
      %s211 = scalar_lea.vmem %s176, 144
      %v212 = vld [vmem:[%s211] sm:$0xff]
      %v213 = vld [vmem:[%s211 + $0x10] sm:$0xff]
      %v214 = vld [vmem:[%s211 + $0x20] sm:$0xff]
      %v215 = vld [vmem:[%s211 + $0x30] sm:$0xff]
      %v216 = vld [vmem:[%s211 + $0x40] sm:$0xff]
      %v217 = vld [vmem:[%s211 + $0x50] sm:$0xff]
      %v218 = vld [vmem:[%s211 + $0x60] sm:$0xff]
      %v219 = vld [vmem:[%s211 + $0x70] sm:$0xff]
      %s220 = scalar_lea.vmem %s1, 128
      %v221 = vld [vmem:[%s220] sm:$0xff]
      %v222 = vld [vmem:[%s220 + $0x8] sm:$0xff]
      %v223 = vld [vmem:[%s220 + $0x10] sm:$0xff]
      %v224 = vld [vmem:[%s220 + $0x18] sm:$0xff]
      %v225 = vld [vmem:[%s220 + $0x20] sm:$0xff]
      %v226 = vld [vmem:[%s220 + $0x28] sm:$0xff]
      %v227 = vld [vmem:[%s220 + $0x30] sm:$0xff]
      %v228 = vld [vmem:[%s220 + $0x38] sm:$0xff]
      %v229 = vld [vmem:[%s220 + $0x40] sm:$0xff]
      %v230 = vld [vmem:[%s220 + $0x48] sm:$0xff]
      %v231 = vld [vmem:[%s220 + $0x50] sm:$0xff]
      %v232 = vld [vmem:[%s220 + $0x58] sm:$0xff]
      %v233 = vld [vmem:[%s220 + $0x60] sm:$0xff]
      %v234 = vld [vmem:[%s220 + $0x68] sm:$0xff]
      %v235 = vld [vmem:[%s220 + $0x70] sm:$0xff]
      %v236 = vld [vmem:[%s220 + $0x78] sm:$0xff]
      %237 = vmatprep.subr.mxu0 0.0
      %238 = vmatpush1.msra.mxu0 %v221
      %239 = vmatprep.subr.mxu0 0.0
      %240 = vmatpush1.msra.mxu0 %v222
      %241 = vmatprep.subr.mxu0 0.0
      %242 = vmatpush1.msra.mxu0 %v223
      %243 = vmatprep.subr.mxu0 0.0
      %244 = vmatpush1.msra.mxu0 %v224
      %245 = vmatprep.subr.mxu0 0.0
      %246 = vmatpush1.msra.mxu0 %v225
      %247 = vmatprep.subr.mxu0 0.0
      %248 = vmatpush1.msra.mxu0 %v226
      %249 = vmatprep.subr.mxu0 0.0
      %250 = vmatpush1.msra.mxu0 %v227
      %251 = vmatprep.subr.mxu0 0.0
      %252 = vmatpush1.msra.mxu0 %v228
      %253 = vmatprep.subr.mxu0 0.0
      %254 = vmatpush1.msra.mxu0 %v229
      %255 = vmatprep.subr.mxu0 0.0
      %256 = vmatpush1.msra.mxu0 %v230
      %257 = vmatprep.subr.mxu0 0.0
      %258 = vmatpush1.msra.mxu0 %v231
      %259 = vmatprep.subr.mxu0 0.0
      %260 = vmatpush1.msra.mxu0 %v232
      %261 = vmatprep.subr.mxu0 0.0
      %262 = vmatpush1.msra.mxu0 %v233
      %263 = vmatprep.subr.mxu0 0.0
      %264 = vmatpush1.msra.mxu0 %v234
      %265 = vmatprep.subr.mxu0 0.0
      %266 = vmatpush1.msra.mxu0 %v235
      %267 = vmatprep.subr.mxu0 0.0
      %268 = vmatpush1.msra.mxu0 %v236
      %269 = vmatprep.subr.mxu0 0.0
      %270 = vmatpush1.msra.mxu0 0.0
      %271 = vmatprep.subr.mxu0 0.0
      %272 = vmatpush1.msra.mxu0 0.0
      %273 = vmatprep.subr.mxu0 0.0
      %274 = vmatpush1.msra.mxu0 0.0
      %275 = vmatprep.subr.mxu0 0.0
      %276 = vmatpush1.msra.mxu0 0.0
      %277 = vmatprep.subr.mxu0 0.0
      %278 = vmatpush1.msra.mxu0 0.0
      %279 = vmatprep.subr.mxu0 0.0
      %280 = vmatpush1.msra.mxu0 0.0
      %281 = vmatprep.subr.mxu0 0.0
      %282 = vmatpush1.msra.mxu0 0.0
      %283 = vmatprep.subr.mxu0 0.0
      %284 = vmatpush1.msra.mxu0 0.0
      %285 = vmatprep.subr.mxu0 0.0
      %286 = vmatpush1.msra.mxu0 0.0
      %287 = vmatprep.subr.mxu0 0.0
      %288 = vmatpush1.msra.mxu0 0.0
      %289 = vmatprep.subr.mxu0 0.0
      %290 = vmatpush1.msra.mxu0 0.0
      %291 = vmatprep.subr.mxu0 0.0
      %292 = vmatpush1.msra.mxu0 0.0
      %293 = vmatprep.subr.mxu0 0.0
      %294 = vmatpush1.msra.mxu0 0.0
      %295 = vmatprep.subr.mxu0 0.0
      %296 = vmatpush1.msra.mxu0 0.0
      %297 = vmatprep.subr.mxu0 0.0
      %298 = vmatpush1.msra.mxu0 0.0
      %299 = vmatprep.subr.mxu0 0.0
      %300 = vmatpush1.msra.mxu0 0.0
      %301 = vmatprep.mubr.f32.mxu0 0.0
      %302 = vmatmul.mubr.f32.gmra.mrb[0].mxu0 %v212
      %v303 = vpop.f32.mrb[0].mxu0
      %v304 = vadd.f32 0.0, %v303
      %v305 = vpop.f32.mrb[0].mxu0
      %306 = vmatprep.mubr.f32.mxu0 0.0
      %307 = vmatmul.mubr.f32.gmra.mrb[0].mxu0 %v213
      %v308 = vpop.f32.mrb[0].mxu0
      %v309 = vadd.f32 0.0, %v308
      %v310 = vpop.f32.mrb[0].mxu0
      %311 = vmatprep.mubr.f32.mxu0 0.0
      %312 = vmatmul.mubr.f32.gmra.mrb[0].mxu0 %v214
      %v313 = vpop.f32.mrb[0].mxu0
      %v314 = vadd.f32 0.0, %v313
      %v315 = vpop.f32.mrb[0].mxu0
      %316 = vmatprep.mubr.f32.mxu0 0.0
      %317 = vmatmul.mubr.f32.gmra.mrb[0].mxu0 %v215
      %v318 = vpop.f32.mrb[0].mxu0
      %v319 = vadd.f32 0.0, %v318
      %v320 = vpop.f32.mrb[0].mxu0
      %321 = vmatprep.mubr.f32.mxu0 0.0
      %322 = vmatmul.mubr.f32.gmra.mrb[0].mxu0 %v216
      %v323 = vpop.f32.mrb[0].mxu0
      %v324 = vadd.f32 0.0, %v323
      %v325 = vpop.f32.mrb[0].mxu0
      %326 = vmatprep.mubr.f32.mxu0 0.0
      %327 = vmatmul.mubr.f32.gmra.mrb[0].mxu0 %v217
      %v328 = vpop.f32.mrb[0].mxu0
      %v329 = vadd.f32 0.0, %v328
      %v330 = vpop.f32.mrb[0].mxu0
      %331 = vmatprep.mubr.f32.mxu0 0.0
      %332 = vmatmul.mubr.f32.gmra.mrb[0].mxu0 %v218
      %v333 = vpop.f32.mrb[0].mxu0
      %v334 = vadd.f32 0.0, %v333
      %v335 = vpop.f32.mrb[0].mxu0
      %336 = vmatprep.mubr.f32.mxu0 0.0
      %337 = vmatmul.mubr.f32.gmra.mrb[0].mxu0 %v219
      %v338 = vpop.f32.mrb[0].mxu0
      %v339 = vadd.f32 0.0, %v338
      %v340 = vpop.f32.mrb[0].mxu0
      %341 = vdwg.mxu0
      %342 = vmatprep.subr.mxu0 0.0
      %343 = vmatpush1.msra.mxu0 %v195
      %344 = vmatprep.subr.mxu0 0.0
      %345 = vmatpush1.msra.mxu0 %v196
      %346 = vmatprep.subr.mxu0 0.0
      %347 = vmatpush1.msra.mxu0 %v197
      %348 = vmatprep.subr.mxu0 0.0
      %349 = vmatpush1.msra.mxu0 %v198
      %350 = vmatprep.subr.mxu0 0.0
      %351 = vmatpush1.msra.mxu0 %v199
      %352 = vmatprep.subr.mxu0 0.0
      %353 = vmatpush1.msra.mxu0 %v200
      %354 = vmatprep.subr.mxu0 0.0
      %355 = vmatpush1.msra.mxu0 %v201
      %356 = vmatprep.subr.mxu0 0.0
      %357 = vmatpush1.msra.mxu0 %v202
      %358 = vmatprep.subr.mxu0 0.0
      %359 = vmatpush1.msra.mxu0 %v203
      %360 = vmatprep.subr.mxu0 0.0
      %361 = vmatpush1.msra.mxu0 %v204
      %362 = vmatprep.subr.mxu0 0.0
      %363 = vmatpush1.msra.mxu0 %v205
      %364 = vmatprep.subr.mxu0 0.0
      %365 = vmatpush1.msra.mxu0 %v206
      %366 = vmatprep.subr.mxu0 0.0
      %367 = vmatpush1.msra.mxu0 %v207
      %368 = vmatprep.subr.mxu0 0.0
      %369 = vmatpush1.msra.mxu0 %v208
      %370 = vmatprep.subr.mxu0 0.0
      %371 = vmatpush1.msra.mxu0 %v209
      %372 = vmatprep.subr.mxu0 0.0
      %373 = vmatpush1.msra.mxu0 %v210
      %374 = vmatprep.subr.mxu0 0.0
      %375 = vmatpush1.msra.mxu0 0.0
      %376 = vmatprep.subr.mxu0 0.0
      %377 = vmatpush1.msra.mxu0 0.0
      %378 = vmatprep.subr.mxu0 0.0
      %379 = vmatpush1.msra.mxu0 0.0
      %380 = vmatprep.subr.mxu0 0.0
      %381 = vmatpush1.msra.mxu0 0.0
      %382 = vmatprep.subr.mxu0 0.0
      %383 = vmatpush1.msra.mxu0 0.0
      %384 = vmatprep.subr.mxu0 0.0
      %385 = vmatpush1.msra.mxu0 0.0
      %386 = vmatprep.subr.mxu0 0.0
      %387 = vmatpush1.msra.mxu0 0.0
      %388 = vmatprep.subr.mxu0 0.0
      %389 = vmatpush1.msra.mxu0 0.0
      %390 = vmatprep.subr.mxu0 0.0
      %391 = vmatpush1.msra.mxu0 0.0
      %392 = vmatprep.subr.mxu0 0.0
      %393 = vmatpush1.msra.mxu0 0.0
      %394 = vmatprep.subr.mxu0 0.0
      %395 = vmatpush1.msra.mxu0 0.0
      %396 = vmatprep.subr.mxu0 0.0
      %397 = vmatpush1.msra.mxu0 0.0
      %398 = vmatprep.subr.mxu0 0.0
      %399 = vmatpush1.msra.mxu0 0.0
      %400 = vmatprep.subr.mxu0 0.0
      %401 = vmatpush1.msra.mxu0 0.0
      %402 = vmatprep.subr.mxu0 0.0
      %403 = vmatpush1.msra.mxu0 0.0
      %404 = vmatprep.subr.mxu0 0.0
      %405 = vmatpush1.msra.mxu0 0.0
      %406 = vmatprep.mubr.f32.mxu0 0.0
      %407 = vmatmul.mubr.f32.gmra.mrb[0].mxu0 %v187
      %v408 = vpop.f32.mrb[0].mxu0
      %v409 = vadd.f32 %v304, %v408
      %v410 = vpop.f32.mrb[0].mxu0
      %411 = vmatprep.mubr.f32.mxu0 0.0
      %412 = vmatmul.mubr.f32.gmra.mrb[0].mxu0 %v188
      %v413 = vpop.f32.mrb[0].mxu0
      %v414 = vadd.f32 %v309, %v413
      %v415 = vpop.f32.mrb[0].mxu0
      %416 = vmatprep.mubr.f32.mxu0 0.0
      %417 = vmatmul.mubr.f32.gmra.mrb[0].mxu0 %v189
      %v418 = vpop.f32.mrb[0].mxu0
      %v419 = vadd.f32 %v314, %v418
      %v420 = vpop.f32.mrb[0].mxu0
      %421 = vmatprep.mubr.f32.mxu0 0.0
      %422 = vmatmul.mubr.f32.gmra.mrb[0].mxu0 %v190
      %v423 = vpop.f32.mrb[0].mxu0
      %v424 = vadd.f32 %v319, %v423
      %v425 = vpop.f32.mrb[0].mxu0
      %426 = vmatprep.mubr.f32.mxu0 0.0
      %427 = vmatmul.mubr.f32.gmra.mrb[0].mxu0 %v191
      %v428 = vpop.f32.mrb[0].mxu0
      %v429 = vadd.f32 %v324, %v428
      %v430 = vpop.f32.mrb[0].mxu0
      %431 = vmatprep.mubr.f32.mxu0 0.0
      %432 = vmatmul.mubr.f32.gmra.mrb[0].mxu0 %v192
      %v433 = vpop.f32.mrb[0].mxu0
      %v434 = vadd.f32 %v329, %v433
      %v435 = vpop.f32.mrb[0].mxu0
      %436 = vmatprep.mubr.f32.mxu0 0.0
      %437 = vmatmul.mubr.f32.gmra.mrb[0].mxu0 %v193
      %v438 = vpop.f32.mrb[0].mxu0
      %v439 = vadd.f32 %v334, %v438
      %v440 = vpop.f32.mrb[0].mxu0
      %441 = vmatprep.mubr.f32.mxu0 0.0
      %442 = vmatmul.mubr.f32.gmra.mrb[0].mxu0 %v194
      %v443 = vpop.f32.mrb[0].mxu0
      %v444 = vadd.f32 %v339, %v443
      %v445 = vpop.f32.mrb[0].mxu0
      %446 = vdwg.mxu0
      %v447 = vld [vmem:[%s176 + $0x1] sm:$0xff]
      %v448 = vld [vmem:[%s176 + $0x11] sm:$0xff]
      %v449 = vld [vmem:[%s176 + $0x21] sm:$0xff]
      %v450 = vld [vmem:[%s176 + $0x31] sm:$0xff]
      %v451 = vld [vmem:[%s176 + $0x41] sm:$0xff]
      %v452 = vld [vmem:[%s176 + $0x51] sm:$0xff]
      %v453 = vld [vmem:[%s176 + $0x61] sm:$0xff]
      %v454 = vld [vmem:[%s176 + $0x71] sm:$0xff]
      %s455 = scalar_lea.vmem %s1, 256
      %v456 = vld [vmem:[%s455] sm:$0xff]
      %v457 = vld [vmem:[%s455 + $0x8] sm:$0xff]
      %v458 = vld [vmem:[%s455 + $0x10] sm:$0xff]
      %v459 = vld [vmem:[%s455 + $0x18] sm:$0xff]
      %v460 = vld [vmem:[%s455 + $0x20] sm:$0xff]
      %v461 = vld [vmem:[%s455 + $0x28] sm:$0xff]
      %v462 = vld [vmem:[%s455 + $0x30] sm:$0xff]
      %v463 = vld [vmem:[%s455 + $0x38] sm:$0xff]
      %v464 = vld [vmem:[%s455 + $0x40] sm:$0xff]
      %v465 = vld [vmem:[%s455 + $0x48] sm:$0xff]
      %v466 = vld [vmem:[%s455 + $0x50] sm:$0xff]
      %v467 = vld [vmem:[%s455 + $0x58] sm:$0xff]
      %v468 = vld [vmem:[%s455 + $0x60] sm:$0xff]
      %v469 = vld [vmem:[%s455 + $0x68] sm:$0xff]
      %v470 = vld [vmem:[%s455 + $0x70] sm:$0xff]
      %v471 = vld [vmem:[%s455 + $0x78] sm:$0xff]
      %472 = vmatprep.subr.mxu0 0.0
      %473 = vmatpush1.msra.mxu0 %v456
      %474 = vmatprep.subr.mxu0 0.0
      %475 = vmatpush1.msra.mxu0 %v457
      %476 = vmatprep.subr.mxu0 0.0
      %477 = vmatpush1.msra.mxu0 %v458
      %478 = vmatprep.subr.mxu0 0.0
      %479 = vmatpush1.msra.mxu0 %v459
      %480 = vmatprep.subr.mxu0 0.0
      %481 = vmatpush1.msra.mxu0 %v460
      %482 = vmatprep.subr.mxu0 0.0
      %483 = vmatpush1.msra.mxu0 %v461
      %484 = vmatprep.subr.mxu0 0.0
      %485 = vmatpush1.msra.mxu0 %v462
      %486 = vmatprep.subr.mxu0 0.0
      %487 = vmatpush1.msra.mxu0 %v463
      %488 = vmatprep.subr.mxu0 0.0
      %489 = vmatpush1.msra.mxu0 %v464
      %490 = vmatprep.subr.mxu0 0.0
      %491 = vmatpush1.msra.mxu0 %v465
      %492 = vmatprep.subr.mxu0 0.0
      %493 = vmatpush1.msra.mxu0 %v466
      %494 = vmatprep.subr.mxu0 0.0
      %495 = vmatpush1.msra.mxu0 %v467
      %496 = vmatprep.subr.mxu0 0.0
      %497 = vmatpush1.msra.mxu0 %v468
      %498 = vmatprep.subr.mxu0 0.0
      %499 = vmatpush1.msra.mxu0 %v469
      %500 = vmatprep.subr.mxu0 0.0
      %501 = vmatpush1.msra.mxu0 %v470
      %502 = vmatprep.subr.mxu0 0.0
      %503 = vmatpush1.msra.mxu0 %v471
      %504 = vmatprep.subr.mxu0 0.0
      %505 = vmatpush1.msra.mxu0 0.0
      %506 = vmatprep.subr.mxu0 0.0
      %507 = vmatpush1.msra.mxu0 0.0
      %508 = vmatprep.subr.mxu0 0.0
      %509 = vmatpush1.msra.mxu0 0.0
      %510 = vmatprep.subr.mxu0 0.0
      %511 = vmatpush1.msra.mxu0 0.0
      %512 = vmatprep.subr.mxu0 0.0
      %513 = vmatpush1.msra.mxu0 0.0
      %514 = vmatprep.subr.mxu0 0.0
      %515 = vmatpush1.msra.mxu0 0.0
      %516 = vmatprep.subr.mxu0 0.0
      %517 = vmatpush1.msra.mxu0 0.0
      %518 = vmatprep.subr.mxu0 0.0
      %519 = vmatpush1.msra.mxu0 0.0
      %520 = vmatprep.subr.mxu0 0.0
      %521 = vmatpush1.msra.mxu0 0.0
      %522 = vmatprep.subr.mxu0 0.0
      %523 = vmatpush1.msra.mxu0 0.0
      %524 = vmatprep.subr.mxu0 0.0
      %525 = vmatpush1.msra.mxu0 0.0
      %526 = vmatprep.subr.mxu0 0.0
      %527 = vmatpush1.msra.mxu0 0.0
      %528 = vmatprep.subr.mxu0 0.0
      %529 = vmatpush1.msra.mxu0 0.0
      %530 = vmatprep.subr.mxu0 0.0
      %531 = vmatpush1.msra.mxu0 0.0
      %532 = vmatprep.subr.mxu0 0.0
      %533 = vmatpush1.msra.mxu0 0.0
      %534 = vmatprep.subr.mxu0 0.0
      %535 = vmatpush1.msra.mxu0 0.0
      %536 = vmatprep.mubr.f32.mxu0 0.0
      %537 = vmatmul.mubr.f32.gmra.mrb[0].mxu0 %v447
      %v538 = vpop.f32.mrb[0].mxu0
      %v539 = vadd.f32 0.0, %v538
      %v540 = vpop.f32.mrb[0].mxu0
      %541 = vmatprep.mubr.f32.mxu0 0.0
      %542 = vmatmul.mubr.f32.gmra.mrb[0].mxu0 %v448
      %v543 = vpop.f32.mrb[0].mxu0
      %v544 = vadd.f32 0.0, %v543
      %v545 = vpop.f32.mrb[0].mxu0
      %546 = vmatprep.mubr.f32.mxu0 0.0
      %547 = vmatmul.mubr.f32.gmra.mrb[0].mxu0 %v449
      %v548 = vpop.f32.mrb[0].mxu0
      %v549 = vadd.f32 0.0, %v548
      %v550 = vpop.f32.mrb[0].mxu0
      %551 = vmatprep.mubr.f32.mxu0 0.0
      %552 = vmatmul.mubr.f32.gmra.mrb[0].mxu0 %v450
      %v553 = vpop.f32.mrb[0].mxu0
      %v554 = vadd.f32 0.0, %v553
      %v555 = vpop.f32.mrb[0].mxu0
      %556 = vmatprep.mubr.f32.mxu0 0.0
      %557 = vmatmul.mubr.f32.gmra.mrb[0].mxu0 %v451
      %v558 = vpop.f32.mrb[0].mxu0
      %v559 = vadd.f32 0.0, %v558
      %v560 = vpop.f32.mrb[0].mxu0
      %561 = vmatprep.mubr.f32.mxu0 0.0
      %562 = vmatmul.mubr.f32.gmra.mrb[0].mxu0 %v452
      %v563 = vpop.f32.mrb[0].mxu0
      %v564 = vadd.f32 0.0, %v563
      %v565 = vpop.f32.mrb[0].mxu0
      %566 = vmatprep.mubr.f32.mxu0 0.0
      %567 = vmatmul.mubr.f32.gmra.mrb[0].mxu0 %v453
      %v568 = vpop.f32.mrb[0].mxu0
      %v569 = vadd.f32 0.0, %v568
      %v570 = vpop.f32.mrb[0].mxu0
      %571 = vmatprep.mubr.f32.mxu0 0.0
      %572 = vmatmul.mubr.f32.gmra.mrb[0].mxu0 %v454
      %v573 = vpop.f32.mrb[0].mxu0
      %v574 = vadd.f32 0.0, %v573
      %v575 = vpop.f32.mrb[0].mxu0
      %576 = vdwg.mxu0
      %v577 = vadd.f32 %v409, %v539
      %v578 = vadd.f32 %v414, %v544
      %v579 = vadd.f32 %v419, %v549
      %v580 = vadd.f32 %v424, %v554
      %v581 = vadd.f32 %v429, %v559
      %v582 = vadd.f32 %v434, %v564
      %v583 = vadd.f32 %v439, %v569
      %v584 = vadd.f32 %v444, %v574
      %s585 = scalar_lea.vmem %s176, 288
      %v586 = vld [vmem:[%s585] sm:$0xff]
      %v587 = vld [vmem:[%s585 + $0x10] sm:$0xff]
      %v588 = vld [vmem:[%s585 + $0x20] sm:$0xff]
      %v589 = vld [vmem:[%s585 + $0x30] sm:$0xff]
      %v590 = vld [vmem:[%s585 + $0x40] sm:$0xff]
      %v591 = vld [vmem:[%s585 + $0x50] sm:$0xff]
      %v592 = vld [vmem:[%s585 + $0x60] sm:$0xff]
      %v593 = vld [vmem:[%s585 + $0x70] sm:$0xff]
      %s594 = scalar_lea.vmem %s1, 384
      %v595 = vld [vmem:[%s594] sm:$0xff]
      %v596 = vld [vmem:[%s594 + $0x8] sm:$0xff]
      %v597 = vld [vmem:[%s594 + $0x10] sm:$0xff]
      %v598 = vld [vmem:[%s594 + $0x18] sm:$0xff]
      %v599 = vld [vmem:[%s594 + $0x20] sm:$0xff]
      %v600 = vld [vmem:[%s594 + $0x28] sm:$0xff]
      %v601 = vld [vmem:[%s594 + $0x30] sm:$0xff]
      %v602 = vld [vmem:[%s594 + $0x38] sm:$0xff]
      %v603 = vld [vmem:[%s594 + $0x40] sm:$0xff]
      %v604 = vld [vmem:[%s594 + $0x48] sm:$0xff]
      %v605 = vld [vmem:[%s594 + $0x50] sm:$0xff]
      %v606 = vld [vmem:[%s594 + $0x58] sm:$0xff]
      %v607 = vld [vmem:[%s594 + $0x60] sm:$0xff]
      %v608 = vld [vmem:[%s594 + $0x68] sm:$0xff]
      %v609 = vld [vmem:[%s594 + $0x70] sm:$0xff]
      %v610 = vld [vmem:[%s594 + $0x78] sm:$0xff]
      %611 = vmatprep.subr.mxu0 0.0
      %612 = vmatpush1.msra.mxu0 %v595
      %613 = vmatprep.subr.mxu0 0.0
      %614 = vmatpush1.msra.mxu0 %v596
      %615 = vmatprep.subr.mxu0 0.0
      %616 = vmatpush1.msra.mxu0 %v597
      %617 = vmatprep.subr.mxu0 0.0
      %618 = vmatpush1.msra.mxu0 %v598
      %619 = vmatprep.subr.mxu0 0.0
      %620 = vmatpush1.msra.mxu0 %v599
      %621 = vmatprep.subr.mxu0 0.0
      %622 = vmatpush1.msra.mxu0 %v600
      %623 = vmatprep.subr.mxu0 0.0
      %624 = vmatpush1.msra.mxu0 %v601
      %625 = vmatprep.subr.mxu0 0.0
      %626 = vmatpush1.msra.mxu0 %v602
      %627 = vmatprep.subr.mxu0 0.0
      %628 = vmatpush1.msra.mxu0 %v603
      %629 = vmatprep.subr.mxu0 0.0
      %630 = vmatpush1.msra.mxu0 %v604
      %631 = vmatprep.subr.mxu0 0.0
      %632 = vmatpush1.msra.mxu0 %v605
      %633 = vmatprep.subr.mxu0 0.0
      %634 = vmatpush1.msra.mxu0 %v606
      %635 = vmatprep.subr.mxu0 0.0
      %636 = vmatpush1.msra.mxu0 %v607
      %637 = vmatprep.subr.mxu0 0.0
      %638 = vmatpush1.msra.mxu0 %v608
      %639 = vmatprep.subr.mxu0 0.0
      %640 = vmatpush1.msra.mxu0 %v609
      %641 = vmatprep.subr.mxu0 0.0
      %642 = vmatpush1.msra.mxu0 %v610
      %643 = vmatprep.subr.mxu0 0.0
      %644 = vmatpush1.msra.mxu0 0.0
      %645 = vmatprep.subr.mxu0 0.0
      %646 = vmatpush1.msra.mxu0 0.0
      %647 = vmatprep.subr.mxu0 0.0
      %648 = vmatpush1.msra.mxu0 0.0
      %649 = vmatprep.subr.mxu0 0.0
      %650 = vmatpush1.msra.mxu0 0.0
      %651 = vmatprep.subr.mxu0 0.0
      %652 = vmatpush1.msra.mxu0 0.0
      %653 = vmatprep.subr.mxu0 0.0
      %654 = vmatpush1.msra.mxu0 0.0
      %655 = vmatprep.subr.mxu0 0.0
      %656 = vmatpush1.msra.mxu0 0.0
      %657 = vmatprep.subr.mxu0 0.0
      %658 = vmatpush1.msra.mxu0 0.0
      %659 = vmatprep.subr.mxu0 0.0
      %660 = vmatpush1.msra.mxu0 0.0
      %661 = vmatprep.subr.mxu0 0.0
      %662 = vmatpush1.msra.mxu0 0.0
      %663 = vmatprep.subr.mxu0 0.0
      %664 = vmatpush1.msra.mxu0 0.0
      %665 = vmatprep.subr.mxu0 0.0
      %666 = vmatpush1.msra.mxu0 0.0
      %667 = vmatprep.subr.mxu0 0.0
      %668 = vmatpush1.msra.mxu0 0.0
      %669 = vmatprep.subr.mxu0 0.0
      %670 = vmatpush1.msra.mxu0 0.0
      %671 = vmatprep.subr.mxu0 0.0
      %672 = vmatpush1.msra.mxu0 0.0
      %673 = vmatprep.subr.mxu0 0.0
      %674 = vmatpush1.msra.mxu0 0.0
      %675 = vmatprep.mubr.f32.mxu0 0.0
      %676 = vmatmul.mubr.f32.gmra.mrb[0].mxu0 %v586
      %v677 = vpop.f32.mrb[0].mxu0
      %v678 = vadd.f32 0.0, %v677
      %v679 = vpop.f32.mrb[0].mxu0
      %680 = vmatprep.mubr.f32.mxu0 0.0
      %681 = vmatmul.mubr.f32.gmra.mrb[0].mxu0 %v587
      %v682 = vpop.f32.mrb[0].mxu0
      %v683 = vadd.f32 0.0, %v682
      %v684 = vpop.f32.mrb[0].mxu0
      %685 = vmatprep.mubr.f32.mxu0 0.0
      %686 = vmatmul.mubr.f32.gmra.mrb[0].mxu0 %v588
      %v687 = vpop.f32.mrb[0].mxu0
      %v688 = vadd.f32 0.0, %v687
      %v689 = vpop.f32.mrb[0].mxu0
      %690 = vmatprep.mubr.f32.mxu0 0.0
      %691 = vmatmul.mubr.f32.gmra.mrb[0].mxu0 %v589
      %v692 = vpop.f32.mrb[0].mxu0
      %v693 = vadd.f32 0.0, %v692
      %v694 = vpop.f32.mrb[0].mxu0
      %695 = vmatprep.mubr.f32.mxu0 0.0
      %696 = vmatmul.mubr.f32.gmra.mrb[0].mxu0 %v590
      %v697 = vpop.f32.mrb[0].mxu0
      %v698 = vadd.f32 0.0, %v697
      %v699 = vpop.f32.mrb[0].mxu0
      %700 = vmatprep.mubr.f32.mxu0 0.0
      %701 = vmatmul.mubr.f32.gmra.mrb[0].mxu0 %v591
      %v702 = vpop.f32.mrb[0].mxu0
      %v703 = vadd.f32 0.0, %v702
      %v704 = vpop.f32.mrb[0].mxu0
      %705 = vmatprep.mubr.f32.mxu0 0.0
      %706 = vmatmul.mubr.f32.gmra.mrb[0].mxu0 %v592
      %v707 = vpop.f32.mrb[0].mxu0
      %v708 = vadd.f32 0.0, %v707
      %v709 = vpop.f32.mrb[0].mxu0
      %710 = vmatprep.mubr.f32.mxu0 0.0
      %711 = vmatmul.mubr.f32.gmra.mrb[0].mxu0 %v593
      %v712 = vpop.f32.mrb[0].mxu0
      %v713 = vadd.f32 0.0, %v712
      %v714 = vpop.f32.mrb[0].mxu0
      %715 = vdwg.mxu0
      %v716 = vadd.f32 %v577, %v678
      %v717 = vadd.f32 %v578, %v683
      %v718 = vadd.f32 %v579, %v688
      %v719 = vadd.f32 %v580, %v693
      %v720 = vadd.f32 %v581, %v698
      %v721 = vadd.f32 %v582, %v703
      %v722 = vadd.f32 %v583, %v708
      %v723 = vadd.f32 %v584, %v713
      %s724 = scalar_lea.vmem %s176, 432
      %v725 = vld [vmem:[%s724] sm:$0xff]
      %v726 = vld [vmem:[%s724 + $0x10] sm:$0xff]
      %v727 = vld [vmem:[%s724 + $0x20] sm:$0xff]
      %v728 = vld [vmem:[%s724 + $0x30] sm:$0xff]
      %v729 = vld [vmem:[%s724 + $0x40] sm:$0xff]
      %v730 = vld [vmem:[%s724 + $0x50] sm:$0xff]
      %v731 = vld [vmem:[%s724 + $0x60] sm:$0xff]
      %v732 = vld [vmem:[%s724 + $0x70] sm:$0xff]
      %s733 = scalar_lea.vmem %s1, 512
      %v734 = vld [vmem:[%s733] sm:$0xff]
      %v735 = vld [vmem:[%s733 + $0x8] sm:$0xff]
      %v736 = vld [vmem:[%s733 + $0x10] sm:$0xff]
      %v737 = vld [vmem:[%s733 + $0x18] sm:$0xff]
      %v738 = vld [vmem:[%s733 + $0x20] sm:$0xff]
      %v739 = vld [vmem:[%s733 + $0x28] sm:$0xff]
      %v740 = vld [vmem:[%s733 + $0x30] sm:$0xff]
      %v741 = vld [vmem:[%s733 + $0x38] sm:$0xff]
      %v742 = vld [vmem:[%s733 + $0x40] sm:$0xff]
      %v743 = vld [vmem:[%s733 + $0x48] sm:$0xff]
      %v744 = vld [vmem:[%s733 + $0x50] sm:$0xff]
      %v745 = vld [vmem:[%s733 + $0x58] sm:$0xff]
      %v746 = vld [vmem:[%s733 + $0x60] sm:$0xff]
      %v747 = vld [vmem:[%s733 + $0x68] sm:$0xff]
      %v748 = vld [vmem:[%s733 + $0x70] sm:$0xff]
      %v749 = vld [vmem:[%s733 + $0x78] sm:$0xff]
      %750 = vmatprep.subr.mxu0 0.0
      %751 = vmatpush1.msra.mxu0 %v734
      %752 = vmatprep.subr.mxu0 0.0
      %753 = vmatpush1.msra.mxu0 %v735
      %754 = vmatprep.subr.mxu0 0.0
      %755 = vmatpush1.msra.mxu0 %v736
      %756 = vmatprep.subr.mxu0 0.0
      %757 = vmatpush1.msra.mxu0 %v737
      %758 = vmatprep.subr.mxu0 0.0
      %759 = vmatpush1.msra.mxu0 %v738
      %760 = vmatprep.subr.mxu0 0.0
      %761 = vmatpush1.msra.mxu0 %v739
      %762 = vmatprep.subr.mxu0 0.0
      %763 = vmatpush1.msra.mxu0 %v740
      %764 = vmatprep.subr.mxu0 0.0
      %765 = vmatpush1.msra.mxu0 %v741
      %766 = vmatprep.subr.mxu0 0.0
      %767 = vmatpush1.msra.mxu0 %v742
      %768 = vmatprep.subr.mxu0 0.0
      %769 = vmatpush1.msra.mxu0 %v743
      %770 = vmatprep.subr.mxu0 0.0
      %771 = vmatpush1.msra.mxu0 %v744
      %772 = vmatprep.subr.mxu0 0.0
      %773 = vmatpush1.msra.mxu0 %v745
      %774 = vmatprep.subr.mxu0 0.0
      %775 = vmatpush1.msra.mxu0 %v746
      %776 = vmatprep.subr.mxu0 0.0
      %777 = vmatpush1.msra.mxu0 %v747
      %778 = vmatprep.subr.mxu0 0.0
      %779 = vmatpush1.msra.mxu0 %v748
      %780 = vmatprep.subr.mxu0 0.0
      %781 = vmatpush1.msra.mxu0 %v749
      %782 = vmatprep.subr.mxu0 0.0
      %783 = vmatpush1.msra.mxu0 0.0
      %784 = vmatprep.subr.mxu0 0.0
      %785 = vmatpush1.msra.mxu0 0.0
      %786 = vmatprep.subr.mxu0 0.0
      %787 = vmatpush1.msra.mxu0 0.0
      %788 = vmatprep.subr.mxu0 0.0
      %789 = vmatpush1.msra.mxu0 0.0
      %790 = vmatprep.subr.mxu0 0.0
      %791 = vmatpush1.msra.mxu0 0.0
      %792 = vmatprep.subr.mxu0 0.0
      %793 = vmatpush1.msra.mxu0 0.0
      %794 = vmatprep.subr.mxu0 0.0
      %795 = vmatpush1.msra.mxu0 0.0
      %796 = vmatprep.subr.mxu0 0.0
      %797 = vmatpush1.msra.mxu0 0.0
      %798 = vmatprep.subr.mxu0 0.0
      %799 = vmatpush1.msra.mxu0 0.0
      %800 = vmatprep.subr.mxu0 0.0
      %801 = vmatpush1.msra.mxu0 0.0
      %802 = vmatprep.subr.mxu0 0.0
      %803 = vmatpush1.msra.mxu0 0.0
      %804 = vmatprep.subr.mxu0 0.0
      %805 = vmatpush1.msra.mxu0 0.0
      %806 = vmatprep.subr.mxu0 0.0
      %807 = vmatpush1.msra.mxu0 0.0
      %808 = vmatprep.subr.mxu0 0.0
      %809 = vmatpush1.msra.mxu0 0.0
      %810 = vmatprep.subr.mxu0 0.0
      %811 = vmatpush1.msra.mxu0 0.0
      %812 = vmatprep.subr.mxu0 0.0
      %813 = vmatpush1.msra.mxu0 0.0
      %814 = vmatprep.mubr.f32.mxu0 0.0
      %815 = vmatmul.mubr.f32.gmra.mrb[0].mxu0 %v725
      %v816 = vpop.f32.mrb[0].mxu0
      %v817 = vadd.f32 0.0, %v816
      %v818 = vpop.f32.mrb[0].mxu0
      %819 = vmatprep.mubr.f32.mxu0 0.0
      %820 = vmatmul.mubr.f32.gmra.mrb[0].mxu0 %v726
      %v821 = vpop.f32.mrb[0].mxu0
      %v822 = vadd.f32 0.0, %v821
      %v823 = vpop.f32.mrb[0].mxu0
      %824 = vmatprep.mubr.f32.mxu0 0.0
      %825 = vmatmul.mubr.f32.gmra.mrb[0].mxu0 %v727
      %v826 = vpop.f32.mrb[0].mxu0
      %v827 = vadd.f32 0.0, %v826
      %v828 = vpop.f32.mrb[0].mxu0
      %829 = vmatprep.mubr.f32.mxu0 0.0
      %830 = vmatmul.mubr.f32.gmra.mrb[0].mxu0 %v728
      %v831 = vpop.f32.mrb[0].mxu0
      %v832 = vadd.f32 0.0, %v831
      %v833 = vpop.f32.mrb[0].mxu0
      %834 = vmatprep.mubr.f32.mxu0 0.0
      %835 = vmatmul.mubr.f32.gmra.mrb[0].mxu0 %v729
      %v836 = vpop.f32.mrb[0].mxu0
      %v837 = vadd.f32 0.0, %v836
      %v838 = vpop.f32.mrb[0].mxu0
      %839 = vmatprep.mubr.f32.mxu0 0.0
      %840 = vmatmul.mubr.f32.gmra.mrb[0].mxu0 %v730
      %v841 = vpop.f32.mrb[0].mxu0
      %v842 = vadd.f32 0.0, %v841
      %v843 = vpop.f32.mrb[0].mxu0
      %844 = vmatprep.mubr.f32.mxu0 0.0
      %845 = vmatmul.mubr.f32.gmra.mrb[0].mxu0 %v731
      %v846 = vpop.f32.mrb[0].mxu0
      %v847 = vadd.f32 0.0, %v846
      %v848 = vpop.f32.mrb[0].mxu0
      %849 = vmatprep.mubr.f32.mxu0 0.0
      %850 = vmatmul.mubr.f32.gmra.mrb[0].mxu0 %v732
      %v851 = vpop.f32.mrb[0].mxu0
      %v852 = vadd.f32 0.0, %v851
      %v853 = vpop.f32.mrb[0].mxu0
      %854 = vdwg.mxu0
      %v855 = vadd.f32 %v716, %v817
      %v856 = vadd.f32 %v717, %v822
      %v857 = vadd.f32 %v718, %v827
      %v858 = vadd.f32 %v719, %v832
      %v859 = vadd.f32 %v720, %v837
      %v860 = vadd.f32 %v721, %v842
      %v861 = vadd.f32 %v722, %v847
      %v862 = vadd.f32 %v723, %v852
      %v863 = vld [vmem:[%s585 + $0x1] sm:$0xff]
      %v864 = vld [vmem:[%s585 + $0x11] sm:$0xff]
      %v865 = vld [vmem:[%s585 + $0x21] sm:$0xff]
      %v866 = vld [vmem:[%s585 + $0x31] sm:$0xff]
      %v867 = vld [vmem:[%s585 + $0x41] sm:$0xff]
      %v868 = vld [vmem:[%s585 + $0x51] sm:$0xff]
      %v869 = vld [vmem:[%s585 + $0x61] sm:$0xff]
      %v870 = vld [vmem:[%s585 + $0x71] sm:$0xff]
      %s871 = scalar_lea.vmem %s1, 640
      %v872 = vld [vmem:[%s871] sm:$0xff]
      %v873 = vld [vmem:[%s871 + $0x8] sm:$0xff]
      %v874 = vld [vmem:[%s871 + $0x10] sm:$0xff]
      %v875 = vld [vmem:[%s871 + $0x18] sm:$0xff]
      %v876 = vld [vmem:[%s871 + $0x20] sm:$0xff]
      %v877 = vld [vmem:[%s871 + $0x28] sm:$0xff]
      %v878 = vld [vmem:[%s871 + $0x30] sm:$0xff]
      %v879 = vld [vmem:[%s871 + $0x38] sm:$0xff]
      %v880 = vld [vmem:[%s871 + $0x40] sm:$0xff]
      %v881 = vld [vmem:[%s871 + $0x48] sm:$0xff]
      %v882 = vld [vmem:[%s871 + $0x50] sm:$0xff]
      %v883 = vld [vmem:[%s871 + $0x58] sm:$0xff]
      %v884 = vld [vmem:[%s871 + $0x60] sm:$0xff]
      %v885 = vld [vmem:[%s871 + $0x68] sm:$0xff]
      %v886 = vld [vmem:[%s871 + $0x70] sm:$0xff]
      %v887 = vld [vmem:[%s871 + $0x78] sm:$0xff]
      %888 = vmatprep.subr.mxu0 0.0
      %889 = vmatpush1.msra.mxu0 %v872
      %890 = vmatprep.subr.mxu0 0.0
      %891 = vmatpush1.msra.mxu0 %v873
      %892 = vmatprep.subr.mxu0 0.0
      %893 = vmatpush1.msra.mxu0 %v874
      %894 = vmatprep.subr.mxu0 0.0
      %895 = vmatpush1.msra.mxu0 %v875
      %896 = vmatprep.subr.mxu0 0.0
      %897 = vmatpush1.msra.mxu0 %v876
      %898 = vmatprep.subr.mxu0 0.0
      %899 = vmatpush1.msra.mxu0 %v877
      %900 = vmatprep.subr.mxu0 0.0
      %901 = vmatpush1.msra.mxu0 %v878
      %902 = vmatprep.subr.mxu0 0.0
      %903 = vmatpush1.msra.mxu0 %v879
      %904 = vmatprep.subr.mxu0 0.0
      %905 = vmatpush1.msra.mxu0 %v880
      %906 = vmatprep.subr.mxu0 0.0
      %907 = vmatpush1.msra.mxu0 %v881
      %908 = vmatprep.subr.mxu0 0.0
      %909 = vmatpush1.msra.mxu0 %v882
      %910 = vmatprep.subr.mxu0 0.0
      %911 = vmatpush1.msra.mxu0 %v883
      %912 = vmatprep.subr.mxu0 0.0
      %913 = vmatpush1.msra.mxu0 %v884
      %914 = vmatprep.subr.mxu0 0.0
      %915 = vmatpush1.msra.mxu0 %v885
      %916 = vmatprep.subr.mxu0 0.0
      %917 = vmatpush1.msra.mxu0 %v886
      %918 = vmatprep.subr.mxu0 0.0
      %919 = vmatpush1.msra.mxu0 %v887
      %920 = vmatprep.subr.mxu0 0.0
      %921 = vmatpush1.msra.mxu0 0.0
      %922 = vmatprep.subr.mxu0 0.0
      %923 = vmatpush1.msra.mxu0 0.0
      %924 = vmatprep.subr.mxu0 0.0
      %925 = vmatpush1.msra.mxu0 0.0
      %926 = vmatprep.subr.mxu0 0.0
      %927 = vmatpush1.msra.mxu0 0.0
      %928 = vmatprep.subr.mxu0 0.0
      %929 = vmatpush1.msra.mxu0 0.0
      %930 = vmatprep.subr.mxu0 0.0
      %931 = vmatpush1.msra.mxu0 0.0
      %932 = vmatprep.subr.mxu0 0.0
      %933 = vmatpush1.msra.mxu0 0.0
      %934 = vmatprep.subr.mxu0 0.0
      %935 = vmatpush1.msra.mxu0 0.0
      %936 = vmatprep.subr.mxu0 0.0
      %937 = vmatpush1.msra.mxu0 0.0
      %938 = vmatprep.subr.mxu0 0.0
      %939 = vmatpush1.msra.mxu0 0.0
      %940 = vmatprep.subr.mxu0 0.0
      %941 = vmatpush1.msra.mxu0 0.0
      %942 = vmatprep.subr.mxu0 0.0
      %943 = vmatpush1.msra.mxu0 0.0
      %944 = vmatprep.subr.mxu0 0.0
      %945 = vmatpush1.msra.mxu0 0.0
      %946 = vmatprep.subr.mxu0 0.0
      %947 = vmatpush1.msra.mxu0 0.0
      %948 = vmatprep.subr.mxu0 0.0
      %949 = vmatpush1.msra.mxu0 0.0
      %950 = vmatprep.subr.mxu0 0.0
      %951 = vmatpush1.msra.mxu0 0.0
      %952 = vmatprep.mubr.f32.mxu0 0.0
      %953 = vmatmul.mubr.f32.gmra.mrb[0].mxu0 %v863
      %v954 = vpop.f32.mrb[0].mxu0
      %v955 = vadd.f32 0.0, %v954
      %v956 = vpop.f32.mrb[0].mxu0
      %957 = vmatprep.mubr.f32.mxu0 0.0
      %958 = vmatmul.mubr.f32.gmra.mrb[0].mxu0 %v864
      %v959 = vpop.f32.mrb[0].mxu0
      %v960 = vadd.f32 0.0, %v959
      %v961 = vpop.f32.mrb[0].mxu0
      %962 = vmatprep.mubr.f32.mxu0 0.0
      %963 = vmatmul.mubr.f32.gmra.mrb[0].mxu0 %v865
      %v964 = vpop.f32.mrb[0].mxu0
      %v965 = vadd.f32 0.0, %v964
      %v966 = vpop.f32.mrb[0].mxu0
      %967 = vmatprep.mubr.f32.mxu0 0.0
      %968 = vmatmul.mubr.f32.gmra.mrb[0].mxu0 %v866
      %v969 = vpop.f32.mrb[0].mxu0
      %v970 = vadd.f32 0.0, %v969
      %v971 = vpop.f32.mrb[0].mxu0
      %972 = vmatprep.mubr.f32.mxu0 0.0
      %973 = vmatmul.mubr.f32.gmra.mrb[0].mxu0 %v867
      %v974 = vpop.f32.mrb[0].mxu0
      %v975 = vadd.f32 0.0, %v974
      %v976 = vpop.f32.mrb[0].mxu0
      %977 = vmatprep.mubr.f32.mxu0 0.0
      %978 = vmatmul.mubr.f32.gmra.mrb[0].mxu0 %v868
      %v979 = vpop.f32.mrb[0].mxu0
      %v980 = vadd.f32 0.0, %v979
      %v981 = vpop.f32.mrb[0].mxu0
      %982 = vmatprep.mubr.f32.mxu0 0.0
      %983 = vmatmul.mubr.f32.gmra.mrb[0].mxu0 %v869
      %v984 = vpop.f32.mrb[0].mxu0
      %v985 = vadd.f32 0.0, %v984
      %v986 = vpop.f32.mrb[0].mxu0
      %987 = vmatprep.mubr.f32.mxu0 0.0
      %988 = vmatmul.mubr.f32.gmra.mrb[0].mxu0 %v870
      %v989 = vpop.f32.mrb[0].mxu0
      %v990 = vadd.f32 0.0, %v989
      %v991 = vpop.f32.mrb[0].mxu0
      %992 = vdwg.mxu0
      %v993 = vadd.f32 %v855, %v955
      %v994 = vadd.f32 %v856, %v960
      %v995 = vadd.f32 %v857, %v965
      %v996 = vadd.f32 %v858, %v970
      %v997 = vadd.f32 %v859, %v975
      %v998 = vadd.f32 %v860, %v980
      %v999 = vadd.f32 %v861, %v985
      %v1000 = vadd.f32 %v862, %v990
      %s1001 = scalar_lea.vmem %s176, 16
      %v1002 = vld [vmem:[%s1001] sm:$0xff]
      %v1003 = vld [vmem:[%s1001 + $0x10] sm:$0xff]
      %v1004 = vld [vmem:[%s1001 + $0x20] sm:$0xff]
      %v1005 = vld [vmem:[%s1001 + $0x30] sm:$0xff]
      %v1006 = vld [vmem:[%s1001 + $0x40] sm:$0xff]
      %v1007 = vld [vmem:[%s1001 + $0x50] sm:$0xff]
      %v1008 = vld [vmem:[%s1001 + $0x60] sm:$0xff]
      %v1009 = vld [vmem:[%s1001 + $0x70] sm:$0xff]
      %s1010 = scalar_lea.vmem %s1, 768
      %v1011 = vld [vmem:[%s1010] sm:$0xff]
      %v1012 = vld [vmem:[%s1010 + $0x8] sm:$0xff]
      %v1013 = vld [vmem:[%s1010 + $0x10] sm:$0xff]
      %v1014 = vld [vmem:[%s1010 + $0x18] sm:$0xff]
      %v1015 = vld [vmem:[%s1010 + $0x20] sm:$0xff]
      %v1016 = vld [vmem:[%s1010 + $0x28] sm:$0xff]
      %v1017 = vld [vmem:[%s1010 + $0x30] sm:$0xff]
      %v1018 = vld [vmem:[%s1010 + $0x38] sm:$0xff]
      %v1019 = vld [vmem:[%s1010 + $0x40] sm:$0xff]
      %v1020 = vld [vmem:[%s1010 + $0x48] sm:$0xff]
      %v1021 = vld [vmem:[%s1010 + $0x50] sm:$0xff]
      %v1022 = vld [vmem:[%s1010 + $0x58] sm:$0xff]
      %v1023 = vld [vmem:[%s1010 + $0x60] sm:$0xff]
      %v1024 = vld [vmem:[%s1010 + $0x68] sm:$0xff]
      %v1025 = vld [vmem:[%s1010 + $0x70] sm:$0xff]
      %v1026 = vld [vmem:[%s1010 + $0x78] sm:$0xff]
      %1027 = vmatprep.subr.mxu0 0.0
      %1028 = vmatpush1.msra.mxu0 %v1011
      %1029 = vmatprep.subr.mxu0 0.0
      %1030 = vmatpush1.msra.mxu0 %v1012
      %1031 = vmatprep.subr.mxu0 0.0
      %1032 = vmatpush1.msra.mxu0 %v1013
      %1033 = vmatprep.subr.mxu0 0.0
      %1034 = vmatpush1.msra.mxu0 %v1014
      %1035 = vmatprep.subr.mxu0 0.0
      %1036 = vmatpush1.msra.mxu0 %v1015
      %1037 = vmatprep.subr.mxu0 0.0
      %1038 = vmatpush1.msra.mxu0 %v1016
      %1039 = vmatprep.subr.mxu0 0.0
      %1040 = vmatpush1.msra.mxu0 %v1017
      %1041 = vmatprep.subr.mxu0 0.0
      %1042 = vmatpush1.msra.mxu0 %v1018
      %1043 = vmatprep.subr.mxu0 0.0
      %1044 = vmatpush1.msra.mxu0 %v1019
      %1045 = vmatprep.subr.mxu0 0.0
      %1046 = vmatpush1.msra.mxu0 %v1020
      %1047 = vmatprep.subr.mxu0 0.0
      %1048 = vmatpush1.msra.mxu0 %v1021
      %1049 = vmatprep.subr.mxu0 0.0
      %1050 = vmatpush1.msra.mxu0 %v1022
      %1051 = vmatprep.subr.mxu0 0.0
      %1052 = vmatpush1.msra.mxu0 %v1023
      %1053 = vmatprep.subr.mxu0 0.0
      %1054 = vmatpush1.msra.mxu0 %v1024
      %1055 = vmatprep.subr.mxu0 0.0
      %1056 = vmatpush1.msra.mxu0 %v1025
      %1057 = vmatprep.subr.mxu0 0.0
      %1058 = vmatpush1.msra.mxu0 %v1026
      %1059 = vmatprep.subr.mxu0 0.0
      %1060 = vmatpush1.msra.mxu0 0.0
      %1061 = vmatprep.subr.mxu0 0.0
      %1062 = vmatpush1.msra.mxu0 0.0
      %1063 = vmatprep.subr.mxu0 0.0
      %1064 = vmatpush1.msra.mxu0 0.0
      %1065 = vmatprep.subr.mxu0 0.0
      %1066 = vmatpush1.msra.mxu0 0.0
      %1067 = vmatprep.subr.mxu0 0.0
      %1068 = vmatpush1.msra.mxu0 0.0
      %1069 = vmatprep.subr.mxu0 0.0
      %1070 = vmatpush1.msra.mxu0 0.0
      %1071 = vmatprep.subr.mxu0 0.0
      %1072 = vmatpush1.msra.mxu0 0.0
      %1073 = vmatprep.subr.mxu0 0.0
      %1074 = vmatpush1.msra.mxu0 0.0
      %1075 = vmatprep.subr.mxu0 0.0
      %1076 = vmatpush1.msra.mxu0 0.0
      %1077 = vmatprep.subr.mxu0 0.0
      %1078 = vmatpush1.msra.mxu0 0.0
      %1079 = vmatprep.subr.mxu0 0.0
      %1080 = vmatpush1.msra.mxu0 0.0
      %1081 = vmatprep.subr.mxu0 0.0
      %1082 = vmatpush1.msra.mxu0 0.0
      %1083 = vmatprep.subr.mxu0 0.0
      %1084 = vmatpush1.msra.mxu0 0.0
      %1085 = vmatprep.subr.mxu0 0.0
      %1086 = vmatpush1.msra.mxu0 0.0
      %1087 = vmatprep.subr.mxu0 0.0
      %1088 = vmatpush1.msra.mxu0 0.0
      %1089 = vmatprep.subr.mxu0 0.0
      %1090 = vmatpush1.msra.mxu0 0.0
      %1091 = vmatprep.mubr.f32.mxu0 0.0
      %1092 = vmatmul.mubr.f32.gmra.mrb[0].mxu0 %v1002
      %v1093 = vpop.f32.mrb[0].mxu0
      %v1094 = vadd.f32 0.0, %v1093
      %v1095 = vpop.f32.mrb[0].mxu0
      %1096 = vmatprep.mubr.f32.mxu0 0.0
      %1097 = vmatmul.mubr.f32.gmra.mrb[0].mxu0 %v1003
      %v1098 = vpop.f32.mrb[0].mxu0
      %v1099 = vadd.f32 0.0, %v1098
      %v1100 = vpop.f32.mrb[0].mxu0
      %1101 = vmatprep.mubr.f32.mxu0 0.0
      %1102 = vmatmul.mubr.f32.gmra.mrb[0].mxu0 %v1004
      %v1103 = vpop.f32.mrb[0].mxu0
      %v1104 = vadd.f32 0.0, %v1103
      %v1105 = vpop.f32.mrb[0].mxu0
      %1106 = vmatprep.mubr.f32.mxu0 0.0
      %1107 = vmatmul.mubr.f32.gmra.mrb[0].mxu0 %v1005
      %v1108 = vpop.f32.mrb[0].mxu0
      %v1109 = vadd.f32 0.0, %v1108
      %v1110 = vpop.f32.mrb[0].mxu0
      %1111 = vmatprep.mubr.f32.mxu0 0.0
      %1112 = vmatmul.mubr.f32.gmra.mrb[0].mxu0 %v1006
      %v1113 = vpop.f32.mrb[0].mxu0
      %v1114 = vadd.f32 0.0, %v1113
      %v1115 = vpop.f32.mrb[0].mxu0
      %1116 = vmatprep.mubr.f32.mxu0 0.0
      %1117 = vmatmul.mubr.f32.gmra.mrb[0].mxu0 %v1007
      %v1118 = vpop.f32.mrb[0].mxu0
      %v1119 = vadd.f32 0.0, %v1118
      %v1120 = vpop.f32.mrb[0].mxu0
      %1121 = vmatprep.mubr.f32.mxu0 0.0
      %1122 = vmatmul.mubr.f32.gmra.mrb[0].mxu0 %v1008
      %v1123 = vpop.f32.mrb[0].mxu0
      %v1124 = vadd.f32 0.0, %v1123
      %v1125 = vpop.f32.mrb[0].mxu0
      %1126 = vmatprep.mubr.f32.mxu0 0.0
      %1127 = vmatmul.mubr.f32.gmra.mrb[0].mxu0 %v1009
      %v1128 = vpop.f32.mrb[0].mxu0
      %v1129 = vadd.f32 0.0, %v1128
      %v1130 = vpop.f32.mrb[0].mxu0
      %1131 = vdwg.mxu0
      %v1132 = vadd.f32 %v993, %v1094
      %v1133 = vadd.f32 %v994, %v1099
      %v1134 = vadd.f32 %v995, %v1104
      %v1135 = vadd.f32 %v996, %v1109
      %v1136 = vadd.f32 %v997, %v1114
      %v1137 = vadd.f32 %v998, %v1119
      %v1138 = vadd.f32 %v999, %v1124
      %v1139 = vadd.f32 %v1000, %v1129
      %s1140 = scalar_lea.vmem %s176, 160
      %v1141 = vld [vmem:[%s1140] sm:$0xff]
      %v1142 = vld [vmem:[%s1140 + $0x10] sm:$0xff]
      %v1143 = vld [vmem:[%s1140 + $0x20] sm:$0xff]
      %v1144 = vld [vmem:[%s1140 + $0x30] sm:$0xff]
      %v1145 = vld [vmem:[%s1140 + $0x40] sm:$0xff]
      %v1146 = vld [vmem:[%s1140 + $0x50] sm:$0xff]
      %v1147 = vld [vmem:[%s1140 + $0x60] sm:$0xff]
      %v1148 = vld [vmem:[%s1140 + $0x70] sm:$0xff]
      %s1149 = scalar_lea.vmem %s1, 896
      %v1150 = vld [vmem:[%s1149] sm:$0xff]
      %v1151 = vld [vmem:[%s1149 + $0x8] sm:$0xff]
      %v1152 = vld [vmem:[%s1149 + $0x10] sm:$0xff]
      %v1153 = vld [vmem:[%s1149 + $0x18] sm:$0xff]
      %v1154 = vld [vmem:[%s1149 + $0x20] sm:$0xff]
      %v1155 = vld [vmem:[%s1149 + $0x28] sm:$0xff]
      %v1156 = vld [vmem:[%s1149 + $0x30] sm:$0xff]
      %v1157 = vld [vmem:[%s1149 + $0x38] sm:$0xff]
      %v1158 = vld [vmem:[%s1149 + $0x40] sm:$0xff]
      %v1159 = vld [vmem:[%s1149 + $0x48] sm:$0xff]
      %v1160 = vld [vmem:[%s1149 + $0x50] sm:$0xff]
      %v1161 = vld [vmem:[%s1149 + $0x58] sm:$0xff]
      %v1162 = vld [vmem:[%s1149 + $0x60] sm:$0xff]
      %v1163 = vld [vmem:[%s1149 + $0x68] sm:$0xff]
      %v1164 = vld [vmem:[%s1149 + $0x70] sm:$0xff]
      %v1165 = vld [vmem:[%s1149 + $0x78] sm:$0xff]
      %1166 = vmatprep.subr.mxu0 0.0
      %1167 = vmatpush1.msra.mxu0 %v1150
      %1168 = vmatprep.subr.mxu0 0.0
      %1169 = vmatpush1.msra.mxu0 %v1151
      %1170 = vmatprep.subr.mxu0 0.0
      %1171 = vmatpush1.msra.mxu0 %v1152
      %1172 = vmatprep.subr.mxu0 0.0
      %1173 = vmatpush1.msra.mxu0 %v1153
      %1174 = vmatprep.subr.mxu0 0.0
      %1175 = vmatpush1.msra.mxu0 %v1154
      %1176 = vmatprep.subr.mxu0 0.0
      %1177 = vmatpush1.msra.mxu0 %v1155
      %1178 = vmatprep.subr.mxu0 0.0
      %1179 = vmatpush1.msra.mxu0 %v1156
      %1180 = vmatprep.subr.mxu0 0.0
      %1181 = vmatpush1.msra.mxu0 %v1157
      %1182 = vmatprep.subr.mxu0 0.0
      %1183 = vmatpush1.msra.mxu0 %v1158
      %1184 = vmatprep.subr.mxu0 0.0
      %1185 = vmatpush1.msra.mxu0 %v1159
      %1186 = vmatprep.subr.mxu0 0.0
      %1187 = vmatpush1.msra.mxu0 %v1160
      %1188 = vmatprep.subr.mxu0 0.0
      %1189 = vmatpush1.msra.mxu0 %v1161
      %1190 = vmatprep.subr.mxu0 0.0
      %1191 = vmatpush1.msra.mxu0 %v1162
      %1192 = vmatprep.subr.mxu0 0.0
      %1193 = vmatpush1.msra.mxu0 %v1163
      %1194 = vmatprep.subr.mxu0 0.0
      %1195 = vmatpush1.msra.mxu0 %v1164
      %1196 = vmatprep.subr.mxu0 0.0
      %1197 = vmatpush1.msra.mxu0 %v1165
      %1198 = vmatprep.subr.mxu0 0.0
      %1199 = vmatpush1.msra.mxu0 0.0
      %1200 = vmatprep.subr.mxu0 0.0
      %1201 = vmatpush1.msra.mxu0 0.0
      %1202 = vmatprep.subr.mxu0 0.0
      %1203 = vmatpush1.msra.mxu0 0.0
      %1204 = vmatprep.subr.mxu0 0.0
      %1205 = vmatpush1.msra.mxu0 0.0
      %1206 = vmatprep.subr.mxu0 0.0
      %1207 = vmatpush1.msra.mxu0 0.0
      %1208 = vmatprep.subr.mxu0 0.0
      %1209 = vmatpush1.msra.mxu0 0.0
      %1210 = vmatprep.subr.mxu0 0.0
      %1211 = vmatpush1.msra.mxu0 0.0
      %1212 = vmatprep.subr.mxu0 0.0
      %1213 = vmatpush1.msra.mxu0 0.0
      %1214 = vmatprep.subr.mxu0 0.0
      %1215 = vmatpush1.msra.mxu0 0.0
      %1216 = vmatprep.subr.mxu0 0.0
      %1217 = vmatpush1.msra.mxu0 0.0
      %1218 = vmatprep.subr.mxu0 0.0
      %1219 = vmatpush1.msra.mxu0 0.0
      %1220 = vmatprep.subr.mxu0 0.0
      %1221 = vmatpush1.msra.mxu0 0.0
      %1222 = vmatprep.subr.mxu0 0.0
      %1223 = vmatpush1.msra.mxu0 0.0
      %1224 = vmatprep.subr.mxu0 0.0
      %1225 = vmatpush1.msra.mxu0 0.0
      %1226 = vmatprep.subr.mxu0 0.0
      %1227 = vmatpush1.msra.mxu0 0.0
      %1228 = vmatprep.subr.mxu0 0.0
      %1229 = vmatpush1.msra.mxu0 0.0
      %1230 = vmatprep.mubr.f32.mxu0 0.0
      %1231 = vmatmul.mubr.f32.gmra.mrb[0].mxu0 %v1141
      %v1232 = vpop.f32.mrb[0].mxu0
      %v1233 = vadd.f32 0.0, %v1232
      %v1234 = vpop.f32.mrb[0].mxu0
      %1235 = vmatprep.mubr.f32.mxu0 0.0
      %1236 = vmatmul.mubr.f32.gmra.mrb[0].mxu0 %v1142
      %v1237 = vpop.f32.mrb[0].mxu0
      %v1238 = vadd.f32 0.0, %v1237
      %v1239 = vpop.f32.mrb[0].mxu0
      %1240 = vmatprep.mubr.f32.mxu0 0.0
      %1241 = vmatmul.mubr.f32.gmra.mrb[0].mxu0 %v1143
      %v1242 = vpop.f32.mrb[0].mxu0
      %v1243 = vadd.f32 0.0, %v1242
      %v1244 = vpop.f32.mrb[0].mxu0
      %1245 = vmatprep.mubr.f32.mxu0 0.0
      %1246 = vmatmul.mubr.f32.gmra.mrb[0].mxu0 %v1144
      %v1247 = vpop.f32.mrb[0].mxu0
      %v1248 = vadd.f32 0.0, %v1247
      %v1249 = vpop.f32.mrb[0].mxu0
      %1250 = vmatprep.mubr.f32.mxu0 0.0
      %1251 = vmatmul.mubr.f32.gmra.mrb[0].mxu0 %v1145
      %v1252 = vpop.f32.mrb[0].mxu0
      %v1253 = vadd.f32 0.0, %v1252
      %v1254 = vpop.f32.mrb[0].mxu0
      %1255 = vmatprep.mubr.f32.mxu0 0.0
      %1256 = vmatmul.mubr.f32.gmra.mrb[0].mxu0 %v1146
      %v1257 = vpop.f32.mrb[0].mxu0
      %v1258 = vadd.f32 0.0, %v1257
      %v1259 = vpop.f32.mrb[0].mxu0
      %1260 = vmatprep.mubr.f32.mxu0 0.0
      %1261 = vmatmul.mubr.f32.gmra.mrb[0].mxu0 %v1147
      %v1262 = vpop.f32.mrb[0].mxu0
      %v1263 = vadd.f32 0.0, %v1262
      %v1264 = vpop.f32.mrb[0].mxu0
      %1265 = vmatprep.mubr.f32.mxu0 0.0
      %1266 = vmatmul.mubr.f32.gmra.mrb[0].mxu0 %v1148
      %v1267 = vpop.f32.mrb[0].mxu0
      %v1268 = vadd.f32 0.0, %v1267
      %v1269 = vpop.f32.mrb[0].mxu0
      %1270 = vdwg.mxu0
      %v1271 = vadd.f32 %v1132, %v1233
      %v1272 = vadd.f32 %v1133, %v1238
      %v1273 = vadd.f32 %v1134, %v1243
      %v1274 = vadd.f32 %v1135, %v1248
      %v1275 = vadd.f32 %v1136, %v1253
      %v1276 = vadd.f32 %v1137, %v1258
      %v1277 = vadd.f32 %v1138, %v1263
      %v1278 = vadd.f32 %v1139, %v1268
      %v1279 = vld [vmem:[%s1001 + $0x1] sm:$0xff]
      %v1280 = vld [vmem:[%s1001 + $0x11] sm:$0xff]
      %v1281 = vld [vmem:[%s1001 + $0x21] sm:$0xff]
      %v1282 = vld [vmem:[%s1001 + $0x31] sm:$0xff]
      %v1283 = vld [vmem:[%s1001 + $0x41] sm:$0xff]
      %v1284 = vld [vmem:[%s1001 + $0x51] sm:$0xff]
      %v1285 = vld [vmem:[%s1001 + $0x61] sm:$0xff]
      %v1286 = vld [vmem:[%s1001 + $0x71] sm:$0xff]
      %s1287 = scalar_lea.vmem %s1, 1024
      %v1288 = vld [vmem:[%s1287] sm:$0xff]
      %v1289 = vld [vmem:[%s1287 + $0x8] sm:$0xff]
      %v1290 = vld [vmem:[%s1287 + $0x10] sm:$0xff]
      %v1291 = vld [vmem:[%s1287 + $0x18] sm:$0xff]
      %v1292 = vld [vmem:[%s1287 + $0x20] sm:$0xff]
      %v1293 = vld [vmem:[%s1287 + $0x28] sm:$0xff]
      %v1294 = vld [vmem:[%s1287 + $0x30] sm:$0xff]
      %v1295 = vld [vmem:[%s1287 + $0x38] sm:$0xff]
      %v1296 = vld [vmem:[%s1287 + $0x40] sm:$0xff]
      %v1297 = vld [vmem:[%s1287 + $0x48] sm:$0xff]
      %v1298 = vld [vmem:[%s1287 + $0x50] sm:$0xff]
      %v1299 = vld [vmem:[%s1287 + $0x58] sm:$0xff]
      %v1300 = vld [vmem:[%s1287 + $0x60] sm:$0xff]
      %v1301 = vld [vmem:[%s1287 + $0x68] sm:$0xff]
      %v1302 = vld [vmem:[%s1287 + $0x70] sm:$0xff]
      %v1303 = vld [vmem:[%s1287 + $0x78] sm:$0xff]
      %1304 = vmatprep.subr.mxu0 0.0
      %1305 = vmatpush1.msra.mxu0 %v1288
      %1306 = vmatprep.subr.mxu0 0.0
      %1307 = vmatpush1.msra.mxu0 %v1289
      %1308 = vmatprep.subr.mxu0 0.0
      %1309 = vmatpush1.msra.mxu0 %v1290
      %1310 = vmatprep.subr.mxu0 0.0
      %1311 = vmatpush1.msra.mxu0 %v1291
      %1312 = vmatprep.subr.mxu0 0.0
      %1313 = vmatpush1.msra.mxu0 %v1292
      %1314 = vmatprep.subr.mxu0 0.0
      %1315 = vmatpush1.msra.mxu0 %v1293
      %1316 = vmatprep.subr.mxu0 0.0
      %1317 = vmatpush1.msra.mxu0 %v1294
      %1318 = vmatprep.subr.mxu0 0.0
      %1319 = vmatpush1.msra.mxu0 %v1295
      %1320 = vmatprep.subr.mxu0 0.0
      %1321 = vmatpush1.msra.mxu0 %v1296
      %1322 = vmatprep.subr.mxu0 0.0
      %1323 = vmatpush1.msra.mxu0 %v1297
      %1324 = vmatprep.subr.mxu0 0.0
      %1325 = vmatpush1.msra.mxu0 %v1298
      %1326 = vmatprep.subr.mxu0 0.0
      %1327 = vmatpush1.msra.mxu0 %v1299
      %1328 = vmatprep.subr.mxu0 0.0
      %1329 = vmatpush1.msra.mxu0 %v1300
      %1330 = vmatprep.subr.mxu0 0.0
      %1331 = vmatpush1.msra.mxu0 %v1301
      %1332 = vmatprep.subr.mxu0 0.0
      %1333 = vmatpush1.msra.mxu0 %v1302
      %1334 = vmatprep.subr.mxu0 0.0
      %1335 = vmatpush1.msra.mxu0 %v1303
      %1336 = vmatprep.subr.mxu0 0.0
      %1337 = vmatpush1.msra.mxu0 0.0
      %1338 = vmatprep.subr.mxu0 0.0
      %1339 = vmatpush1.msra.mxu0 0.0
      %1340 = vmatprep.subr.mxu0 0.0
      %1341 = vmatpush1.msra.mxu0 0.0
      %1342 = vmatprep.subr.mxu0 0.0
      %1343 = vmatpush1.msra.mxu0 0.0
      %1344 = vmatprep.subr.mxu0 0.0
      %1345 = vmatpush1.msra.mxu0 0.0
      %1346 = vmatprep.subr.mxu0 0.0
      %1347 = vmatpush1.msra.mxu0 0.0
      %1348 = vmatprep.subr.mxu0 0.0
      %1349 = vmatpush1.msra.mxu0 0.0
      %1350 = vmatprep.subr.mxu0 0.0
      %1351 = vmatpush1.msra.mxu0 0.0
      %1352 = vmatprep.subr.mxu0 0.0
      %1353 = vmatpush1.msra.mxu0 0.0
      %1354 = vmatprep.subr.mxu0 0.0
      %1355 = vmatpush1.msra.mxu0 0.0
      %1356 = vmatprep.subr.mxu0 0.0
      %1357 = vmatpush1.msra.mxu0 0.0
      %1358 = vmatprep.subr.mxu0 0.0
      %1359 = vmatpush1.msra.mxu0 0.0
      %1360 = vmatprep.subr.mxu0 0.0
      %1361 = vmatpush1.msra.mxu0 0.0
      %1362 = vmatprep.subr.mxu0 0.0
      %1363 = vmatpush1.msra.mxu0 0.0
      %1364 = vmatprep.subr.mxu0 0.0
      %1365 = vmatpush1.msra.mxu0 0.0
      %1366 = vmatprep.subr.mxu0 0.0
      %1367 = vmatpush1.msra.mxu0 0.0
      %1368 = vmatprep.mubr.f32.mxu0 0.0
      %1369 = vmatmul.mubr.f32.gmra.mrb[0].mxu0 %v1279
      %v1370 = vpop.f32.mrb[0].mxu0
      %v1371 = vadd.f32 0.0, %v1370
      %v1372 = vpop.f32.mrb[0].mxu0
      %1373 = vmatprep.mubr.f32.mxu0 0.0
      %1374 = vmatmul.mubr.f32.gmra.mrb[0].mxu0 %v1280
      %v1375 = vpop.f32.mrb[0].mxu0
      %v1376 = vadd.f32 0.0, %v1375
      %v1377 = vpop.f32.mrb[0].mxu0
      %1378 = vmatprep.mubr.f32.mxu0 0.0
      %1379 = vmatmul.mubr.f32.gmra.mrb[0].mxu0 %v1281
      %v1380 = vpop.f32.mrb[0].mxu0
      %v1381 = vadd.f32 0.0, %v1380
      %v1382 = vpop.f32.mrb[0].mxu0
      %1383 = vmatprep.mubr.f32.mxu0 0.0
      %1384 = vmatmul.mubr.f32.gmra.mrb[0].mxu0 %v1282
      %v1385 = vpop.f32.mrb[0].mxu0
      %v1386 = vadd.f32 0.0, %v1385
      %v1387 = vpop.f32.mrb[0].mxu0
      %1388 = vmatprep.mubr.f32.mxu0 0.0
      %1389 = vmatmul.mubr.f32.gmra.mrb[0].mxu0 %v1283
      %v1390 = vpop.f32.mrb[0].mxu0
      %v1391 = vadd.f32 0.0, %v1390
      %v1392 = vpop.f32.mrb[0].mxu0
      %1393 = vmatprep.mubr.f32.mxu0 0.0
      %1394 = vmatmul.mubr.f32.gmra.mrb[0].mxu0 %v1284
      %v1395 = vpop.f32.mrb[0].mxu0
      %v1396 = vadd.f32 0.0, %v1395
      %v1397 = vpop.f32.mrb[0].mxu0
      %1398 = vmatprep.mubr.f32.mxu0 0.0
      %1399 = vmatmul.mubr.f32.gmra.mrb[0].mxu0 %v1285
      %v1400 = vpop.f32.mrb[0].mxu0
      %v1401 = vadd.f32 0.0, %v1400
      %v1402 = vpop.f32.mrb[0].mxu0
      %1403 = vmatprep.mubr.f32.mxu0 0.0
      %1404 = vmatmul.mubr.f32.gmra.mrb[0].mxu0 %v1286
      %v1405 = vpop.f32.mrb[0].mxu0
      %v1406 = vadd.f32 0.0, %v1405
      %v1407 = vpop.f32.mrb[0].mxu0
      %1408 = vdwg.mxu0
      %v1409 = vadd.f32 %v1271, %v1371
      %v1410 = vadd.f32 %v1272, %v1376
      %v1411 = vadd.f32 %v1273, %v1381
      %v1412 = vadd.f32 %v1274, %v1386
      %v1413 = vadd.f32 %v1275, %v1391
      %v1414 = vadd.f32 %v1276, %v1396
      %v1415 = vadd.f32 %v1277, %v1401
      %v1416 = vadd.f32 %v1278, %v1406
      %1417 = vst [vmem:[%s182] sm:$0xff] %v1409
      %1418 = vst [vmem:[%s182 + $0x8] sm:$0xff] %v1410
      %1419 = vst [vmem:[%s182 + $0x10] sm:$0xff] %v1411
      %1420 = vst [vmem:[%s182 + $0x18] sm:$0xff] %v1412
      %1421 = vst [vmem:[%s182 + $0x20] sm:$0xff] %v1413
      %1422 = vst [vmem:[%s182 + $0x28] sm:$0xff] %v1414
      %1423 = vst [vmem:[%s182 + $0x30] sm:$0xff] %v1415
      %1424 = vst [vmem:[%s182 + $0x38] sm:$0xff] %v1416
      %v1425 = vadd.f32 %v1409, %v1410
      %v1426 = vadd.f32 %v1425, %v1411
      %v1427 = vadd.f32 %v1426, %v1412
      %v1428 = vadd.f32 %v1427, %v1413
      %v1429 = vadd.f32 %v1428, %v1414
      %v1430 = vadd.f32 %v1429, %v1415
      %v1431 = vadd.f32 %v1430, %v1416
      %v1432 = vrot.slane %v1431, 4
      %v1433 = vadd.f32 %v1431, %v1432
      %v1434 = vrot.slane %v1433, 2
      %v1435 = vadd.f32 %v1433, %v1434
      %v1436 = vrot.slane %v1435, 1
      %v1437 = vadd.f32 %v1435, %v1436
      %v1438 = vmul.f32 %v1409, %v1409
      %v1439 = vmul.f32 %v1410, %v1410
      %v1440 = vmul.f32 %v1411, %v1411
      %v1441 = vmul.f32 %v1412, %v1412
      %v1442 = vmul.f32 %v1413, %v1413
      %v1443 = vmul.f32 %v1414, %v1414
      %v1444 = vmul.f32 %v1415, %v1415
      %v1445 = vmul.f32 %v1416, %v1416
      %v1446 = vadd.f32 %v1438, %v1439
      %v1447 = vadd.f32 %v1446, %v1440
      %v1448 = vadd.f32 %v1447, %v1441
      %v1449 = vadd.f32 %v1448, %v1442
      %v1450 = vadd.f32 %v1449, %v1443
      %v1451 = vadd.f32 %v1450, %v1444
      %v1452 = vadd.f32 %v1451, %v1445
      %v1453 = vrot.slane %v1452, 4
      %v1454 = vadd.f32 %v1452, %v1453
      %v1455 = vrot.slane %v1454, 2
      %v1456 = vadd.f32 %v1454, %v1455
      %v1457 = vrot.slane %v1456, 1
      %v1458 = vadd.f32 %v1456, %v1457
      %vm1459 = vcmask 1040384
      %v1460 = vsel %vm1459, %v1437, %v1458
      %1461 = vst [vmem:[%s186] sm:$0x3] %v1460
      %p1462 = scmp.lt.s32.totalorder %s15, 1
      %s1463 = scalar_select %p1462, %s15, 1
      %s1464 = smul.addr %s1463, 8
      %s1465 = smul.addr %s1464, 8
      %s1466 = scalar_lea.vmem %s2, %s1465
      %p1467 = scmp.lt.s32.totalorder %s15, 1
      %s1468 = scalar_select %p1467, %s15, 1
      %s1469 = smul.addr %s1468, 2
      %s1470 = scalar_lea.vmem %s3, %s1469
      // Predicated region
      $region29: #{basic_block_forward.3} parent=27 // pred_check
        %p1471 = pneg %p80
      $region30: #{basic_block_forward.3} parent=27 // pred_check_branch
        %1473 = sbr.rel (%p1471) target = $region32
      $region31: #{basic_block_forward.3} parent=27 // pred_region
        _
      $region32: #{basic_block_forward.3} parent=27 // pred_fallthru
        _
      // Predicated region
      $region33: #{basic_block_forward.3} parent=27 // pred_check
        %p1474 = pneg %p106
      $region34: #{basic_block_forward.3} parent=27 // pred_check_branch
        %1476 = sbr.rel (%p1474) target = $region36
      $region35: #{basic_block_forward.3} parent=27 // pred_region
        _
      $region36: #{basic_block_forward.3} parent=27 // pred_fallthru
        _
    $region28: #{basic_block_forward.3} parent=5 // pred_fallthru
      _
    %p1477 = scmp.le.s32.totalorder 2, %s10
    // Predicated region
    $region37: #{basic_block_forward.3} parent=5 // pred_check
      %p1478 = pneg %p1477
    $region38: #{basic_block_forward.3} parent=5 // pred_check_branch
      %1480 = sbr.rel (%p1478) target = $region40
    $region39: #{basic_block_forward.3} parent=5 // pred_region
      %s1481 = ssub.s32 %s10, 2
      // Predicated region
      $region41: #{basic_block_forward.3} parent=39 // pred_check
        %p1482 = pneg %p86
      $region42: #{basic_block_forward.3} parent=39 // pred_check_branch
        %1484 = sbr.rel (%p1482) target = $region44
      $region43: #{basic_block_forward.3} parent=39 // pred_region
        %p1485 = scmp.lt.s32.totalorder %s16, 1
        %s1486 = scalar_select %p1485, %s16, 1
        %s1487 = smul.addr %s1486, 8
        %s1488 = smul.addr %s1487, 8
        %s1489 = scalar_lea.vmem %s2, %s1488
      $region44: #{basic_block_forward.3} parent=39 // pred_fallthru
        _
      // Predicated region
      $region45: #{basic_block_forward.3} parent=39 // pred_check
        %p1490 = pneg %p112
      $region46: #{basic_block_forward.3} parent=39 // pred_check_branch
        %1492 = sbr.rel (%p1490) target = $region48
      $region47: #{basic_block_forward.3} parent=39 // pred_region
        %p1493 = scmp.lt.s32.totalorder %s16, 1
        %s1494 = scalar_select %p1493, %s16, 1
        %s1495 = smul.addr %s1494, 2
        %s1496 = scalar_lea.vmem %s3, %s1495
      $region48: #{basic_block_forward.3} parent=39 // pred_fallthru
        _
    $region40: #{basic_block_forward.3} parent=5 // pred_fallthru
      _
  $region6: #{basic_block_forward.3} parent=0 // loop_footer
    %s14 = sadd.s32 1, %s10
  $region7: #{basic_block_forward.3} parent=0 // loop_footer_branch
    %9 = sbr.rel target = $region3
  $region8: #{basic_block_forward.3} parent=0 // loop_exit
    _

// kernel: basic_block_forward.4
$region0: #{basic_block_forward.4}
  #allocation0 [shape = 'u32[]', space=smem, size = 0x4, offset = 0x4, fixed_abs, tag = 'smem constant byte address 0x4 - core index']
  #allocation1 [shape = 'u32[144,128]{1,0:T(1,128)}', space=vmem, size = 0x12000, scoped, tag = 'internal scratch']
  #allocation2 [shape = 'f32[1,10,10,128]{3,2,1,0:T(8,128)}', space=vmem, size = 0x14000, scoped, tag = 'scratch operand']
  %s0 = inlined_call_operand.vmem [shape: f32[2,8,8,128], index: 0, kind: input, shape index: {}]
  %s1 = inlined_call_operand.vmem [shape: f32[9,128,128], index: 1, kind: input, shape index: {}]
  %s2 = inlined_call_operand.vmem [shape: f32[1,128], index: 2, kind: input, shape index: {}]
  %s3 = inlined_call_operand.vmem [shape: f32[1,128], index: 3, kind: input, shape index: {}]
  %s4 = inlined_call_operand.vmem [shape: f32[2,8,8,128], index: 4, kind: output, shape index: {0}]
  %s5 = inlined_call_operand.vmem [shape: f32[2,2,128], index: 5, kind: output, shape index: {1}]
  %6 = xla_tuple %s4, %s5
  %s7 = sld [smem:[#allocation0]]
  $region57: #{basic_block_forward.4} parent=0
    _
  %s9 = ssub.s32 1, %s7
  %s10 = scalar_select 0, %s9, %s7
  loop: start=0, step=1, limit=4
  $region2: #{basic_block_forward.4} parent=0 // loop_pre_header
    _
  $region3: #{basic_block_forward.4} parent=0 // loop_header
    %s12 = sphi 0, %s16
    %p13 = scmp.ge.s32.totalorder %s12, 4
    %s22 = sphi 0, %s24
    %s25 = sphi 0, %s22
    %s26 = sphi 0, %s25
    %s42 = sphi 0, %s26
    %s46 = sphi 0, %s46
    %s48 = sphi 0, %s46
    %s49 = sphi 0, %s48
    %s63 = sphi 0, %s49
    %s67 = sphi 0, %s67
    %s69 = sphi 0, %s67
    %s70 = sphi 0, %s69
    %s84 = sphi 0, %s70
    %s88 = sphi 0, %s88
    %s90 = sphi 0, %s88
    %s91 = sphi 0, %s90
    %s105 = sphi 0, %s91
    %s111 = sphi 0, %s113
    %s114 = sphi 0, %s111
    %s115 = sphi 0, %s114
    %s131 = sphi 0, %s115
    %s137 = sphi 0, %s139
    %s140 = sphi 0, %s137
    %s141 = sphi 0, %s140
    %s157 = sphi 0, %s141
  $region4: #{basic_block_forward.4} parent=0 // loop_header_branch
    %15 = sbr.rel (%p13) target = $region8
  $region5: #{basic_block_forward.4} parent=0 // loop_body
    %s17 = ssub.s32 %s12, 1
    %s18 = ssub.s32 %s12, 2
    %s19 = sadd.s32 %s12, 1
    %s20 = ssub.s32 %s12, %s19
    %p21 = scmp.eq.s32.totalorder %s20, 0
    %s23 = sadd.s32 %s22, 1
    %s24 = scalar_select %p21, %s22, %s23
    %p27 = pneg %p21
    %p28 = scmp.eq.s32.totalorder %s12, 1
    %p29 = por %p27, %p28
    %p30 = scmp.ne.s32.totalorder %s22, %s25
    %p31 = scmp.eq.s32.totalorder %s12, 0
    %p32 = por %p30, %p31
    %p33 = scmp.ne.s32.totalorder %s22, %s25
    %p34 = scmp.eq.s32.totalorder %s17, 1
    %p35 = por %p33, %p34
    %p36 = scmp.ne.s32.totalorder %s25, %s26
    %p37 = scmp.eq.s32.totalorder %s17, 0
    %p38 = por %p36, %p37
    %p39 = scmp.ne.s32.totalorder %s25, %s26
    %p40 = scmp.eq.s32.totalorder %s18, 1
    %p41 = por %p39, %p40
    %p43 = scmp.ne.s32.totalorder %s26, %s42
    %p44 = scmp.eq.s32.totalorder %s18, 0
    %p45 = por %p43, %p44
    %s47 = sadd.s32 %s46, 1
    %p50 = scmp.eq.s32.totalorder %s12, 1
    %p51 = scmp.ne.s32.totalorder %s46, %s48
    %p52 = scmp.eq.s32.totalorder %s12, 0
    %p53 = por %p51, %p52
    %p54 = scmp.ne.s32.totalorder %s46, %s48
    %p55 = scmp.eq.s32.totalorder %s17, 1
    %p56 = por %p54, %p55
    %p57 = scmp.ne.s32.totalorder %s48, %s49
    %p58 = scmp.eq.s32.totalorder %s17, 0
    %p59 = por %p57, %p58
    %p60 = scmp.ne.s32.totalorder %s48, %s49
    %p61 = scmp.eq.s32.totalorder %s18, 1
    %p62 = por %p60, %p61
    %p64 = scmp.ne.s32.totalorder %s49, %s63
    %p65 = scmp.eq.s32.totalorder %s18, 0
    %p66 = por %p64, %p65
    %s68 = sadd.s32 %s67, 1
    %p71 = scmp.eq.s32.totalorder %s12, 1
    %p72 = scmp.ne.s32.totalorder %s67, %s69
    %p73 = scmp.eq.s32.totalorder %s12, 0
    %p74 = por %p72, %p73
    %p75 = scmp.ne.s32.totalorder %s67, %s69
    %p76 = scmp.eq.s32.totalorder %s17, 1
    %p77 = por %p75, %p76
    %p78 = scmp.ne.s32.totalorder %s69, %s70
    %p79 = scmp.eq.s32.totalorder %s17, 0
    %p80 = por %p78, %p79
    %p81 = scmp.ne.s32.totalorder %s69, %s70
    %p82 = scmp.eq.s32.totalorder %s18, 1
    %p83 = por %p81, %p82
    %p85 = scmp.ne.s32.totalorder %s70, %s84
    %p86 = scmp.eq.s32.totalorder %s18, 0
    %p87 = por %p85, %p86
    %s89 = sadd.s32 %s88, 1
    %p92 = scmp.eq.s32.totalorder %s12, 1
    %p93 = scmp.ne.s32.totalorder %s88, %s90
    %p94 = scmp.eq.s32.totalorder %s12, 0
    %p95 = por %p93, %p94
    %p96 = scmp.ne.s32.totalorder %s88, %s90
    %p97 = scmp.eq.s32.totalorder %s17, 1
    %p98 = por %p96, %p97
    %p99 = scmp.ne.s32.totalorder %s90, %s91
    %p100 = scmp.eq.s32.totalorder %s17, 0
    %p101 = por %p99, %p100
    %p102 = scmp.ne.s32.totalorder %s90, %s91
    %p103 = scmp.eq.s32.totalorder %s18, 1
    %p104 = por %p102, %p103
    %p106 = scmp.ne.s32.totalorder %s91, %s105
    %p107 = scmp.eq.s32.totalorder %s18, 0
    %p108 = por %p106, %p107
    %s109 = ssub.s32 %s12, %s19
    %p110 = scmp.eq.s32.totalorder %s109, 0
    %s112 = sadd.s32 %s111, 1
    %s113 = scalar_select %p110, %s111, %s112
    %p116 = pneg %p110
    %p117 = scmp.eq.s32.totalorder %s12, 1
    %p118 = por %p116, %p117
    %p119 = scmp.ne.s32.totalorder %s111, %s114
    %p120 = scmp.eq.s32.totalorder %s12, 0
    %p121 = por %p119, %p120
    %p122 = scmp.ne.s32.totalorder %s111, %s114
    %p123 = scmp.eq.s32.totalorder %s17, 1
    %p124 = por %p122, %p123
    %p125 = scmp.ne.s32.totalorder %s114, %s115
    %p126 = scmp.eq.s32.totalorder %s17, 0
    %p127 = por %p125, %p126
    %p128 = scmp.ne.s32.totalorder %s114, %s115
    %p129 = scmp.eq.s32.totalorder %s18, 1
    %p130 = por %p128, %p129
    %p132 = scmp.ne.s32.totalorder %s115, %s131
    %p133 = scmp.eq.s32.totalorder %s18, 0
    %p134 = por %p132, %p133
    %s135 = ssub.s32 %s12, %s19
    %p136 = scmp.eq.s32.totalorder %s135, 0
    %s138 = sadd.s32 %s137, 1
    %s139 = scalar_select %p136, %s137, %s138
    %p142 = pneg %p136
    %p143 = scmp.eq.s32.totalorder %s12, 1
    %p144 = por %p142, %p143
    %p145 = scmp.ne.s32.totalorder %s137, %s140
    %p146 = scmp.eq.s32.totalorder %s12, 0
    %p147 = por %p145, %p146
    %p148 = scmp.ne.s32.totalorder %s137, %s140
    %p149 = scmp.eq.s32.totalorder %s17, 1
    %p150 = por %p148, %p149
    %p151 = scmp.ne.s32.totalorder %s140, %s141
    %p152 = scmp.eq.s32.totalorder %s17, 0
    %p153 = por %p151, %p152
    %p154 = scmp.ne.s32.totalorder %s140, %s141
    %p155 = scmp.eq.s32.totalorder %s18, 1
    %p156 = por %p154, %p155
    %p158 = scmp.ne.s32.totalorder %s141, %s157
    %p159 = scmp.eq.s32.totalorder %s18, 0
    %p160 = por %p158, %p159
    %p161 = scmp.le.s32.totalorder 1, %s12
    %p162 = scmp.lt.s32.totalorder %s12, 3
    %p163 = pnand %p161, %p162
    %p164 = pneg %p163
    // Predicated region
    $region9: #{basic_block_forward.4} parent=5 // pred_check
      _
    $region10: #{basic_block_forward.4} parent=5 // pred_check_branch
      %166 = sbr.rel (%p163) target = $region12
    $region11: #{basic_block_forward.4} parent=5 // pred_region
      %s167 = ssub.s32 %s12, 1
      // Predicated region
      $region13: #{basic_block_forward.4} parent=11 // pred_check
        %p168 = pneg %p59
      $region14: #{basic_block_forward.4} parent=11 // pred_check_branch
        %170 = sbr.rel (%p168) target = $region16
      $region15: #{basic_block_forward.4} parent=11 // pred_region
        _
      $region16: #{basic_block_forward.4} parent=11 // pred_fallthru
        _
      // Predicated region
      $region17: #{basic_block_forward.4} parent=11 // pred_check
        %p171 = pneg %p80
      $region18: #{basic_block_forward.4} parent=11 // pred_check_branch
        %173 = sbr.rel (%p171) target = $region20
      $region19: #{basic_block_forward.4} parent=11 // pred_region
        _
      $region20: #{basic_block_forward.4} parent=11 // pred_fallthru
        _
      // Predicated region
      $region21: #{basic_block_forward.4} parent=11 // pred_check
        %p174 = pneg %p101
      $region22: #{basic_block_forward.4} parent=11 // pred_check_branch
        %176 = sbr.rel (%p174) target = $region24
      $region23: #{basic_block_forward.4} parent=11 // pred_region
        _
      $region24: #{basic_block_forward.4} parent=11 // pred_fallthru
        _
    $region12: #{basic_block_forward.4} parent=5 // pred_fallthru
      _
    %p177 = scmp.lt.s32.totalorder %s12, 2
    // Predicated region
    $region25: #{basic_block_forward.4} parent=5 // pred_check
      %p178 = pneg %p177
    $region26: #{basic_block_forward.4} parent=5 // pred_check_branch
      %180 = sbr.rel (%p178) target = $region28
    $region27: #{basic_block_forward.4} parent=5 // pred_region
      // Predicated region
      $region29: #{basic_block_forward.4} parent=27 // pred_check
        %p181 = pneg %p32
      $region30: #{basic_block_forward.4} parent=27 // pred_check_branch
        %183 = sbr.rel (%p181) target = $region32
      $region31: #{basic_block_forward.4} parent=27 // pred_region
        %p184 = scmp.lt.s32.totalorder %s12, 1
        %s185 = scalar_select %p184, %s12, 1
        %s186 = smul.addr %s185, 8
        %s187 = smul.addr %s186, 8
        %s188 = scalar_lea.vmem %s0, %s187
      $region32: #{basic_block_forward.4} parent=27 // pred_fallthru
        _
    $region28: #{basic_block_forward.4} parent=5 // pred_fallthru
      _
    %p189 = scmp.le.s32.totalorder 1, %s12
    %p190 = scmp.lt.s32.totalorder %s12, 3
    %p191 = pnand %p189, %p190
    %p192 = pneg %p191
    // Predicated region
    $region33: #{basic_block_forward.4} parent=5 // pred_check
      _
    $region34: #{basic_block_forward.4} parent=5 // pred_check_branch
      %194 = sbr.rel (%p191) target = $region36
    $region35: #{basic_block_forward.4} parent=5 // pred_region
      %s195 = ssub.s32 %s12, 1
      %p196 = scmp.lt.s32.totalorder %s17, 1
      %s197 = scalar_select %p196, %s17, 1
      %s198 = smul.addr %s197, 8
      %s199 = smul.addr %s198, 8
      %s200 = scalar_lea.vmem %s0, %s199
      %p201 = pneg %p38
      %p202 = pneg %p35
      %p203 = pneg %p59
      %p204 = pneg %p56
      %p205 = pneg %p80
      %p206 = pneg %p77
      %p207 = pneg %p101
      %p208 = pneg %p98
      %p209 = pneg %p127
      %p210 = pneg %p124
      %p211 = scmp.lt.s32.totalorder %s17, 1
      %s212 = scalar_select %p211, %s17, 1
      %s213 = smul.addr %s212, 8
      %s214 = smul.addr %s213, 8
      %s215 = scalar_lea.vmem %s4, %s214
      %p216 = pneg %p153
      %p217 = pneg %p150
      %p218 = scmp.lt.s32.totalorder %s17, 1
      %s219 = scalar_select %p218, %s17, 1
      %s220 = smul.addr %s219, 2
      %s221 = scalar_lea.vmem %s5, %s220
      %p222 = scmp.lt.s32.totalorder %s17, 1
      %s223 = scalar_select %p222, %s17, 1
      %s224 = smul.addr %s223, 8
      %s225 = smul.addr %s224, 8
      %s226 = scalar_lea.vmem %s0, %s225
      %p227 = scmp.lt.s32.totalorder %s17, 1
      %s228 = scalar_select %p227, %s17, 1
      %s229 = smul.addr %s228, 8
      %s230 = smul.addr %s229, 8
      %s231 = scalar_lea.vmem %s4, %s230
      %p232 = scmp.lt.s32.totalorder %s17, 1
      %s233 = scalar_select %p232, %s17, 1
      %s234 = smul.addr %s233, 2
      %s235 = scalar_lea.vmem %s5, %s234
      %v236 = vld [vmem:[%s226] sm:$0xff]
      %v237 = vld [vmem:[%s226 + $0x8] sm:$0xff]
      %v238 = vld [vmem:[%s226 + $0x10] sm:$0xff]
      %v239 = vld [vmem:[%s226 + $0x18] sm:$0xff]
      %v240 = vld [vmem:[%s226 + $0x20] sm:$0xff]
      %v241 = vld [vmem:[%s226 + $0x28] sm:$0xff]
      %v242 = vld [vmem:[%s226 + $0x30] sm:$0xff]
      %v243 = vld [vmem:[%s226 + $0x38] sm:$0xff]
      %v244 = vld [vmem:[%s2] sm:$0x1]
      %v246 = vlaneseq
      %v247 = vshrl.u32 %v246, 7
      %v248 = vsub.s32 0, %v247
      %v249 = vrot.slane %v244, %v248
      %v251 = vmul.f32 %v236, %v249
      %v252 = vmul.f32 %v237, %v249
      %v253 = vmul.f32 %v238, %v249
      %v254 = vmul.f32 %v239, %v249
      %v255 = vmul.f32 %v240, %v249
      %v256 = vmul.f32 %v241, %v249
      %v257 = vmul.f32 %v242, %v249
      %v258 = vmul.f32 %v243, %v249
      %v259 = vld [vmem:[%s3] sm:$0x1]
      %v261 = vlaneseq
      %v262 = vshrl.u32 %v261, 7
      %v263 = vsub.s32 0, %v262
      %v264 = vrot.slane %v259, %v263
      %v266 = vadd.f32 %v251, %v264
      %v267 = vadd.f32 %v252, %v264
      %v268 = vadd.f32 %v253, %v264
      %v269 = vadd.f32 %v254, %v264
      %v270 = vadd.f32 %v255, %v264
      %v271 = vadd.f32 %v256, %v264
      %v272 = vadd.f32 %v257, %v264
      %v273 = vadd.f32 %v258, %v264
      %v274 = vmax.f32 %v266, 0.0
      %v275 = vmax.f32 %v267, 0.0
      %v276 = vmax.f32 %v268, 0.0
      %v277 = vmax.f32 %v269, 0.0
      %v278 = vmax.f32 %v270, 0.0
      %v279 = vmax.f32 %v271, 0.0
      %v280 = vmax.f32 %v272, 0.0
      %v281 = vmax.f32 %v273, 0.0
      %282 = vst [vmem:[#allocation2] sm:$0xff] 0.0
      %283 = vst [vmem:[#allocation2 + $0x8] sm:$0x3] 0.0
      %284 = vst [vmem:[#allocation2 + $0x10] sm:$0xff] 0.0
      %285 = vst [vmem:[#allocation2 + $0x18] sm:$0x3] 0.0
      %286 = vst [vmem:[#allocation2 + $0x20] sm:$0xff] 0.0
      %287 = vst [vmem:[#allocation2 + $0x28] sm:$0x3] 0.0
      %288 = vst [vmem:[#allocation2 + $0x30] sm:$0xff] 0.0
      %289 = vst [vmem:[#allocation2 + $0x38] sm:$0x3] 0.0
      %290 = vst [vmem:[#allocation2 + $0x40] sm:$0xff] 0.0
      %291 = vst [vmem:[#allocation2 + $0x48] sm:$0x3] 0.0
      %292 = vst [vmem:[#allocation2 + $0x50] sm:$0xff] 0.0
      %293 = vst [vmem:[#allocation2 + $0x58] sm:$0x3] 0.0
      %294 = vst [vmem:[#allocation2 + $0x60] sm:$0xff] 0.0
      %295 = vst [vmem:[#allocation2 + $0x68] sm:$0x3] 0.0
      %296 = vst [vmem:[#allocation2 + $0x70] sm:$0xff] 0.0
      %297 = vst [vmem:[#allocation2 + $0x78] sm:$0x3] 0.0
      %298 = vst [vmem:[#allocation2 + $0x80] sm:$0xff] 0.0
      %299 = vst [vmem:[#allocation2 + $0x88] sm:$0x3] 0.0
      %300 = vst [vmem:[#allocation2 + $0x90] sm:$0xff] 0.0
      %301 = vst [vmem:[#allocation2 + $0x98] sm:$0x3] 0.0
      %s302 = scalar_lea.vmem [#allocation2], 16
      %303 = vst [vmem:[%s302 + $0x1] sm:$0xff] %v274
      %304 = vst [vmem:[%s302 + $0x11] sm:$0xff] %v275
      %305 = vst [vmem:[%s302 + $0x21] sm:$0xff] %v276
      %306 = vst [vmem:[%s302 + $0x31] sm:$0xff] %v277
      %307 = vst [vmem:[%s302 + $0x41] sm:$0xff] %v278
      %308 = vst [vmem:[%s302 + $0x51] sm:$0xff] %v279
      %309 = vst [vmem:[%s302 + $0x61] sm:$0xff] %v280
      %310 = vst [vmem:[%s302 + $0x71] sm:$0xff] %v281
      %v311 = vld [vmem:[#allocation2] sm:$0xff]
      %v312 = vld [vmem:[#allocation2 + $0x10] sm:$0xff]
      %v313 = vld [vmem:[#allocation2 + $0x20] sm:$0xff]
      %v314 = vld [vmem:[#allocation2 + $0x30] sm:$0xff]
      %v315 = vld [vmem:[#allocation2 + $0x40] sm:$0xff]
      %v316 = vld [vmem:[#allocation2 + $0x50] sm:$0xff]
      %v317 = vld [vmem:[#allocation2 + $0x60] sm:$0xff]
      %v318 = vld [vmem:[#allocation2 + $0x70] sm:$0xff]
      %v319 = vld [vmem:[%s1] sm:$0xff]
      %v320 = vld [vmem:[%s1 + $0x8] sm:$0xff]
      %v321 = vld [vmem:[%s1 + $0x10] sm:$0xff]
      %v322 = vld [vmem:[%s1 + $0x18] sm:$0xff]
      %v323 = vld [vmem:[%s1 + $0x20] sm:$0xff]
      %v324 = vld [vmem:[%s1 + $0x28] sm:$0xff]
      %v325 = vld [vmem:[%s1 + $0x30] sm:$0xff]
      %v326 = vld [vmem:[%s1 + $0x38] sm:$0xff]
      %v327 = vld [vmem:[%s1 + $0x40] sm:$0xff]
      %v328 = vld [vmem:[%s1 + $0x48] sm:$0xff]
      %v329 = vld [vmem:[%s1 + $0x50] sm:$0xff]
      %v330 = vld [vmem:[%s1 + $0x58] sm:$0xff]
      %v331 = vld [vmem:[%s1 + $0x60] sm:$0xff]
      %v332 = vld [vmem:[%s1 + $0x68] sm:$0xff]
      %v333 = vld [vmem:[%s1 + $0x70] sm:$0xff]
      %v334 = vld [vmem:[%s1 + $0x78] sm:$0xff]
      %v335 = vld [vmem:[#allocation2 + $0x1] sm:$0xff]
      %v336 = vld [vmem:[#allocation2 + $0x11] sm:$0xff]
      %v337 = vld [vmem:[#allocation2 + $0x21] sm:$0xff]
      %v338 = vld [vmem:[#allocation2 + $0x31] sm:$0xff]
      %v339 = vld [vmem:[#allocation2 + $0x41] sm:$0xff]
      %v340 = vld [vmem:[#allocation2 + $0x51] sm:$0xff]
      %v341 = vld [vmem:[#allocation2 + $0x61] sm:$0xff]
      %v342 = vld [vmem:[#allocation2 + $0x71] sm:$0xff]
      %s343 = scalar_lea.vmem %s1, 128
      %v344 = vld [vmem:[%s343] sm:$0xff]
      %v345 = vld [vmem:[%s343 + $0x8] sm:$0xff]
      %v346 = vld [vmem:[%s343 + $0x10] sm:$0xff]
      %v347 = vld [vmem:[%s343 + $0x18] sm:$0xff]
      %v348 = vld [vmem:[%s343 + $0x20] sm:$0xff]
      %v349 = vld [vmem:[%s343 + $0x28] sm:$0xff]
      %v350 = vld [vmem:[%s343 + $0x30] sm:$0xff]
      %v351 = vld [vmem:[%s343 + $0x38] sm:$0xff]
      %v352 = vld [vmem:[%s343 + $0x40] sm:$0xff]
      %v353 = vld [vmem:[%s343 + $0x48] sm:$0xff]
      %v354 = vld [vmem:[%s343 + $0x50] sm:$0xff]
      %v355 = vld [vmem:[%s343 + $0x58] sm:$0xff]
      %v356 = vld [vmem:[%s343 + $0x60] sm:$0xff]
      %v357 = vld [vmem:[%s343 + $0x68] sm:$0xff]
      %v358 = vld [vmem:[%s343 + $0x70] sm:$0xff]
      %v359 = vld [vmem:[%s343 + $0x78] sm:$0xff]
      %360 = vmatprep.subr.mxu0 0.0
      %361 = vmatpush1.msra.mxu0 %v344
      %362 = vmatprep.subr.mxu0 0.0
      %363 = vmatpush1.msra.mxu0 %v345
      %364 = vmatprep.subr.mxu0 0.0
      %365 = vmatpush1.msra.mxu0 %v346
      %366 = vmatprep.subr.mxu0 0.0
      %367 = vmatpush1.msra.mxu0 %v347
      %368 = vmatprep.subr.mxu0 0.0
      %369 = vmatpush1.msra.mxu0 %v348
      %370 = vmatprep.subr.mxu0 0.0
      %371 = vmatpush1.msra.mxu0 %v349
      %372 = vmatprep.subr.mxu0 0.0
      %373 = vmatpush1.msra.mxu0 %v350
      %374 = vmatprep.subr.mxu0 0.0
      %375 = vmatpush1.msra.mxu0 %v351
      %376 = vmatprep.subr.mxu0 0.0
      %377 = vmatpush1.msra.mxu0 %v352
      %378 = vmatprep.subr.mxu0 0.0
      %379 = vmatpush1.msra.mxu0 %v353
      %380 = vmatprep.subr.mxu0 0.0
      %381 = vmatpush1.msra.mxu0 %v354
      %382 = vmatprep.subr.mxu0 0.0
      %383 = vmatpush1.msra.mxu0 %v355
      %384 = vmatprep.subr.mxu0 0.0
      %385 = vmatpush1.msra.mxu0 %v356
      %386 = vmatprep.subr.mxu0 0.0
      %387 = vmatpush1.msra.mxu0 %v357
      %388 = vmatprep.subr.mxu0 0.0
      %389 = vmatpush1.msra.mxu0 %v358
      %390 = vmatprep.subr.mxu0 0.0
      %391 = vmatpush1.msra.mxu0 %v359
      %392 = vmatprep.subr.mxu0 0.0
      %393 = vmatpush1.msra.mxu0 0.0
      %394 = vmatprep.subr.mxu0 0.0
      %395 = vmatpush1.msra.mxu0 0.0
      %396 = vmatprep.subr.mxu0 0.0
      %397 = vmatpush1.msra.mxu0 0.0
      %398 = vmatprep.subr.mxu0 0.0
      %399 = vmatpush1.msra.mxu0 0.0
      %400 = vmatprep.subr.mxu0 0.0
      %401 = vmatpush1.msra.mxu0 0.0
      %402 = vmatprep.subr.mxu0 0.0
      %403 = vmatpush1.msra.mxu0 0.0
      %404 = vmatprep.subr.mxu0 0.0
      %405 = vmatpush1.msra.mxu0 0.0
      %406 = vmatprep.subr.mxu0 0.0
      %407 = vmatpush1.msra.mxu0 0.0
      %408 = vmatprep.subr.mxu0 0.0
      %409 = vmatpush1.msra.mxu0 0.0
      %410 = vmatprep.subr.mxu0 0.0
      %411 = vmatpush1.msra.mxu0 0.0
      %412 = vmatprep.subr.mxu0 0.0
      %413 = vmatpush1.msra.mxu0 0.0
      %414 = vmatprep.subr.mxu0 0.0
      %415 = vmatpush1.msra.mxu0 0.0
      %416 = vmatprep.subr.mxu0 0.0
      %417 = vmatpush1.msra.mxu0 0.0
      %418 = vmatprep.subr.mxu0 0.0
      %419 = vmatpush1.msra.mxu0 0.0
      %420 = vmatprep.subr.mxu0 0.0
      %421 = vmatpush1.msra.mxu0 0.0
      %422 = vmatprep.subr.mxu0 0.0
      %423 = vmatpush1.msra.mxu0 0.0
      %424 = vmatprep.mubr.f32.mxu0 0.0
      %425 = vmatmul.mubr.f32.gmra.mrb[0].mxu0 %v335
      %v426 = vpop.f32.mrb[0].mxu0
      %v427 = vadd.f32 0.0, %v426
      %v428 = vpop.f32.mrb[0].mxu0
      %429 = vmatprep.mubr.f32.mxu0 0.0
      %430 = vmatmul.mubr.f32.gmra.mrb[0].mxu0 %v336
      %v431 = vpop.f32.mrb[0].mxu0
      %v432 = vadd.f32 0.0, %v431
      %v433 = vpop.f32.mrb[0].mxu0
      %434 = vmatprep.mubr.f32.mxu0 0.0
      %435 = vmatmul.mubr.f32.gmra.mrb[0].mxu0 %v337
      %v436 = vpop.f32.mrb[0].mxu0
      %v437 = vadd.f32 0.0, %v436
      %v438 = vpop.f32.mrb[0].mxu0
      %439 = vmatprep.mubr.f32.mxu0 0.0
      %440 = vmatmul.mubr.f32.gmra.mrb[0].mxu0 %v338
      %v441 = vpop.f32.mrb[0].mxu0
      %v442 = vadd.f32 0.0, %v441
      %v443 = vpop.f32.mrb[0].mxu0
      %444 = vmatprep.mubr.f32.mxu0 0.0
      %445 = vmatmul.mubr.f32.gmra.mrb[0].mxu0 %v339
      %v446 = vpop.f32.mrb[0].mxu0
      %v447 = vadd.f32 0.0, %v446
      %v448 = vpop.f32.mrb[0].mxu0
      %449 = vmatprep.mubr.f32.mxu0 0.0
      %450 = vmatmul.mubr.f32.gmra.mrb[0].mxu0 %v340
      %v451 = vpop.f32.mrb[0].mxu0
      %v452 = vadd.f32 0.0, %v451
      %v453 = vpop.f32.mrb[0].mxu0
      %454 = vmatprep.mubr.f32.mxu0 0.0
      %455 = vmatmul.mubr.f32.gmra.mrb[0].mxu0 %v341
      %v456 = vpop.f32.mrb[0].mxu0
      %v457 = vadd.f32 0.0, %v456
      %v458 = vpop.f32.mrb[0].mxu0
      %459 = vmatprep.mubr.f32.mxu0 0.0
      %460 = vmatmul.mubr.f32.gmra.mrb[0].mxu0 %v342
      %v461 = vpop.f32.mrb[0].mxu0
      %v462 = vadd.f32 0.0, %v461
      %v463 = vpop.f32.mrb[0].mxu0
      %464 = vdwg.mxu0
      %465 = vmatprep.subr.mxu0 0.0
      %466 = vmatpush1.msra.mxu0 %v319
      %467 = vmatprep.subr.mxu0 0.0
      %468 = vmatpush1.msra.mxu0 %v320
      %469 = vmatprep.subr.mxu0 0.0
      %470 = vmatpush1.msra.mxu0 %v321
      %471 = vmatprep.subr.mxu0 0.0
      %472 = vmatpush1.msra.mxu0 %v322
      %473 = vmatprep.subr.mxu0 0.0
      %474 = vmatpush1.msra.mxu0 %v323
      %475 = vmatprep.subr.mxu0 0.0
      %476 = vmatpush1.msra.mxu0 %v324
      %477 = vmatprep.subr.mxu0 0.0
      %478 = vmatpush1.msra.mxu0 %v325
      %479 = vmatprep.subr.mxu0 0.0
      %480 = vmatpush1.msra.mxu0 %v326
      %481 = vmatprep.subr.mxu0 0.0
      %482 = vmatpush1.msra.mxu0 %v327
      %483 = vmatprep.subr.mxu0 0.0
      %484 = vmatpush1.msra.mxu0 %v328
      %485 = vmatprep.subr.mxu0 0.0
      %486 = vmatpush1.msra.mxu0 %v329
      %487 = vmatprep.subr.mxu0 0.0
      %488 = vmatpush1.msra.mxu0 %v330
      %489 = vmatprep.subr.mxu0 0.0
      %490 = vmatpush1.msra.mxu0 %v331
      %491 = vmatprep.subr.mxu0 0.0
      %492 = vmatpush1.msra.mxu0 %v332
      %493 = vmatprep.subr.mxu0 0.0
      %494 = vmatpush1.msra.mxu0 %v333
      %495 = vmatprep.subr.mxu0 0.0
      %496 = vmatpush1.msra.mxu0 %v334
      %497 = vmatprep.subr.mxu0 0.0
      %498 = vmatpush1.msra.mxu0 0.0
      %499 = vmatprep.subr.mxu0 0.0
      %500 = vmatpush1.msra.mxu0 0.0
      %501 = vmatprep.subr.mxu0 0.0
      %502 = vmatpush1.msra.mxu0 0.0
      %503 = vmatprep.subr.mxu0 0.0
      %504 = vmatpush1.msra.mxu0 0.0
      %505 = vmatprep.subr.mxu0 0.0
      %506 = vmatpush1.msra.mxu0 0.0
      %507 = vmatprep.subr.mxu0 0.0
      %508 = vmatpush1.msra.mxu0 0.0
      %509 = vmatprep.subr.mxu0 0.0
      %510 = vmatpush1.msra.mxu0 0.0
      %511 = vmatprep.subr.mxu0 0.0
      %512 = vmatpush1.msra.mxu0 0.0
      %513 = vmatprep.subr.mxu0 0.0
      %514 = vmatpush1.msra.mxu0 0.0
      %515 = vmatprep.subr.mxu0 0.0
      %516 = vmatpush1.msra.mxu0 0.0
      %517 = vmatprep.subr.mxu0 0.0
      %518 = vmatpush1.msra.mxu0 0.0
      %519 = vmatprep.subr.mxu0 0.0
      %520 = vmatpush1.msra.mxu0 0.0
      %521 = vmatprep.subr.mxu0 0.0
      %522 = vmatpush1.msra.mxu0 0.0
      %523 = vmatprep.subr.mxu0 0.0
      %524 = vmatpush1.msra.mxu0 0.0
      %525 = vmatprep.subr.mxu0 0.0
      %526 = vmatpush1.msra.mxu0 0.0
      %527 = vmatprep.subr.mxu0 0.0
      %528 = vmatpush1.msra.mxu0 0.0
      %529 = vmatprep.mubr.f32.mxu0 0.0
      %530 = vmatmul.mubr.f32.gmra.mrb[0].mxu0 %v311
      %v531 = vpop.f32.mrb[0].mxu0
      %v532 = vadd.f32 %v427, %v531
      %v533 = vpop.f32.mrb[0].mxu0
      %534 = vmatprep.mubr.f32.mxu0 0.0
      %535 = vmatmul.mubr.f32.gmra.mrb[0].mxu0 %v312
      %v536 = vpop.f32.mrb[0].mxu0
      %v537 = vadd.f32 %v432, %v536
      %v538 = vpop.f32.mrb[0].mxu0
      %539 = vmatprep.mubr.f32.mxu0 0.0
      %540 = vmatmul.mubr.f32.gmra.mrb[0].mxu0 %v313
      %v541 = vpop.f32.mrb[0].mxu0
      %v542 = vadd.f32 %v437, %v541
      %v543 = vpop.f32.mrb[0].mxu0
      %544 = vmatprep.mubr.f32.mxu0 0.0
      %545 = vmatmul.mubr.f32.gmra.mrb[0].mxu0 %v314
      %v546 = vpop.f32.mrb[0].mxu0
      %v547 = vadd.f32 %v442, %v546
      %v548 = vpop.f32.mrb[0].mxu0
      %549 = vmatprep.mubr.f32.mxu0 0.0
      %550 = vmatmul.mubr.f32.gmra.mrb[0].mxu0 %v315
      %v551 = vpop.f32.mrb[0].mxu0
      %v552 = vadd.f32 %v447, %v551
      %v553 = vpop.f32.mrb[0].mxu0
      %554 = vmatprep.mubr.f32.mxu0 0.0
      %555 = vmatmul.mubr.f32.gmra.mrb[0].mxu0 %v316
      %v556 = vpop.f32.mrb[0].mxu0
      %v557 = vadd.f32 %v452, %v556
      %v558 = vpop.f32.mrb[0].mxu0
      %559 = vmatprep.mubr.f32.mxu0 0.0
      %560 = vmatmul.mubr.f32.gmra.mrb[0].mxu0 %v317
      %v561 = vpop.f32.mrb[0].mxu0
      %v562 = vadd.f32 %v457, %v561
      %v563 = vpop.f32.mrb[0].mxu0
      %564 = vmatprep.mubr.f32.mxu0 0.0
      %565 = vmatmul.mubr.f32.gmra.mrb[0].mxu0 %v318
      %v566 = vpop.f32.mrb[0].mxu0
      %v567 = vadd.f32 %v462, %v566
      %v568 = vpop.f32.mrb[0].mxu0
      %569 = vdwg.mxu0
      %v570 = vld [vmem:[#allocation2 + $0x2] sm:$0xff]
      %v571 = vld [vmem:[#allocation2 + $0x12] sm:$0xff]
      %v572 = vld [vmem:[#allocation2 + $0x22] sm:$0xff]
      %v573 = vld [vmem:[#allocation2 + $0x32] sm:$0xff]
      %v574 = vld [vmem:[#allocation2 + $0x42] sm:$0xff]
      %v575 = vld [vmem:[#allocation2 + $0x52] sm:$0xff]
      %v576 = vld [vmem:[#allocation2 + $0x62] sm:$0xff]
      %v577 = vld [vmem:[#allocation2 + $0x72] sm:$0xff]
      %s578 = scalar_lea.vmem %s1, 256
      %v579 = vld [vmem:[%s578] sm:$0xff]
      %v580 = vld [vmem:[%s578 + $0x8] sm:$0xff]
      %v581 = vld [vmem:[%s578 + $0x10] sm:$0xff]
      %v582 = vld [vmem:[%s578 + $0x18] sm:$0xff]
      %v583 = vld [vmem:[%s578 + $0x20] sm:$0xff]
      %v584 = vld [vmem:[%s578 + $0x28] sm:$0xff]
      %v585 = vld [vmem:[%s578 + $0x30] sm:$0xff]
      %v586 = vld [vmem:[%s578 + $0x38] sm:$0xff]
      %v587 = vld [vmem:[%s578 + $0x40] sm:$0xff]
      %v588 = vld [vmem:[%s578 + $0x48] sm:$0xff]
      %v589 = vld [vmem:[%s578 + $0x50] sm:$0xff]
      %v590 = vld [vmem:[%s578 + $0x58] sm:$0xff]
      %v591 = vld [vmem:[%s578 + $0x60] sm:$0xff]
      %v592 = vld [vmem:[%s578 + $0x68] sm:$0xff]
      %v593 = vld [vmem:[%s578 + $0x70] sm:$0xff]
      %v594 = vld [vmem:[%s578 + $0x78] sm:$0xff]
      %595 = vmatprep.subr.mxu0 0.0
      %596 = vmatpush1.msra.mxu0 %v579
      %597 = vmatprep.subr.mxu0 0.0
      %598 = vmatpush1.msra.mxu0 %v580
      %599 = vmatprep.subr.mxu0 0.0
      %600 = vmatpush1.msra.mxu0 %v581
      %601 = vmatprep.subr.mxu0 0.0
      %602 = vmatpush1.msra.mxu0 %v582
      %603 = vmatprep.subr.mxu0 0.0
      %604 = vmatpush1.msra.mxu0 %v583
      %605 = vmatprep.subr.mxu0 0.0
      %606 = vmatpush1.msra.mxu0 %v584
      %607 = vmatprep.subr.mxu0 0.0
      %608 = vmatpush1.msra.mxu0 %v585
      %609 = vmatprep.subr.mxu0 0.0
      %610 = vmatpush1.msra.mxu0 %v586
      %611 = vmatprep.subr.mxu0 0.0
      %612 = vmatpush1.msra.mxu0 %v587
      %613 = vmatprep.subr.mxu0 0.0
      %614 = vmatpush1.msra.mxu0 %v588
      %615 = vmatprep.subr.mxu0 0.0
      %616 = vmatpush1.msra.mxu0 %v589
      %617 = vmatprep.subr.mxu0 0.0
      %618 = vmatpush1.msra.mxu0 %v590
      %619 = vmatprep.subr.mxu0 0.0
      %620 = vmatpush1.msra.mxu0 %v591
      %621 = vmatprep.subr.mxu0 0.0
      %622 = vmatpush1.msra.mxu0 %v592
      %623 = vmatprep.subr.mxu0 0.0
      %624 = vmatpush1.msra.mxu0 %v593
      %625 = vmatprep.subr.mxu0 0.0
      %626 = vmatpush1.msra.mxu0 %v594
      %627 = vmatprep.subr.mxu0 0.0
      %628 = vmatpush1.msra.mxu0 0.0
      %629 = vmatprep.subr.mxu0 0.0
      %630 = vmatpush1.msra.mxu0 0.0
      %631 = vmatprep.subr.mxu0 0.0
      %632 = vmatpush1.msra.mxu0 0.0
      %633 = vmatprep.subr.mxu0 0.0
      %634 = vmatpush1.msra.mxu0 0.0
      %635 = vmatprep.subr.mxu0 0.0
      %636 = vmatpush1.msra.mxu0 0.0
      %637 = vmatprep.subr.mxu0 0.0
      %638 = vmatpush1.msra.mxu0 0.0
      %639 = vmatprep.subr.mxu0 0.0
      %640 = vmatpush1.msra.mxu0 0.0
      %641 = vmatprep.subr.mxu0 0.0
      %642 = vmatpush1.msra.mxu0 0.0
      %643 = vmatprep.subr.mxu0 0.0
      %644 = vmatpush1.msra.mxu0 0.0
      %645 = vmatprep.subr.mxu0 0.0
      %646 = vmatpush1.msra.mxu0 0.0
      %647 = vmatprep.subr.mxu0 0.0
      %648 = vmatpush1.msra.mxu0 0.0
      %649 = vmatprep.subr.mxu0 0.0
      %650 = vmatpush1.msra.mxu0 0.0
      %651 = vmatprep.subr.mxu0 0.0
      %652 = vmatpush1.msra.mxu0 0.0
      %653 = vmatprep.subr.mxu0 0.0
      %654 = vmatpush1.msra.mxu0 0.0
      %655 = vmatprep.subr.mxu0 0.0
      %656 = vmatpush1.msra.mxu0 0.0
      %657 = vmatprep.subr.mxu0 0.0
      %658 = vmatpush1.msra.mxu0 0.0
      %659 = vmatprep.mubr.f32.mxu0 0.0
      %660 = vmatmul.mubr.f32.gmra.mrb[0].mxu0 %v570
      %v661 = vpop.f32.mrb[0].mxu0
      %v662 = vadd.f32 0.0, %v661
      %v663 = vpop.f32.mrb[0].mxu0
      %664 = vmatprep.mubr.f32.mxu0 0.0
      %665 = vmatmul.mubr.f32.gmra.mrb[0].mxu0 %v571
      %v666 = vpop.f32.mrb[0].mxu0
      %v667 = vadd.f32 0.0, %v666
      %v668 = vpop.f32.mrb[0].mxu0
      %669 = vmatprep.mubr.f32.mxu0 0.0
      %670 = vmatmul.mubr.f32.gmra.mrb[0].mxu0 %v572
      %v671 = vpop.f32.mrb[0].mxu0
      %v672 = vadd.f32 0.0, %v671
      %v673 = vpop.f32.mrb[0].mxu0
      %674 = vmatprep.mubr.f32.mxu0 0.0
      %675 = vmatmul.mubr.f32.gmra.mrb[0].mxu0 %v573
      %v676 = vpop.f32.mrb[0].mxu0
      %v677 = vadd.f32 0.0, %v676
      %v678 = vpop.f32.mrb[0].mxu0
      %679 = vmatprep.mubr.f32.mxu0 0.0
      %680 = vmatmul.mubr.f32.gmra.mrb[0].mxu0 %v574
      %v681 = vpop.f32.mrb[0].mxu0
      %v682 = vadd.f32 0.0, %v681
      %v683 = vpop.f32.mrb[0].mxu0
      %684 = vmatprep.mubr.f32.mxu0 0.0
      %685 = vmatmul.mubr.f32.gmra.mrb[0].mxu0 %v575
      %v686 = vpop.f32.mrb[0].mxu0
      %v687 = vadd.f32 0.0, %v686
      %v688 = vpop.f32.mrb[0].mxu0
      %689 = vmatprep.mubr.f32.mxu0 0.0
      %690 = vmatmul.mubr.f32.gmra.mrb[0].mxu0 %v576
      %v691 = vpop.f32.mrb[0].mxu0
      %v692 = vadd.f32 0.0, %v691
      %v693 = vpop.f32.mrb[0].mxu0
      %694 = vmatprep.mubr.f32.mxu0 0.0
      %695 = vmatmul.mubr.f32.gmra.mrb[0].mxu0 %v577
      %v696 = vpop.f32.mrb[0].mxu0
      %v697 = vadd.f32 0.0, %v696
      %v698 = vpop.f32.mrb[0].mxu0
      %699 = vdwg.mxu0
      %v700 = vadd.f32 %v532, %v662
      %v701 = vadd.f32 %v537, %v667
      %v702 = vadd.f32 %v542, %v672
      %v703 = vadd.f32 %v547, %v677
      %v704 = vadd.f32 %v552, %v682
      %v705 = vadd.f32 %v557, %v687
      %v706 = vadd.f32 %v562, %v692
      %v707 = vadd.f32 %v567, %v697
      %v708 = vld [vmem:[%s302] sm:$0xff]
      %v709 = vld [vmem:[%s302 + $0x10] sm:$0xff]
      %v710 = vld [vmem:[%s302 + $0x20] sm:$0xff]
      %v711 = vld [vmem:[%s302 + $0x30] sm:$0xff]
      %v712 = vld [vmem:[%s302 + $0x40] sm:$0xff]
      %v713 = vld [vmem:[%s302 + $0x50] sm:$0xff]
      %v714 = vld [vmem:[%s302 + $0x60] sm:$0xff]
      %v715 = vld [vmem:[%s302 + $0x70] sm:$0xff]
      %s716 = scalar_lea.vmem %s1, 384
      %v717 = vld [vmem:[%s716] sm:$0xff]
      %v718 = vld [vmem:[%s716 + $0x8] sm:$0xff]
      %v719 = vld [vmem:[%s716 + $0x10] sm:$0xff]
      %v720 = vld [vmem:[%s716 + $0x18] sm:$0xff]
      %v721 = vld [vmem:[%s716 + $0x20] sm:$0xff]
      %v722 = vld [vmem:[%s716 + $0x28] sm:$0xff]
      %v723 = vld [vmem:[%s716 + $0x30] sm:$0xff]
      %v724 = vld [vmem:[%s716 + $0x38] sm:$0xff]
      %v725 = vld [vmem:[%s716 + $0x40] sm:$0xff]
      %v726 = vld [vmem:[%s716 + $0x48] sm:$0xff]
      %v727 = vld [vmem:[%s716 + $0x50] sm:$0xff]
      %v728 = vld [vmem:[%s716 + $0x58] sm:$0xff]
      %v729 = vld [vmem:[%s716 + $0x60] sm:$0xff]
      %v730 = vld [vmem:[%s716 + $0x68] sm:$0xff]
      %v731 = vld [vmem:[%s716 + $0x70] sm:$0xff]
      %v732 = vld [vmem:[%s716 + $0x78] sm:$0xff]
      %733 = vmatprep.subr.mxu0 0.0
      %734 = vmatpush1.msra.mxu0 %v717
      %735 = vmatprep.subr.mxu0 0.0
      %736 = vmatpush1.msra.mxu0 %v718
      %737 = vmatprep.subr.mxu0 0.0
      %738 = vmatpush1.msra.mxu0 %v719
      %739 = vmatprep.subr.mxu0 0.0
      %740 = vmatpush1.msra.mxu0 %v720
      %741 = vmatprep.subr.mxu0 0.0
      %742 = vmatpush1.msra.mxu0 %v721
      %743 = vmatprep.subr.mxu0 0.0
      %744 = vmatpush1.msra.mxu0 %v722
      %745 = vmatprep.subr.mxu0 0.0
      %746 = vmatpush1.msra.mxu0 %v723
      %747 = vmatprep.subr.mxu0 0.0
      %748 = vmatpush1.msra.mxu0 %v724
      %749 = vmatprep.subr.mxu0 0.0
      %750 = vmatpush1.msra.mxu0 %v725
      %751 = vmatprep.subr.mxu0 0.0
      %752 = vmatpush1.msra.mxu0 %v726
      %753 = vmatprep.subr.mxu0 0.0
      %754 = vmatpush1.msra.mxu0 %v727
      %755 = vmatprep.subr.mxu0 0.0
      %756 = vmatpush1.msra.mxu0 %v728
      %757 = vmatprep.subr.mxu0 0.0
      %758 = vmatpush1.msra.mxu0 %v729
      %759 = vmatprep.subr.mxu0 0.0
      %760 = vmatpush1.msra.mxu0 %v730
      %761 = vmatprep.subr.mxu0 0.0
      %762 = vmatpush1.msra.mxu0 %v731
      %763 = vmatprep.subr.mxu0 0.0
      %764 = vmatpush1.msra.mxu0 %v732
      %765 = vmatprep.subr.mxu0 0.0
      %766 = vmatpush1.msra.mxu0 0.0
      %767 = vmatprep.subr.mxu0 0.0
      %768 = vmatpush1.msra.mxu0 0.0
      %769 = vmatprep.subr.mxu0 0.0
      %770 = vmatpush1.msra.mxu0 0.0
      %771 = vmatprep.subr.mxu0 0.0
      %772 = vmatpush1.msra.mxu0 0.0
      %773 = vmatprep.subr.mxu0 0.0
      %774 = vmatpush1.msra.mxu0 0.0
      %775 = vmatprep.subr.mxu0 0.0
      %776 = vmatpush1.msra.mxu0 0.0
      %777 = vmatprep.subr.mxu0 0.0
      %778 = vmatpush1.msra.mxu0 0.0
      %779 = vmatprep.subr.mxu0 0.0
      %780 = vmatpush1.msra.mxu0 0.0
      %781 = vmatprep.subr.mxu0 0.0
      %782 = vmatpush1.msra.mxu0 0.0
      %783 = vmatprep.subr.mxu0 0.0
      %784 = vmatpush1.msra.mxu0 0.0
      %785 = vmatprep.subr.mxu0 0.0
      %786 = vmatpush1.msra.mxu0 0.0
      %787 = vmatprep.subr.mxu0 0.0
      %788 = vmatpush1.msra.mxu0 0.0
      %789 = vmatprep.subr.mxu0 0.0
      %790 = vmatpush1.msra.mxu0 0.0
      %791 = vmatprep.subr.mxu0 0.0
      %792 = vmatpush1.msra.mxu0 0.0
      %793 = vmatprep.subr.mxu0 0.0
      %794 = vmatpush1.msra.mxu0 0.0
      %795 = vmatprep.subr.mxu0 0.0
      %796 = vmatpush1.msra.mxu0 0.0
      %797 = vmatprep.mubr.f32.mxu0 0.0
      %798 = vmatmul.mubr.f32.gmra.mrb[0].mxu0 %v708
      %v799 = vpop.f32.mrb[0].mxu0
      %v800 = vadd.f32 0.0, %v799
      %v801 = vpop.f32.mrb[0].mxu0
      %802 = vmatprep.mubr.f32.mxu0 0.0
      %803 = vmatmul.mubr.f32.gmra.mrb[0].mxu0 %v709
      %v804 = vpop.f32.mrb[0].mxu0
      %v805 = vadd.f32 0.0, %v804
      %v806 = vpop.f32.mrb[0].mxu0
      %807 = vmatprep.mubr.f32.mxu0 0.0
      %808 = vmatmul.mubr.f32.gmra.mrb[0].mxu0 %v710
      %v809 = vpop.f32.mrb[0].mxu0
      %v810 = vadd.f32 0.0, %v809
      %v811 = vpop.f32.mrb[0].mxu0
      %812 = vmatprep.mubr.f32.mxu0 0.0
      %813 = vmatmul.mubr.f32.gmra.mrb[0].mxu0 %v711
      %v814 = vpop.f32.mrb[0].mxu0
      %v815 = vadd.f32 0.0, %v814
      %v816 = vpop.f32.mrb[0].mxu0
      %817 = vmatprep.mubr.f32.mxu0 0.0
      %818 = vmatmul.mubr.f32.gmra.mrb[0].mxu0 %v712
      %v819 = vpop.f32.mrb[0].mxu0
      %v820 = vadd.f32 0.0, %v819
      %v821 = vpop.f32.mrb[0].mxu0
      %822 = vmatprep.mubr.f32.mxu0 0.0
      %823 = vmatmul.mubr.f32.gmra.mrb[0].mxu0 %v713
      %v824 = vpop.f32.mrb[0].mxu0
      %v825 = vadd.f32 0.0, %v824
      %v826 = vpop.f32.mrb[0].mxu0
      %827 = vmatprep.mubr.f32.mxu0 0.0
      %828 = vmatmul.mubr.f32.gmra.mrb[0].mxu0 %v714
      %v829 = vpop.f32.mrb[0].mxu0
      %v830 = vadd.f32 0.0, %v829
      %v831 = vpop.f32.mrb[0].mxu0
      %832 = vmatprep.mubr.f32.mxu0 0.0
      %833 = vmatmul.mubr.f32.gmra.mrb[0].mxu0 %v715
      %v834 = vpop.f32.mrb[0].mxu0
      %v835 = vadd.f32 0.0, %v834
      %v836 = vpop.f32.mrb[0].mxu0
      %837 = vdwg.mxu0
      %v838 = vadd.f32 %v700, %v800
      %v839 = vadd.f32 %v701, %v805
      %v840 = vadd.f32 %v702, %v810
      %v841 = vadd.f32 %v703, %v815
      %v842 = vadd.f32 %v704, %v820
      %v843 = vadd.f32 %v705, %v825
      %v844 = vadd.f32 %v706, %v830
      %v845 = vadd.f32 %v707, %v835
      %v846 = vld [vmem:[%s302 + $0x1] sm:$0xff]
      %v847 = vld [vmem:[%s302 + $0x11] sm:$0xff]
      %v848 = vld [vmem:[%s302 + $0x21] sm:$0xff]
      %v849 = vld [vmem:[%s302 + $0x31] sm:$0xff]
      %v850 = vld [vmem:[%s302 + $0x41] sm:$0xff]
      %v851 = vld [vmem:[%s302 + $0x51] sm:$0xff]
      %v852 = vld [vmem:[%s302 + $0x61] sm:$0xff]
      %v853 = vld [vmem:[%s302 + $0x71] sm:$0xff]
      %s854 = scalar_lea.vmem %s1, 512
      %v855 = vld [vmem:[%s854] sm:$0xff]
      %v856 = vld [vmem:[%s854 + $0x8] sm:$0xff]
      %v857 = vld [vmem:[%s854 + $0x10] sm:$0xff]
      %v858 = vld [vmem:[%s854 + $0x18] sm:$0xff]
      %v859 = vld [vmem:[%s854 + $0x20] sm:$0xff]
      %v860 = vld [vmem:[%s854 + $0x28] sm:$0xff]
      %v861 = vld [vmem:[%s854 + $0x30] sm:$0xff]
      %v862 = vld [vmem:[%s854 + $0x38] sm:$0xff]
      %v863 = vld [vmem:[%s854 + $0x40] sm:$0xff]
      %v864 = vld [vmem:[%s854 + $0x48] sm:$0xff]
      %v865 = vld [vmem:[%s854 + $0x50] sm:$0xff]
      %v866 = vld [vmem:[%s854 + $0x58] sm:$0xff]
      %v867 = vld [vmem:[%s854 + $0x60] sm:$0xff]
      %v868 = vld [vmem:[%s854 + $0x68] sm:$0xff]
      %v869 = vld [vmem:[%s854 + $0x70] sm:$0xff]
      %v870 = vld [vmem:[%s854 + $0x78] sm:$0xff]
      %871 = vmatprep.subr.mxu0 0.0
      %872 = vmatpush1.msra.mxu0 %v855
      %873 = vmatprep.subr.mxu0 0.0
      %874 = vmatpush1.msra.mxu0 %v856
      %875 = vmatprep.subr.mxu0 0.0
      %876 = vmatpush1.msra.mxu0 %v857
      %877 = vmatprep.subr.mxu0 0.0
      %878 = vmatpush1.msra.mxu0 %v858
      %879 = vmatprep.subr.mxu0 0.0
      %880 = vmatpush1.msra.mxu0 %v859
      %881 = vmatprep.subr.mxu0 0.0
      %882 = vmatpush1.msra.mxu0 %v860
      %883 = vmatprep.subr.mxu0 0.0
      %884 = vmatpush1.msra.mxu0 %v861
      %885 = vmatprep.subr.mxu0 0.0
      %886 = vmatpush1.msra.mxu0 %v862
      %887 = vmatprep.subr.mxu0 0.0
      %888 = vmatpush1.msra.mxu0 %v863
      %889 = vmatprep.subr.mxu0 0.0
      %890 = vmatpush1.msra.mxu0 %v864
      %891 = vmatprep.subr.mxu0 0.0
      %892 = vmatpush1.msra.mxu0 %v865
      %893 = vmatprep.subr.mxu0 0.0
      %894 = vmatpush1.msra.mxu0 %v866
      %895 = vmatprep.subr.mxu0 0.0
      %896 = vmatpush1.msra.mxu0 %v867
      %897 = vmatprep.subr.mxu0 0.0
      %898 = vmatpush1.msra.mxu0 %v868
      %899 = vmatprep.subr.mxu0 0.0
      %900 = vmatpush1.msra.mxu0 %v869
      %901 = vmatprep.subr.mxu0 0.0
      %902 = vmatpush1.msra.mxu0 %v870
      %903 = vmatprep.subr.mxu0 0.0
      %904 = vmatpush1.msra.mxu0 0.0
      %905 = vmatprep.subr.mxu0 0.0
      %906 = vmatpush1.msra.mxu0 0.0
      %907 = vmatprep.subr.mxu0 0.0
      %908 = vmatpush1.msra.mxu0 0.0
      %909 = vmatprep.subr.mxu0 0.0
      %910 = vmatpush1.msra.mxu0 0.0
      %911 = vmatprep.subr.mxu0 0.0
      %912 = vmatpush1.msra.mxu0 0.0
      %913 = vmatprep.subr.mxu0 0.0
      %914 = vmatpush1.msra.mxu0 0.0
      %915 = vmatprep.subr.mxu0 0.0
      %916 = vmatpush1.msra.mxu0 0.0
      %917 = vmatprep.subr.mxu0 0.0
      %918 = vmatpush1.msra.mxu0 0.0
      %919 = vmatprep.subr.mxu0 0.0
      %920 = vmatpush1.msra.mxu0 0.0
      %921 = vmatprep.subr.mxu0 0.0
      %922 = vmatpush1.msra.mxu0 0.0
      %923 = vmatprep.subr.mxu0 0.0
      %924 = vmatpush1.msra.mxu0 0.0
      %925 = vmatprep.subr.mxu0 0.0
      %926 = vmatpush1.msra.mxu0 0.0
      %927 = vmatprep.subr.mxu0 0.0
      %928 = vmatpush1.msra.mxu0 0.0
      %929 = vmatprep.subr.mxu0 0.0
      %930 = vmatpush1.msra.mxu0 0.0
      %931 = vmatprep.subr.mxu0 0.0
      %932 = vmatpush1.msra.mxu0 0.0
      %933 = vmatprep.subr.mxu0 0.0
      %934 = vmatpush1.msra.mxu0 0.0
      %935 = vmatprep.mubr.f32.mxu0 0.0
      %936 = vmatmul.mubr.f32.gmra.mrb[0].mxu0 %v846
      %v937 = vpop.f32.mrb[0].mxu0
      %v938 = vadd.f32 0.0, %v937
      %v939 = vpop.f32.mrb[0].mxu0
      %940 = vmatprep.mubr.f32.mxu0 0.0
      %941 = vmatmul.mubr.f32.gmra.mrb[0].mxu0 %v847
      %v942 = vpop.f32.mrb[0].mxu0
      %v943 = vadd.f32 0.0, %v942
      %v944 = vpop.f32.mrb[0].mxu0
      %945 = vmatprep.mubr.f32.mxu0 0.0
      %946 = vmatmul.mubr.f32.gmra.mrb[0].mxu0 %v848
      %v947 = vpop.f32.mrb[0].mxu0
      %v948 = vadd.f32 0.0, %v947
      %v949 = vpop.f32.mrb[0].mxu0
      %950 = vmatprep.mubr.f32.mxu0 0.0
      %951 = vmatmul.mubr.f32.gmra.mrb[0].mxu0 %v849
      %v952 = vpop.f32.mrb[0].mxu0
      %v953 = vadd.f32 0.0, %v952
      %v954 = vpop.f32.mrb[0].mxu0
      %955 = vmatprep.mubr.f32.mxu0 0.0
      %956 = vmatmul.mubr.f32.gmra.mrb[0].mxu0 %v850
      %v957 = vpop.f32.mrb[0].mxu0
      %v958 = vadd.f32 0.0, %v957
      %v959 = vpop.f32.mrb[0].mxu0
      %960 = vmatprep.mubr.f32.mxu0 0.0
      %961 = vmatmul.mubr.f32.gmra.mrb[0].mxu0 %v851
      %v962 = vpop.f32.mrb[0].mxu0
      %v963 = vadd.f32 0.0, %v962
      %v964 = vpop.f32.mrb[0].mxu0
      %965 = vmatprep.mubr.f32.mxu0 0.0
      %966 = vmatmul.mubr.f32.gmra.mrb[0].mxu0 %v852
      %v967 = vpop.f32.mrb[0].mxu0
      %v968 = vadd.f32 0.0, %v967
      %v969 = vpop.f32.mrb[0].mxu0
      %970 = vmatprep.mubr.f32.mxu0 0.0
      %971 = vmatmul.mubr.f32.gmra.mrb[0].mxu0 %v853
      %v972 = vpop.f32.mrb[0].mxu0
      %v973 = vadd.f32 0.0, %v972
      %v974 = vpop.f32.mrb[0].mxu0
      %975 = vdwg.mxu0
      %v976 = vadd.f32 %v838, %v938
      %v977 = vadd.f32 %v839, %v943
      %v978 = vadd.f32 %v840, %v948
      %v979 = vadd.f32 %v841, %v953
      %v980 = vadd.f32 %v842, %v958
      %v981 = vadd.f32 %v843, %v963
      %v982 = vadd.f32 %v844, %v968
      %v983 = vadd.f32 %v845, %v973
      %v984 = vld [vmem:[%s302 + $0x2] sm:$0xff]
      %v985 = vld [vmem:[%s302 + $0x12] sm:$0xff]
      %v986 = vld [vmem:[%s302 + $0x22] sm:$0xff]
      %v987 = vld [vmem:[%s302 + $0x32] sm:$0xff]
      %v988 = vld [vmem:[%s302 + $0x42] sm:$0xff]
      %v989 = vld [vmem:[%s302 + $0x52] sm:$0xff]
      %v990 = vld [vmem:[%s302 + $0x62] sm:$0xff]
      %v991 = vld [vmem:[%s302 + $0x72] sm:$0xff]
      %s992 = scalar_lea.vmem %s1, 640
      %v993 = vld [vmem:[%s992] sm:$0xff]
      %v994 = vld [vmem:[%s992 + $0x8] sm:$0xff]
      %v995 = vld [vmem:[%s992 + $0x10] sm:$0xff]
      %v996 = vld [vmem:[%s992 + $0x18] sm:$0xff]
      %v997 = vld [vmem:[%s992 + $0x20] sm:$0xff]
      %v998 = vld [vmem:[%s992 + $0x28] sm:$0xff]
      %v999 = vld [vmem:[%s992 + $0x30] sm:$0xff]
      %v1000 = vld [vmem:[%s992 + $0x38] sm:$0xff]
      %v1001 = vld [vmem:[%s992 + $0x40] sm:$0xff]
      %v1002 = vld [vmem:[%s992 + $0x48] sm:$0xff]
      %v1003 = vld [vmem:[%s992 + $0x50] sm:$0xff]
      %v1004 = vld [vmem:[%s992 + $0x58] sm:$0xff]
      %v1005 = vld [vmem:[%s992 + $0x60] sm:$0xff]
      %v1006 = vld [vmem:[%s992 + $0x68] sm:$0xff]
      %v1007 = vld [vmem:[%s992 + $0x70] sm:$0xff]
      %v1008 = vld [vmem:[%s992 + $0x78] sm:$0xff]
      %1009 = vmatprep.subr.mxu0 0.0
      %1010 = vmatpush1.msra.mxu0 %v993
      %1011 = vmatprep.subr.mxu0 0.0
      %1012 = vmatpush1.msra.mxu0 %v994
      %1013 = vmatprep.subr.mxu0 0.0
      %1014 = vmatpush1.msra.mxu0 %v995
      %1015 = vmatprep.subr.mxu0 0.0
      %1016 = vmatpush1.msra.mxu0 %v996
      %1017 = vmatprep.subr.mxu0 0.0
      %1018 = vmatpush1.msra.mxu0 %v997
      %1019 = vmatprep.subr.mxu0 0.0
      %1020 = vmatpush1.msra.mxu0 %v998
      %1021 = vmatprep.subr.mxu0 0.0
      %1022 = vmatpush1.msra.mxu0 %v999
      %1023 = vmatprep.subr.mxu0 0.0
      %1024 = vmatpush1.msra.mxu0 %v1000
      %1025 = vmatprep.subr.mxu0 0.0
      %1026 = vmatpush1.msra.mxu0 %v1001
      %1027 = vmatprep.subr.mxu0 0.0
      %1028 = vmatpush1.msra.mxu0 %v1002
      %1029 = vmatprep.subr.mxu0 0.0
      %1030 = vmatpush1.msra.mxu0 %v1003
      %1031 = vmatprep.subr.mxu0 0.0
      %1032 = vmatpush1.msra.mxu0 %v1004
      %1033 = vmatprep.subr.mxu0 0.0
      %1034 = vmatpush1.msra.mxu0 %v1005
      %1035 = vmatprep.subr.mxu0 0.0
      %1036 = vmatpush1.msra.mxu0 %v1006
      %1037 = vmatprep.subr.mxu0 0.0
      %1038 = vmatpush1.msra.mxu0 %v1007
      %1039 = vmatprep.subr.mxu0 0.0
      %1040 = vmatpush1.msra.mxu0 %v1008
      %1041 = vmatprep.subr.mxu0 0.0
      %1042 = vmatpush1.msra.mxu0 0.0
      %1043 = vmatprep.subr.mxu0 0.0
      %1044 = vmatpush1.msra.mxu0 0.0
      %1045 = vmatprep.subr.mxu0 0.0
      %1046 = vmatpush1.msra.mxu0 0.0
      %1047 = vmatprep.subr.mxu0 0.0
      %1048 = vmatpush1.msra.mxu0 0.0
      %1049 = vmatprep.subr.mxu0 0.0
      %1050 = vmatpush1.msra.mxu0 0.0
      %1051 = vmatprep.subr.mxu0 0.0
      %1052 = vmatpush1.msra.mxu0 0.0
      %1053 = vmatprep.subr.mxu0 0.0
      %1054 = vmatpush1.msra.mxu0 0.0
      %1055 = vmatprep.subr.mxu0 0.0
      %1056 = vmatpush1.msra.mxu0 0.0
      %1057 = vmatprep.subr.mxu0 0.0
      %1058 = vmatpush1.msra.mxu0 0.0
      %1059 = vmatprep.subr.mxu0 0.0
      %1060 = vmatpush1.msra.mxu0 0.0
      %1061 = vmatprep.subr.mxu0 0.0
      %1062 = vmatpush1.msra.mxu0 0.0
      %1063 = vmatprep.subr.mxu0 0.0
      %1064 = vmatpush1.msra.mxu0 0.0
      %1065 = vmatprep.subr.mxu0 0.0
      %1066 = vmatpush1.msra.mxu0 0.0
      %1067 = vmatprep.subr.mxu0 0.0
      %1068 = vmatpush1.msra.mxu0 0.0
      %1069 = vmatprep.subr.mxu0 0.0
      %1070 = vmatpush1.msra.mxu0 0.0
      %1071 = vmatprep.subr.mxu0 0.0
      %1072 = vmatpush1.msra.mxu0 0.0
      %1073 = vmatprep.mubr.f32.mxu0 0.0
      %1074 = vmatmul.mubr.f32.gmra.mrb[0].mxu0 %v984
      %v1075 = vpop.f32.mrb[0].mxu0
      %v1076 = vadd.f32 0.0, %v1075
      %v1077 = vpop.f32.mrb[0].mxu0
      %1078 = vmatprep.mubr.f32.mxu0 0.0
      %1079 = vmatmul.mubr.f32.gmra.mrb[0].mxu0 %v985
      %v1080 = vpop.f32.mrb[0].mxu0
      %v1081 = vadd.f32 0.0, %v1080
      %v1082 = vpop.f32.mrb[0].mxu0
      %1083 = vmatprep.mubr.f32.mxu0 0.0
      %1084 = vmatmul.mubr.f32.gmra.mrb[0].mxu0 %v986
      %v1085 = vpop.f32.mrb[0].mxu0
      %v1086 = vadd.f32 0.0, %v1085
      %v1087 = vpop.f32.mrb[0].mxu0
      %1088 = vmatprep.mubr.f32.mxu0 0.0
      %1089 = vmatmul.mubr.f32.gmra.mrb[0].mxu0 %v987
      %v1090 = vpop.f32.mrb[0].mxu0
      %v1091 = vadd.f32 0.0, %v1090
      %v1092 = vpop.f32.mrb[0].mxu0
      %1093 = vmatprep.mubr.f32.mxu0 0.0
      %1094 = vmatmul.mubr.f32.gmra.mrb[0].mxu0 %v988
      %v1095 = vpop.f32.mrb[0].mxu0
      %v1096 = vadd.f32 0.0, %v1095
      %v1097 = vpop.f32.mrb[0].mxu0
      %1098 = vmatprep.mubr.f32.mxu0 0.0
      %1099 = vmatmul.mubr.f32.gmra.mrb[0].mxu0 %v989
      %v1100 = vpop.f32.mrb[0].mxu0
      %v1101 = vadd.f32 0.0, %v1100
      %v1102 = vpop.f32.mrb[0].mxu0
      %1103 = vmatprep.mubr.f32.mxu0 0.0
      %1104 = vmatmul.mubr.f32.gmra.mrb[0].mxu0 %v990
      %v1105 = vpop.f32.mrb[0].mxu0
      %v1106 = vadd.f32 0.0, %v1105
      %v1107 = vpop.f32.mrb[0].mxu0
      %1108 = vmatprep.mubr.f32.mxu0 0.0
      %1109 = vmatmul.mubr.f32.gmra.mrb[0].mxu0 %v991
      %v1110 = vpop.f32.mrb[0].mxu0
      %v1111 = vadd.f32 0.0, %v1110
      %v1112 = vpop.f32.mrb[0].mxu0
      %1113 = vdwg.mxu0
      %v1114 = vadd.f32 %v976, %v1076
      %v1115 = vadd.f32 %v977, %v1081
      %v1116 = vadd.f32 %v978, %v1086
      %v1117 = vadd.f32 %v979, %v1091
      %v1118 = vadd.f32 %v980, %v1096
      %v1119 = vadd.f32 %v981, %v1101
      %v1120 = vadd.f32 %v982, %v1106
      %v1121 = vadd.f32 %v983, %v1111
      %s1122 = scalar_lea.vmem [#allocation2], 32
      %v1123 = vld [vmem:[%s1122] sm:$0xff]
      %v1124 = vld [vmem:[%s1122 + $0x10] sm:$0xff]
      %v1125 = vld [vmem:[%s1122 + $0x20] sm:$0xff]
      %v1126 = vld [vmem:[%s1122 + $0x30] sm:$0xff]
      %v1127 = vld [vmem:[%s1122 + $0x40] sm:$0xff]
      %v1128 = vld [vmem:[%s1122 + $0x50] sm:$0xff]
      %v1129 = vld [vmem:[%s1122 + $0x60] sm:$0xff]
      %v1130 = vld [vmem:[%s1122 + $0x70] sm:$0xff]
      %s1131 = scalar_lea.vmem %s1, 768
      %v1132 = vld [vmem:[%s1131] sm:$0xff]
      %v1133 = vld [vmem:[%s1131 + $0x8] sm:$0xff]
      %v1134 = vld [vmem:[%s1131 + $0x10] sm:$0xff]
      %v1135 = vld [vmem:[%s1131 + $0x18] sm:$0xff]
      %v1136 = vld [vmem:[%s1131 + $0x20] sm:$0xff]
      %v1137 = vld [vmem:[%s1131 + $0x28] sm:$0xff]
      %v1138 = vld [vmem:[%s1131 + $0x30] sm:$0xff]
      %v1139 = vld [vmem:[%s1131 + $0x38] sm:$0xff]
      %v1140 = vld [vmem:[%s1131 + $0x40] sm:$0xff]
      %v1141 = vld [vmem:[%s1131 + $0x48] sm:$0xff]
      %v1142 = vld [vmem:[%s1131 + $0x50] sm:$0xff]
      %v1143 = vld [vmem:[%s1131 + $0x58] sm:$0xff]
      %v1144 = vld [vmem:[%s1131 + $0x60] sm:$0xff]
      %v1145 = vld [vmem:[%s1131 + $0x68] sm:$0xff]
      %v1146 = vld [vmem:[%s1131 + $0x70] sm:$0xff]
      %v1147 = vld [vmem:[%s1131 + $0x78] sm:$0xff]
      %1148 = vmatprep.subr.mxu0 0.0
      %1149 = vmatpush1.msra.mxu0 %v1132
      %1150 = vmatprep.subr.mxu0 0.0
      %1151 = vmatpush1.msra.mxu0 %v1133
      %1152 = vmatprep.subr.mxu0 0.0
      %1153 = vmatpush1.msra.mxu0 %v1134
      %1154 = vmatprep.subr.mxu0 0.0
      %1155 = vmatpush1.msra.mxu0 %v1135
      %1156 = vmatprep.subr.mxu0 0.0
      %1157 = vmatpush1.msra.mxu0 %v1136
      %1158 = vmatprep.subr.mxu0 0.0
      %1159 = vmatpush1.msra.mxu0 %v1137
      %1160 = vmatprep.subr.mxu0 0.0
      %1161 = vmatpush1.msra.mxu0 %v1138
      %1162 = vmatprep.subr.mxu0 0.0
      %1163 = vmatpush1.msra.mxu0 %v1139
      %1164 = vmatprep.subr.mxu0 0.0
      %1165 = vmatpush1.msra.mxu0 %v1140
      %1166 = vmatprep.subr.mxu0 0.0
      %1167 = vmatpush1.msra.mxu0 %v1141
      %1168 = vmatprep.subr.mxu0 0.0
      %1169 = vmatpush1.msra.mxu0 %v1142
      %1170 = vmatprep.subr.mxu0 0.0
      %1171 = vmatpush1.msra.mxu0 %v1143
      %1172 = vmatprep.subr.mxu0 0.0
      %1173 = vmatpush1.msra.mxu0 %v1144
      %1174 = vmatprep.subr.mxu0 0.0
      %1175 = vmatpush1.msra.mxu0 %v1145
      %1176 = vmatprep.subr.mxu0 0.0
      %1177 = vmatpush1.msra.mxu0 %v1146
      %1178 = vmatprep.subr.mxu0 0.0
      %1179 = vmatpush1.msra.mxu0 %v1147
      %1180 = vmatprep.subr.mxu0 0.0
      %1181 = vmatpush1.msra.mxu0 0.0
      %1182 = vmatprep.subr.mxu0 0.0
      %1183 = vmatpush1.msra.mxu0 0.0
      %1184 = vmatprep.subr.mxu0 0.0
      %1185 = vmatpush1.msra.mxu0 0.0
      %1186 = vmatprep.subr.mxu0 0.0
      %1187 = vmatpush1.msra.mxu0 0.0
      %1188 = vmatprep.subr.mxu0 0.0
      %1189 = vmatpush1.msra.mxu0 0.0
      %1190 = vmatprep.subr.mxu0 0.0
      %1191 = vmatpush1.msra.mxu0 0.0
      %1192 = vmatprep.subr.mxu0 0.0
      %1193 = vmatpush1.msra.mxu0 0.0
      %1194 = vmatprep.subr.mxu0 0.0
      %1195 = vmatpush1.msra.mxu0 0.0
      %1196 = vmatprep.subr.mxu0 0.0
      %1197 = vmatpush1.msra.mxu0 0.0
      %1198 = vmatprep.subr.mxu0 0.0
      %1199 = vmatpush1.msra.mxu0 0.0
      %1200 = vmatprep.subr.mxu0 0.0
      %1201 = vmatpush1.msra.mxu0 0.0
      %1202 = vmatprep.subr.mxu0 0.0
      %1203 = vmatpush1.msra.mxu0 0.0
      %1204 = vmatprep.subr.mxu0 0.0
      %1205 = vmatpush1.msra.mxu0 0.0
      %1206 = vmatprep.subr.mxu0 0.0
      %1207 = vmatpush1.msra.mxu0 0.0
      %1208 = vmatprep.subr.mxu0 0.0
      %1209 = vmatpush1.msra.mxu0 0.0
      %1210 = vmatprep.subr.mxu0 0.0
      %1211 = vmatpush1.msra.mxu0 0.0
      %1212 = vmatprep.mubr.f32.mxu0 0.0
      %1213 = vmatmul.mubr.f32.gmra.mrb[0].mxu0 %v1123
      %v1214 = vpop.f32.mrb[0].mxu0
      %v1215 = vadd.f32 0.0, %v1214
      %v1216 = vpop.f32.mrb[0].mxu0
      %1217 = vmatprep.mubr.f32.mxu0 0.0
      %1218 = vmatmul.mubr.f32.gmra.mrb[0].mxu0 %v1124
      %v1219 = vpop.f32.mrb[0].mxu0
      %v1220 = vadd.f32 0.0, %v1219
      %v1221 = vpop.f32.mrb[0].mxu0
      %1222 = vmatprep.mubr.f32.mxu0 0.0
      %1223 = vmatmul.mubr.f32.gmra.mrb[0].mxu0 %v1125
      %v1224 = vpop.f32.mrb[0].mxu0
      %v1225 = vadd.f32 0.0, %v1224
      %v1226 = vpop.f32.mrb[0].mxu0
      %1227 = vmatprep.mubr.f32.mxu0 0.0
      %1228 = vmatmul.mubr.f32.gmra.mrb[0].mxu0 %v1126
      %v1229 = vpop.f32.mrb[0].mxu0
      %v1230 = vadd.f32 0.0, %v1229
      %v1231 = vpop.f32.mrb[0].mxu0
      %1232 = vmatprep.mubr.f32.mxu0 0.0
      %1233 = vmatmul.mubr.f32.gmra.mrb[0].mxu0 %v1127
      %v1234 = vpop.f32.mrb[0].mxu0
      %v1235 = vadd.f32 0.0, %v1234
      %v1236 = vpop.f32.mrb[0].mxu0
      %1237 = vmatprep.mubr.f32.mxu0 0.0
      %1238 = vmatmul.mubr.f32.gmra.mrb[0].mxu0 %v1128
      %v1239 = vpop.f32.mrb[0].mxu0
      %v1240 = vadd.f32 0.0, %v1239
      %v1241 = vpop.f32.mrb[0].mxu0
      %1242 = vmatprep.mubr.f32.mxu0 0.0
      %1243 = vmatmul.mubr.f32.gmra.mrb[0].mxu0 %v1129
      %v1244 = vpop.f32.mrb[0].mxu0
      %v1245 = vadd.f32 0.0, %v1244
      %v1246 = vpop.f32.mrb[0].mxu0
      %1247 = vmatprep.mubr.f32.mxu0 0.0
      %1248 = vmatmul.mubr.f32.gmra.mrb[0].mxu0 %v1130
      %v1249 = vpop.f32.mrb[0].mxu0
      %v1250 = vadd.f32 0.0, %v1249
      %v1251 = vpop.f32.mrb[0].mxu0
      %1252 = vdwg.mxu0
      %v1253 = vadd.f32 %v1114, %v1215
      %v1254 = vadd.f32 %v1115, %v1220
      %v1255 = vadd.f32 %v1116, %v1225
      %v1256 = vadd.f32 %v1117, %v1230
      %v1257 = vadd.f32 %v1118, %v1235
      %v1258 = vadd.f32 %v1119, %v1240
      %v1259 = vadd.f32 %v1120, %v1245
      %v1260 = vadd.f32 %v1121, %v1250
      %v1261 = vld [vmem:[%s1122 + $0x1] sm:$0xff]
      %v1262 = vld [vmem:[%s1122 + $0x11] sm:$0xff]
      %v1263 = vld [vmem:[%s1122 + $0x21] sm:$0xff]
      %v1264 = vld [vmem:[%s1122 + $0x31] sm:$0xff]
      %v1265 = vld [vmem:[%s1122 + $0x41] sm:$0xff]
      %v1266 = vld [vmem:[%s1122 + $0x51] sm:$0xff]
      %v1267 = vld [vmem:[%s1122 + $0x61] sm:$0xff]
      %v1268 = vld [vmem:[%s1122 + $0x71] sm:$0xff]
      %s1269 = scalar_lea.vmem %s1, 896
      %v1270 = vld [vmem:[%s1269] sm:$0xff]
      %v1271 = vld [vmem:[%s1269 + $0x8] sm:$0xff]
      %v1272 = vld [vmem:[%s1269 + $0x10] sm:$0xff]
      %v1273 = vld [vmem:[%s1269 + $0x18] sm:$0xff]
      %v1274 = vld [vmem:[%s1269 + $0x20] sm:$0xff]
      %v1275 = vld [vmem:[%s1269 + $0x28] sm:$0xff]
      %v1276 = vld [vmem:[%s1269 + $0x30] sm:$0xff]
      %v1277 = vld [vmem:[%s1269 + $0x38] sm:$0xff]
      %v1278 = vld [vmem:[%s1269 + $0x40] sm:$0xff]
      %v1279 = vld [vmem:[%s1269 + $0x48] sm:$0xff]
      %v1280 = vld [vmem:[%s1269 + $0x50] sm:$0xff]
      %v1281 = vld [vmem:[%s1269 + $0x58] sm:$0xff]
      %v1282 = vld [vmem:[%s1269 + $0x60] sm:$0xff]
      %v1283 = vld [vmem:[%s1269 + $0x68] sm:$0xff]
      %v1284 = vld [vmem:[%s1269 + $0x70] sm:$0xff]
      %v1285 = vld [vmem:[%s1269 + $0x78] sm:$0xff]
      %1286 = vmatprep.subr.mxu0 0.0
      %1287 = vmatpush1.msra.mxu0 %v1270
      %1288 = vmatprep.subr.mxu0 0.0
      %1289 = vmatpush1.msra.mxu0 %v1271
      %1290 = vmatprep.subr.mxu0 0.0
      %1291 = vmatpush1.msra.mxu0 %v1272
      %1292 = vmatprep.subr.mxu0 0.0
      %1293 = vmatpush1.msra.mxu0 %v1273
      %1294 = vmatprep.subr.mxu0 0.0
      %1295 = vmatpush1.msra.mxu0 %v1274
      %1296 = vmatprep.subr.mxu0 0.0
      %1297 = vmatpush1.msra.mxu0 %v1275
      %1298 = vmatprep.subr.mxu0 0.0
      %1299 = vmatpush1.msra.mxu0 %v1276
      %1300 = vmatprep.subr.mxu0 0.0
      %1301 = vmatpush1.msra.mxu0 %v1277
      %1302 = vmatprep.subr.mxu0 0.0
      %1303 = vmatpush1.msra.mxu0 %v1278
      %1304 = vmatprep.subr.mxu0 0.0
      %1305 = vmatpush1.msra.mxu0 %v1279
      %1306 = vmatprep.subr.mxu0 0.0
      %1307 = vmatpush1.msra.mxu0 %v1280
      %1308 = vmatprep.subr.mxu0 0.0
      %1309 = vmatpush1.msra.mxu0 %v1281
      %1310 = vmatprep.subr.mxu0 0.0
      %1311 = vmatpush1.msra.mxu0 %v1282
      %1312 = vmatprep.subr.mxu0 0.0
      %1313 = vmatpush1.msra.mxu0 %v1283
      %1314 = vmatprep.subr.mxu0 0.0
      %1315 = vmatpush1.msra.mxu0 %v1284
      %1316 = vmatprep.subr.mxu0 0.0
      %1317 = vmatpush1.msra.mxu0 %v1285
      %1318 = vmatprep.subr.mxu0 0.0
      %1319 = vmatpush1.msra.mxu0 0.0
      %1320 = vmatprep.subr.mxu0 0.0
      %1321 = vmatpush1.msra.mxu0 0.0
      %1322 = vmatprep.subr.mxu0 0.0
      %1323 = vmatpush1.msra.mxu0 0.0
      %1324 = vmatprep.subr.mxu0 0.0
      %1325 = vmatpush1.msra.mxu0 0.0
      %1326 = vmatprep.subr.mxu0 0.0
      %1327 = vmatpush1.msra.mxu0 0.0
      %1328 = vmatprep.subr.mxu0 0.0
      %1329 = vmatpush1.msra.mxu0 0.0
      %1330 = vmatprep.subr.mxu0 0.0
      %1331 = vmatpush1.msra.mxu0 0.0
      %1332 = vmatprep.subr.mxu0 0.0
      %1333 = vmatpush1.msra.mxu0 0.0
      %1334 = vmatprep.subr.mxu0 0.0
      %1335 = vmatpush1.msra.mxu0 0.0
      %1336 = vmatprep.subr.mxu0 0.0
      %1337 = vmatpush1.msra.mxu0 0.0
      %1338 = vmatprep.subr.mxu0 0.0
      %1339 = vmatpush1.msra.mxu0 0.0
      %1340 = vmatprep.subr.mxu0 0.0
      %1341 = vmatpush1.msra.mxu0 0.0
      %1342 = vmatprep.subr.mxu0 0.0
      %1343 = vmatpush1.msra.mxu0 0.0
      %1344 = vmatprep.subr.mxu0 0.0
      %1345 = vmatpush1.msra.mxu0 0.0
      %1346 = vmatprep.subr.mxu0 0.0
      %1347 = vmatpush1.msra.mxu0 0.0
      %1348 = vmatprep.subr.mxu0 0.0
      %1349 = vmatpush1.msra.mxu0 0.0
      %1350 = vmatprep.mubr.f32.mxu0 0.0
      %1351 = vmatmul.mubr.f32.gmra.mrb[0].mxu0 %v1261
      %v1352 = vpop.f32.mrb[0].mxu0
      %v1353 = vadd.f32 0.0, %v1352
      %v1354 = vpop.f32.mrb[0].mxu0
      %1355 = vmatprep.mubr.f32.mxu0 0.0
      %1356 = vmatmul.mubr.f32.gmra.mrb[0].mxu0 %v1262
      %v1357 = vpop.f32.mrb[0].mxu0
      %v1358 = vadd.f32 0.0, %v1357
      %v1359 = vpop.f32.mrb[0].mxu0
      %1360 = vmatprep.mubr.f32.mxu0 0.0
      %1361 = vmatmul.mubr.f32.gmra.mrb[0].mxu0 %v1263
      %v1362 = vpop.f32.mrb[0].mxu0
      %v1363 = vadd.f32 0.0, %v1362
      %v1364 = vpop.f32.mrb[0].mxu0
      %1365 = vmatprep.mubr.f32.mxu0 0.0
      %1366 = vmatmul.mubr.f32.gmra.mrb[0].mxu0 %v1264
      %v1367 = vpop.f32.mrb[0].mxu0
      %v1368 = vadd.f32 0.0, %v1367
      %v1369 = vpop.f32.mrb[0].mxu0
      %1370 = vmatprep.mubr.f32.mxu0 0.0
      %1371 = vmatmul.mubr.f32.gmra.mrb[0].mxu0 %v1265
      %v1372 = vpop.f32.mrb[0].mxu0
      %v1373 = vadd.f32 0.0, %v1372
      %v1374 = vpop.f32.mrb[0].mxu0
      %1375 = vmatprep.mubr.f32.mxu0 0.0
      %1376 = vmatmul.mubr.f32.gmra.mrb[0].mxu0 %v1266
      %v1377 = vpop.f32.mrb[0].mxu0
      %v1378 = vadd.f32 0.0, %v1377
      %v1379 = vpop.f32.mrb[0].mxu0
      %1380 = vmatprep.mubr.f32.mxu0 0.0
      %1381 = vmatmul.mubr.f32.gmra.mrb[0].mxu0 %v1267
      %v1382 = vpop.f32.mrb[0].mxu0
      %v1383 = vadd.f32 0.0, %v1382
      %v1384 = vpop.f32.mrb[0].mxu0
      %1385 = vmatprep.mubr.f32.mxu0 0.0
      %1386 = vmatmul.mubr.f32.gmra.mrb[0].mxu0 %v1268
      %v1387 = vpop.f32.mrb[0].mxu0
      %v1388 = vadd.f32 0.0, %v1387
      %v1389 = vpop.f32.mrb[0].mxu0
      %1390 = vdwg.mxu0
      %v1391 = vadd.f32 %v1253, %v1353
      %v1392 = vadd.f32 %v1254, %v1358
      %v1393 = vadd.f32 %v1255, %v1363
      %v1394 = vadd.f32 %v1256, %v1368
      %v1395 = vadd.f32 %v1257, %v1373
      %v1396 = vadd.f32 %v1258, %v1378
      %v1397 = vadd.f32 %v1259, %v1383
      %v1398 = vadd.f32 %v1260, %v1388
      %v1399 = vld [vmem:[%s1122 + $0x2] sm:$0xff]
      %v1400 = vld [vmem:[%s1122 + $0x12] sm:$0xff]
      %v1401 = vld [vmem:[%s1122 + $0x22] sm:$0xff]
      %v1402 = vld [vmem:[%s1122 + $0x32] sm:$0xff]
      %v1403 = vld [vmem:[%s1122 + $0x42] sm:$0xff]
      %v1404 = vld [vmem:[%s1122 + $0x52] sm:$0xff]
      %v1405 = vld [vmem:[%s1122 + $0x62] sm:$0xff]
      %v1406 = vld [vmem:[%s1122 + $0x72] sm:$0xff]
      %s1407 = scalar_lea.vmem %s1, 1024
      %v1408 = vld [vmem:[%s1407] sm:$0xff]
      %v1409 = vld [vmem:[%s1407 + $0x8] sm:$0xff]
      %v1410 = vld [vmem:[%s1407 + $0x10] sm:$0xff]
      %v1411 = vld [vmem:[%s1407 + $0x18] sm:$0xff]
      %v1412 = vld [vmem:[%s1407 + $0x20] sm:$0xff]
      %v1413 = vld [vmem:[%s1407 + $0x28] sm:$0xff]
      %v1414 = vld [vmem:[%s1407 + $0x30] sm:$0xff]
      %v1415 = vld [vmem:[%s1407 + $0x38] sm:$0xff]
      %v1416 = vld [vmem:[%s1407 + $0x40] sm:$0xff]
      %v1417 = vld [vmem:[%s1407 + $0x48] sm:$0xff]
      %v1418 = vld [vmem:[%s1407 + $0x50] sm:$0xff]
      %v1419 = vld [vmem:[%s1407 + $0x58] sm:$0xff]
      %v1420 = vld [vmem:[%s1407 + $0x60] sm:$0xff]
      %v1421 = vld [vmem:[%s1407 + $0x68] sm:$0xff]
      %v1422 = vld [vmem:[%s1407 + $0x70] sm:$0xff]
      %v1423 = vld [vmem:[%s1407 + $0x78] sm:$0xff]
      %1424 = vmatprep.subr.mxu0 0.0
      %1425 = vmatpush1.msra.mxu0 %v1408
      %1426 = vmatprep.subr.mxu0 0.0
      %1427 = vmatpush1.msra.mxu0 %v1409
      %1428 = vmatprep.subr.mxu0 0.0
      %1429 = vmatpush1.msra.mxu0 %v1410
      %1430 = vmatprep.subr.mxu0 0.0
      %1431 = vmatpush1.msra.mxu0 %v1411
      %1432 = vmatprep.subr.mxu0 0.0
      %1433 = vmatpush1.msra.mxu0 %v1412
      %1434 = vmatprep.subr.mxu0 0.0
      %1435 = vmatpush1.msra.mxu0 %v1413
      %1436 = vmatprep.subr.mxu0 0.0
      %1437 = vmatpush1.msra.mxu0 %v1414
      %1438 = vmatprep.subr.mxu0 0.0
      %1439 = vmatpush1.msra.mxu0 %v1415
      %1440 = vmatprep.subr.mxu0 0.0
      %1441 = vmatpush1.msra.mxu0 %v1416
      %1442 = vmatprep.subr.mxu0 0.0
      %1443 = vmatpush1.msra.mxu0 %v1417
      %1444 = vmatprep.subr.mxu0 0.0
      %1445 = vmatpush1.msra.mxu0 %v1418
      %1446 = vmatprep.subr.mxu0 0.0
      %1447 = vmatpush1.msra.mxu0 %v1419
      %1448 = vmatprep.subr.mxu0 0.0
      %1449 = vmatpush1.msra.mxu0 %v1420
      %1450 = vmatprep.subr.mxu0 0.0
      %1451 = vmatpush1.msra.mxu0 %v1421
      %1452 = vmatprep.subr.mxu0 0.0
      %1453 = vmatpush1.msra.mxu0 %v1422
      %1454 = vmatprep.subr.mxu0 0.0
      %1455 = vmatpush1.msra.mxu0 %v1423
      %1456 = vmatprep.subr.mxu0 0.0
      %1457 = vmatpush1.msra.mxu0 0.0
      %1458 = vmatprep.subr.mxu0 0.0
      %1459 = vmatpush1.msra.mxu0 0.0
      %1460 = vmatprep.subr.mxu0 0.0
      %1461 = vmatpush1.msra.mxu0 0.0
      %1462 = vmatprep.subr.mxu0 0.0
      %1463 = vmatpush1.msra.mxu0 0.0
      %1464 = vmatprep.subr.mxu0 0.0
      %1465 = vmatpush1.msra.mxu0 0.0
      %1466 = vmatprep.subr.mxu0 0.0
      %1467 = vmatpush1.msra.mxu0 0.0
      %1468 = vmatprep.subr.mxu0 0.0
      %1469 = vmatpush1.msra.mxu0 0.0
      %1470 = vmatprep.subr.mxu0 0.0
      %1471 = vmatpush1.msra.mxu0 0.0
      %1472 = vmatprep.subr.mxu0 0.0
      %1473 = vmatpush1.msra.mxu0 0.0
      %1474 = vmatprep.subr.mxu0 0.0
      %1475 = vmatpush1.msra.mxu0 0.0
      %1476 = vmatprep.subr.mxu0 0.0
      %1477 = vmatpush1.msra.mxu0 0.0
      %1478 = vmatprep.subr.mxu0 0.0
      %1479 = vmatpush1.msra.mxu0 0.0
      %1480 = vmatprep.subr.mxu0 0.0
      %1481 = vmatpush1.msra.mxu0 0.0
      %1482 = vmatprep.subr.mxu0 0.0
      %1483 = vmatpush1.msra.mxu0 0.0
      %1484 = vmatprep.subr.mxu0 0.0
      %1485 = vmatpush1.msra.mxu0 0.0
      %1486 = vmatprep.subr.mxu0 0.0
      %1487 = vmatpush1.msra.mxu0 0.0
      %1488 = vmatprep.mubr.f32.mxu0 0.0
      %1489 = vmatmul.mubr.f32.gmra.mrb[0].mxu0 %v1399
      %v1490 = vpop.f32.mrb[0].mxu0
      %v1491 = vadd.f32 0.0, %v1490
      %v1492 = vpop.f32.mrb[0].mxu0
      %1493 = vmatprep.mubr.f32.mxu0 0.0
      %1494 = vmatmul.mubr.f32.gmra.mrb[0].mxu0 %v1400
      %v1495 = vpop.f32.mrb[0].mxu0
      %v1496 = vadd.f32 0.0, %v1495
      %v1497 = vpop.f32.mrb[0].mxu0
      %1498 = vmatprep.mubr.f32.mxu0 0.0
      %1499 = vmatmul.mubr.f32.gmra.mrb[0].mxu0 %v1401
      %v1500 = vpop.f32.mrb[0].mxu0
      %v1501 = vadd.f32 0.0, %v1500
      %v1502 = vpop.f32.mrb[0].mxu0
      %1503 = vmatprep.mubr.f32.mxu0 0.0
      %1504 = vmatmul.mubr.f32.gmra.mrb[0].mxu0 %v1402
      %v1505 = vpop.f32.mrb[0].mxu0
      %v1506 = vadd.f32 0.0, %v1505
      %v1507 = vpop.f32.mrb[0].mxu0
      %1508 = vmatprep.mubr.f32.mxu0 0.0
      %1509 = vmatmul.mubr.f32.gmra.mrb[0].mxu0 %v1403
      %v1510 = vpop.f32.mrb[0].mxu0
      %v1511 = vadd.f32 0.0, %v1510
      %v1512 = vpop.f32.mrb[0].mxu0
      %1513 = vmatprep.mubr.f32.mxu0 0.0
      %1514 = vmatmul.mubr.f32.gmra.mrb[0].mxu0 %v1404
      %v1515 = vpop.f32.mrb[0].mxu0
      %v1516 = vadd.f32 0.0, %v1515
      %v1517 = vpop.f32.mrb[0].mxu0
      %1518 = vmatprep.mubr.f32.mxu0 0.0
      %1519 = vmatmul.mubr.f32.gmra.mrb[0].mxu0 %v1405
      %v1520 = vpop.f32.mrb[0].mxu0
      %v1521 = vadd.f32 0.0, %v1520
      %v1522 = vpop.f32.mrb[0].mxu0
      %1523 = vmatprep.mubr.f32.mxu0 0.0
      %1524 = vmatmul.mubr.f32.gmra.mrb[0].mxu0 %v1406
      %v1525 = vpop.f32.mrb[0].mxu0
      %v1526 = vadd.f32 0.0, %v1525
      %v1527 = vpop.f32.mrb[0].mxu0
      %1528 = vdwg.mxu0
      %v1529 = vadd.f32 %v1391, %v1491
      %v1530 = vadd.f32 %v1392, %v1496
      %v1531 = vadd.f32 %v1393, %v1501
      %v1532 = vadd.f32 %v1394, %v1506
      %v1533 = vadd.f32 %v1395, %v1511
      %v1534 = vadd.f32 %v1396, %v1516
      %v1535 = vadd.f32 %v1397, %v1521
      %v1536 = vadd.f32 %v1398, %v1526
      %1537 = vst [vmem:[%s231] sm:$0xff] %v1529
      %1538 = vst [vmem:[%s231 + $0x8] sm:$0xff] %v1530
      %1539 = vst [vmem:[%s231 + $0x10] sm:$0xff] %v1531
      %1540 = vst [vmem:[%s231 + $0x18] sm:$0xff] %v1532
      %1541 = vst [vmem:[%s231 + $0x20] sm:$0xff] %v1533
      %1542 = vst [vmem:[%s231 + $0x28] sm:$0xff] %v1534
      %1543 = vst [vmem:[%s231 + $0x30] sm:$0xff] %v1535
      %1544 = vst [vmem:[%s231 + $0x38] sm:$0xff] %v1536
      %v1545 = vadd.f32 %v1529, %v1530
      %v1546 = vadd.f32 %v1545, %v1531
      %v1547 = vadd.f32 %v1546, %v1532
      %v1548 = vadd.f32 %v1547, %v1533
      %v1549 = vadd.f32 %v1548, %v1534
      %v1550 = vadd.f32 %v1549, %v1535
      %v1551 = vadd.f32 %v1550, %v1536
      %v1552 = vrot.slane %v1551, 4
      %v1553 = vadd.f32 %v1551, %v1552
      %v1554 = vrot.slane %v1553, 2
      %v1555 = vadd.f32 %v1553, %v1554
      %v1556 = vrot.slane %v1555, 1
      %v1557 = vadd.f32 %v1555, %v1556
      %v1558 = vmul.f32 %v1529, %v1529
      %v1559 = vmul.f32 %v1530, %v1530
      %v1560 = vmul.f32 %v1531, %v1531
      %v1561 = vmul.f32 %v1532, %v1532
      %v1562 = vmul.f32 %v1533, %v1533
      %v1563 = vmul.f32 %v1534, %v1534
      %v1564 = vmul.f32 %v1535, %v1535
      %v1565 = vmul.f32 %v1536, %v1536
      %v1566 = vadd.f32 %v1558, %v1559
      %v1567 = vadd.f32 %v1566, %v1560
      %v1568 = vadd.f32 %v1567, %v1561
      %v1569 = vadd.f32 %v1568, %v1562
      %v1570 = vadd.f32 %v1569, %v1563
      %v1571 = vadd.f32 %v1570, %v1564
      %v1572 = vadd.f32 %v1571, %v1565
      %v1573 = vrot.slane %v1572, 4
      %v1574 = vadd.f32 %v1572, %v1573
      %v1575 = vrot.slane %v1574, 2
      %v1576 = vadd.f32 %v1574, %v1575
      %v1577 = vrot.slane %v1576, 1
      %v1578 = vadd.f32 %v1576, %v1577
      %vm1579 = vcmask 1040384
      %v1580 = vsel %vm1579, %v1557, %v1578
      %1581 = vst [vmem:[%s235] sm:$0x3] %v1580
      %p1582 = scmp.lt.s32.totalorder %s17, 1
      %s1583 = scalar_select %p1582, %s17, 1
      %s1584 = smul.addr %s1583, 8
      %s1585 = smul.addr %s1584, 8
      %s1586 = scalar_lea.vmem %s4, %s1585
      %p1587 = scmp.lt.s32.totalorder %s17, 1
      %s1588 = scalar_select %p1587, %s17, 1
      %s1589 = smul.addr %s1588, 2
      %s1590 = scalar_lea.vmem %s5, %s1589
      // Predicated region
      $region37: #{basic_block_forward.4} parent=35 // pred_check
        %p1591 = pneg %p124
      $region38: #{basic_block_forward.4} parent=35 // pred_check_branch
        %1593 = sbr.rel (%p1591) target = $region40
      $region39: #{basic_block_forward.4} parent=35 // pred_region
        _
      $region40: #{basic_block_forward.4} parent=35 // pred_fallthru
        _
      // Predicated region
      $region41: #{basic_block_forward.4} parent=35 // pred_check
        %p1594 = pneg %p150
      $region42: #{basic_block_forward.4} parent=35 // pred_check_branch
        %1596 = sbr.rel (%p1594) target = $region44
      $region43: #{basic_block_forward.4} parent=35 // pred_region
        _
      $region44: #{basic_block_forward.4} parent=35 // pred_fallthru
        _
    $region36: #{basic_block_forward.4} parent=5 // pred_fallthru
      _
    %p1597 = scmp.le.s32.totalorder 2, %s12
    // Predicated region
    $region45: #{basic_block_forward.4} parent=5 // pred_check
      %p1598 = pneg %p1597
    $region46: #{basic_block_forward.4} parent=5 // pred_check_branch
      %1600 = sbr.rel (%p1598) target = $region48
    $region47: #{basic_block_forward.4} parent=5 // pred_region
      %s1601 = ssub.s32 %s12, 2
      // Predicated region
      $region49: #{basic_block_forward.4} parent=47 // pred_check
        %p1602 = pneg %p130
      $region50: #{basic_block_forward.4} parent=47 // pred_check_branch
        %1604 = sbr.rel (%p1602) target = $region52
      $region51: #{basic_block_forward.4} parent=47 // pred_region
        %p1605 = scmp.lt.s32.totalorder %s18, 1
        %s1606 = scalar_select %p1605, %s18, 1
        %s1607 = smul.addr %s1606, 8
        %s1608 = smul.addr %s1607, 8
        %s1609 = scalar_lea.vmem %s4, %s1608
      $region52: #{basic_block_forward.4} parent=47 // pred_fallthru
        _
      // Predicated region
      $region53: #{basic_block_forward.4} parent=47 // pred_check
        %p1610 = pneg %p156
      $region54: #{basic_block_forward.4} parent=47 // pred_check_branch
        %1612 = sbr.rel (%p1610) target = $region56
      $region55: #{basic_block_forward.4} parent=47 // pred_region
        %p1613 = scmp.lt.s32.totalorder %s18, 1
        %s1614 = scalar_select %p1613, %s18, 1
        %s1615 = smul.addr %s1614, 2
        %s1616 = scalar_lea.vmem %s5, %s1615
      $region56: #{basic_block_forward.4} parent=47 // pred_fallthru
        _
    $region48: #{basic_block_forward.4} parent=5 // pred_fallthru
      _
  $region6: #{basic_block_forward.4} parent=0 // loop_footer
    %s16 = sadd.s32 1, %s12
  $region7: #{basic_block_forward.4} parent=0 // loop_footer_branch
    %11 = sbr.rel target = $region3
  $region8: #{basic_block_forward.4} parent=0 // loop_exit
    _

</llo_original>
